<compile_context>
chip_gen: v5e
topology: v5e:2x2
jax: 0.10.0
libtpu: 0.0.40
codegen_flags: <defaults>
</compile_context>

<pallas_src>
import functools

import jax
import jax.numpy as jnp
from jax import lax
from jax.experimental import pallas as pl
from jax.experimental.pallas import tpu as pltpu


# ----------------------------------------------------------------------------
# BatchNorm folding helpers (inference-mode running stats)
# ----------------------------------------------------------------------------
def _fold_bn(gamma, beta, mean, var, eps=1e-5):
    scale = gamma / jnp.sqrt(var + eps)
    bias = beta - mean * scale
    return scale, bias


def _folded_conv_oihw(w_oihw, gamma, beta, mean, var, eps=1e-5):
    """Fold BN scale into the conv weight (per output channel); return (w, bias)."""
    scale, bias = _fold_bn(gamma, beta, mean, var, eps)
    return w_oihw * scale[:, None, None, None], bias


def prepare_params(params, eps=1e-5):
    """One-time constant transforms (do NOT re-run per forward):
    BN folding, OIHW -> (9*Cin, Cout) im2col weight layout, bf16 cast, FC transposes."""
    w1o, b1 = _folded_conv_oihw(params["conv1_w"], params["bn1_gamma"], params["bn1_beta"],
                                params["bn1_mean"], params["bn1_var"], eps)
    w2o, b2 = _folded_conv_oihw(params["conv2_w"], params["bn2_gamma"], params["bn2_beta"],
                                params["bn2_mean"], params["bn2_var"], eps)

    def to_kernel_layout(w_oihw):
        w_hwio = jnp.transpose(w_oihw, (2, 3, 1, 0))              # (3, 3, Cin, Cout)
        kh, kw, cin, cout = w_hwio.shape
        return w_hwio.reshape(kh * kw * cin, cout).astype(jnp.bfloat16)

    return {
        "w1": to_kernel_layout(w1o), "b1": b1[None, :].astype(jnp.float32),
        "w2": to_kernel_layout(w2o), "b2": b2[None, :].astype(jnp.float32),
        "fc1": jnp.transpose(params["fc1_w"]).astype(jnp.float32),   # (C, C//r)
        "fc2": jnp.transpose(params["fc2_w"]).astype(jnp.float32),   # (C//r, C)
    }


# ----------------------------------------------------------------------------
# Fused kernel: conv1+bn1+lrelu -> conv2+bn2 -> SE -> +identity -> lrelu
# ----------------------------------------------------------------------------
def _residual_block_kernel(x_ref, w1_ref, b1_ref, w2_ref, b2_ref,
                           fc1_ref, fc2_ref, o_ref, xp_ref,
                           *, H, W, C, slope):
    # x_ref:   (1, H, W, C)      input image (NHWC tile, identity branch)
    # w1_ref:  (9*C, C) bf16     conv1 weights, BN1 scale folded, im2col layout
    # b1_ref:  (1, C)   f32      folded BN1 bias
    # w2_ref:  (9*C, C) bf16     conv2 weights, BN2 scale folded
    # b2_ref:  (1, C)   f32      folded BN2 bias
    # fc1_ref: (C, C//r) f32     SE first FC (in x out)
    # fc2_ref: (C//r, C) f32     SE second FC (in x out)
    # o_ref:   (1, H, W, C)
    # xp_ref:  (H+2, W+2, C) f32 VMEM scratch: zero-padded activations (reused by both convs)

    def conv3x3(w_ref, b_ref):
        # xp_ref holds the zero-padded (H+2, W+2, C) activations in f32.
        xp = xp_ref[...]
        # width taps: (H+2, W, 3C), last-axis order (kw, cin)
        kw_cat = jnp.concatenate([xp[:, kw:kw + W, :] for kw in range(3)], axis=-1)
        # height taps: (H, W, 9C), last-axis order (kh, kw, cin) — matches weight reshape
        patches = jnp.concatenate([kw_cat[kh:kh + H] for kh in range(3)], axis=-1)
        lhs = patches.reshape(H * W, 9 * C).astype(jnp.bfloat16)   # bf16 MXU operand
        acc = jnp.dot(lhs, w_ref[...], preferred_element_type=jnp.float32)  # (H*W, C) f32
        return acc + b_ref[...]                                     # folded-BN bias add

    x = x_ref[0].astype(jnp.float32)                                # (H, W, C) identity

    # ---- conv1 + bn1 (folded) + LeakyReLU ----
    xp_ref[...] = jnp.zeros_like(xp_ref)
    xp_ref[1:H + 1, 1:W + 1, :] = x
    y1 = conv3x3(w1_ref, b1_ref)                                    # (H*W, C)
    a1 = jnp.where(y1 >= 0, y1, slope * y1)

    # ---- conv2 + bn2 (folded) ----  (scratch border stays zero; only interior rewritten)
    xp_ref[1:H + 1, 1:W + 1, :] = a1.reshape(H, W, C)
    y2 = conv3x3(w2_ref, b2_ref)                                    # (H*W, C)

    # ---- SE: global average pool -> FC -> ReLU -> FC -> sigmoid (all f32) ----
    pooled = jnp.sum(y2, axis=0, keepdims=True) * (1.0 / (H * W))   # (1, C)
    h = jnp.maximum(jnp.dot(pooled, fc1_ref[...],
                            preferred_element_type=jnp.float32), 0.0)
    gate = jax.nn.sigmoid(jnp.dot(h, fc2_ref[...],
                                  preferred_element_type=jnp.float32))  # (1, C)

    # ---- SE scale + residual add + final LeakyReLU ----
    out = y2 * gate + x.reshape(H * W, C)
    out = jnp.where(out >= 0, out, slope * out)
    o_ref[0] = out.reshape(H, W, C).astype(o_ref.dtype)


def _fused_residual_block(x_nhwc, prep, *, slope=0.1):
    N, H, W, C = x_nhwc.shape
    Cr = prep["fc1"].shape[-1]
    kernel = functools.partial(_residual_block_kernel, H=H, W=W, C=C, slope=slope)
    return pl.pallas_call(
        kernel,
        out_shape=jax.ShapeDtypeStruct((N, H, W, C), x_nhwc.dtype),
        grid=(N,),
        in_specs=[
            pl.BlockSpec((1, H, W, C), lambda n: (n, 0, 0, 0)),
            pl.BlockSpec((9 * C, C), lambda n: (0, 0)),
            pl.BlockSpec((1, C), lambda n: (0, 0)),
            pl.BlockSpec((9 * C, C), lambda n: (0, 0)),
            pl.BlockSpec((1, C), lambda n: (0, 0)),
            pl.BlockSpec((C, Cr), lambda n: (0, 0)),
            pl.BlockSpec((Cr, C), lambda n: (0, 0)),
        ],
        out_specs=pl.BlockSpec((1, H, W, C), lambda n: (n, 0, 0, 0)),
        scratch_shapes=[pltpu.VMEM((H + 2, W + 2, C), jnp.float32)],
        compiler_params=pltpu.CompilerParams(
            dimension_semantics=("parallel",)),   # one image per TensorCore on v7x
    )(x_nhwc, prep["w1"], prep["b1"], prep["w2"], prep["b2"],
      prep["fc1"], prep["fc2"])


@jax.jit
def residual_block_forward(x_nchw, prep):
    # PyTorch NCHW at the API boundary -> NHWC so channels map to the lane axis.
    x = jnp.transpose(x_nchw, (0, 2, 3, 1))
    out = _fused_residual_block(x, prep)
    return jnp.transpose(out, (0, 3, 1, 2))
# TODO(synk): downsample branch (downsample=None in this config) is not implemented.


# ----------------------------------------------------------------------------
# Pure-JAX reference (mirrors the PyTorch forward, inference-mode BN).
# It applies the same BN folding and bf16 rounding of the conv MXU operands as the
# kernel, so the comparison isolates the Pallas implementation; a pure-f32 compute
# would differ from either implementation only by the ~1e-2 bf16 conv quantization.
# ----------------------------------------------------------------------------
def reference_forward(x, params, eps=1e-5):
    def lrelu(z):
        return jnp.where(z >= 0, z, 0.1 * z)

    def conv_bn(z, w_oihw, gamma, beta, mean, var):
        w_folded, bias = _folded_conv_oihw(w_oihw, gamma, beta, mean, var, eps)
        y = lax.conv_general_dilated(
            z.astype(jnp.bfloat16), w_folded.astype(jnp.bfloat16),
            window_strides=(1, 1), padding=((1, 1), (1, 1)),
            dimension_numbers=("NCHW", "OIHW", "NCHW"),
            preferred_element_type=jnp.float32)
        return y + bias[None, :, None, None]

    out = lrelu(conv_bn(x, params["conv1_w"], params["bn1_gamma"], params["bn1_beta"],
                        params["bn1_mean"], params["bn1_var"]))
    out = conv_bn(out, params["conv2_w"], params["bn2_gamma"], params["bn2_beta"],
                  params["bn2_mean"], params["bn2_var"])
    y = jnp.mean(out, axis=(2, 3))                                  # (N, C)
    h = jnp.maximum(y @ params["fc1_w"].T, 0.0)
    s = jax.nn.sigmoid(h @ params["fc2_w"].T)
    out = out * s[:, :, None, None]
    out = lrelu(out + x)
    return out


if __name__ == "__main__":
    # C must be >= 16 because SEBlock uses reduction=16 (C // 16 >= 1).
    N, C, H, W = 2, 32, 16, 16
    reduction = 16
    Cr = C // reduction

    key = jax.random.PRNGKey(0)
    ks = jax.random.split(key, 13)
    params = {
        "conv1_w": jax.random.normal(ks[0], (C, C, 3, 3), jnp.float32) * 0.1,
        "conv2_w": jax.random.normal(ks[1], (C, C, 3, 3), jnp.float32) * 0.1,
        "bn1_gamma": jax.random.uniform(ks[2], (C,), jnp.float32, 0.5, 1.5),
        "bn1_beta": jax.random.normal(ks[3], (C,), jnp.float32) * 0.1,
        "bn1_mean": jax.random.normal(ks[4], (C,), jnp.float32) * 0.1,
        "bn1_var": jax.random.uniform(ks[5], (C,), jnp.float32, 0.5, 1.5),
        "bn2_gamma": jax.random.uniform(ks[6], (C,), jnp.float32, 0.5, 1.5),
        "bn2_beta": jax.random.normal(ks[7], (C,), jnp.float32) * 0.1,
        "bn2_mean": jax.random.normal(ks[8], (C,), jnp.float32) * 0.1,
        "bn2_var": jax.random.uniform(ks[9], (C,), jnp.float32, 0.5, 1.5),
        "fc1_w": jax.random.normal(ks[10], (Cr, C), jnp.float32) * 0.2,
        "fc2_w": jax.random.normal(ks[11], (C, Cr), jnp.float32) * 0.2,
    }
    x = jax.random.normal(ks[12], (N, C, H, W), jnp.float32)

    prep = prepare_params(params)                 # constant transforms, done once
    out = jax.block_until_ready(residual_block_forward(x, prep))
    ref = jax.block_until_ready(reference_forward(x, params))

    assert out.shape == (N, C, H, W), out.shape
    # Kernel and reference share identical bf16 conv operands; remaining difference is
    # f32 accumulation-order noise (typically ~1e-5), so 5e-3 is a comfortable bound.
    assert jnp.allclose(out, ref, atol=5e-3, rtol=5e-3), \
        float(jnp.max(jnp.abs(out - ref)))
    print("KERNEL_OK")
</pallas_src>

<mosaic_0001>
module attributes {stable_mosaic.version = 11 : i64} {
  func.func @_residual_block_kernel(%arg0: i32, %arg1: memref<1x16x16x32xf32, #tpu.memory_space<vmem>>, %arg2: memref<288x32xbf16, #tpu.memory_space<vmem>>, %arg3: memref<1x32xf32, #tpu.memory_space<vmem>>, %arg4: memref<288x32xbf16, #tpu.memory_space<vmem>>, %arg5: memref<1x32xf32, #tpu.memory_space<vmem>>, %arg6: memref<32x2xf32, #tpu.memory_space<vmem>>, %arg7: memref<2x32xf32, #tpu.memory_space<vmem>>, %arg8: memref<1x16x16x32xf32, #tpu.memory_space<vmem>>, %arg9: memref<18x18x32xf32, #tpu.memory_space<vmem>>) attributes {dimension_semantics = [#tpu.dimension_semantics<parallel>], iteration_bounds = array<i64: 2>, scalar_prefetch = 0 : i64, scratch_operands = 1 : i64, tpu.core_type = #tpu.core_type<tc>, window_params = [{transform_indices = @transform_0, window_bounds = array<i64: 1, 16, 16, 32>}, {pipeline_mode = #tpu.pipeline_mode<synchronous>, transform_indices = @transform_1, window_bounds = array<i64: 288, 32>}, {pipeline_mode = #tpu.pipeline_mode<synchronous>, transform_indices = @transform_2, window_bounds = array<i64: 1, 32>}, {pipeline_mode = #tpu.pipeline_mode<synchronous>, transform_indices = @transform_3, window_bounds = array<i64: 288, 32>}, {pipeline_mode = #tpu.pipeline_mode<synchronous>, transform_indices = @transform_4, window_bounds = array<i64: 1, 32>}, {pipeline_mode = #tpu.pipeline_mode<synchronous>, transform_indices = @transform_5, window_bounds = array<i64: 32, 2>}, {pipeline_mode = #tpu.pipeline_mode<synchronous>, transform_indices = @transform_6, window_bounds = array<i64: 2, 32>}, {transform_indices = @transform_7, window_bounds = array<i64: 1, 16, 16, 32>}]} {
    %c0 = arith.constant 0 : index
    %c0_0 = arith.constant 0 : index
    %c0_1 = arith.constant 0 : index
    %c0_2 = arith.constant 0 : index
    %0 = vector.load %arg1[%c0, %c0_0, %c0_1, %c0_2] : memref<1x16x16x32xf32, #tpu.memory_space<vmem>>, vector<1x16x16x32xf32>
    %1 = vector.shape_cast %0 : vector<1x16x16x32xf32> to vector<16x16x32xf32>
    %cst = arith.constant 0.000000e+00 : f32
    %2 = vector.broadcast %cst : f32 to vector<18x18x32xf32>
    %c0_3 = arith.constant 0 : index
    %c0_4 = arith.constant 0 : index
    %c0_5 = arith.constant 0 : index
    %3 = vector.load %arg9[%c0_3, %c0_4, %c0_5] : memref<18x18x32xf32, #tpu.memory_space<vmem>>, vector<18x18x32xf32>
    tpu.vector_store %arg9[%c0_3, %c0_4, %c0_5], %2 {strides = array<i32>} : memref<18x18x32xf32, #tpu.memory_space<vmem>>, vector<18x18x32xf32>,
    %c1 = arith.constant 1 : index
    %c1_6 = arith.constant 1 : index
    %c0_7 = arith.constant 0 : index
    %4 = vector.load %arg9[%c1, %c1_6, %c0_7] : memref<18x18x32xf32, #tpu.memory_space<vmem>>, vector<16x16x32xf32>
    tpu.vector_store %arg9[%c1, %c1_6, %c0_7], %1 {strides = array<i32>} : memref<18x18x32xf32, #tpu.memory_space<vmem>>, vector<16x16x32xf32>,
    %c0_8 = arith.constant 0 : index
    %c0_9 = arith.constant 0 : index
    %c0_10 = arith.constant 0 : index
    %5 = vector.load %arg9[%c0_8, %c0_9, %c0_10] : memref<18x18x32xf32, #tpu.memory_space<vmem>>, vector<18x18x32xf32>
    %6 = vector.extract_strided_slice %5 {offsets = [0, 0, 0], sizes = [18, 16, 32], strides = [1, 1, 1]} : vector<18x18x32xf32> to vector<18x16x32xf32>
    %7 = vector.extract_strided_slice %5 {offsets = [0, 1, 0], sizes = [18, 16, 32], strides = [1, 1, 1]} : vector<18x18x32xf32> to vector<18x16x32xf32>
    %8 = vector.extract_strided_slice %5 {offsets = [0, 2, 0], sizes = [18, 16, 32], strides = [1, 1, 1]} : vector<18x18x32xf32> to vector<18x16x32xf32>
    %9 = tpu.concatenate %6, %7, %8 in 2 : vector<18x16x32xf32>, vector<18x16x32xf32>, vector<18x16x32xf32> -> vector<18x16x96xf32>
    %10 = vector.extract_strided_slice %9 {offsets = [0, 0, 0], sizes = [16, 16, 96], strides = [1, 1, 1]} : vector<18x16x96xf32> to vector<16x16x96xf32>
    %11 = vector.extract_strided_slice %9 {offsets = [1, 0, 0], sizes = [16, 16, 96], strides = [1, 1, 1]} : vector<18x16x96xf32> to vector<16x16x96xf32>
    %12 = vector.extract_strided_slice %9 {offsets = [2, 0, 0], sizes = [16, 16, 96], strides = [1, 1, 1]} : vector<18x16x96xf32> to vector<16x16x96xf32>
    %13 = tpu.concatenate %10, %11, %12 in 2 : vector<16x16x96xf32>, vector<16x16x96xf32>, vector<16x16x96xf32> -> vector<16x16x288xf32>
    %14 = vector.shape_cast %13 : vector<16x16x288xf32> to vector<256x288xf32>
    %15 = arith.truncf %14 : vector<256x288xf32> to vector<256x288xbf16>
    %c0_11 = arith.constant 0 : index
    %c0_12 = arith.constant 0 : index
    %16 = vector.load %arg2[%c0_11, %c0_12] : memref<288x32xbf16, #tpu.memory_space<vmem>>, vector<288x32xbf16>
    %cst_13 = arith.constant dense<0.000000e+00> : vector<256x32xf32>
    %17 = tpu.matmul %15, %16, %cst_13 {dimension_numbers = #tpu.dot_dimension_numbers<[1], [0], [0], [1], [0, 0, 1, 1], [], []>} : vector<256x288xbf16>, vector<288x32xbf16>, vector<256x32xf32> -> vector<256x32xf32>
    %c0_14 = arith.constant 0 : index
    %c0_15 = arith.constant 0 : index
    %18 = vector.load %arg3[%c0_14, %c0_15] : memref<1x32xf32, #tpu.memory_space<vmem>>, vector<1x32xf32>
    %19 = vector.broadcast %18 : vector<1x32xf32> to vector<256x32xf32>
    %20 = arith.addf %17, %19 : vector<256x32xf32>
    %cst_16 = arith.constant 0.000000e+00 : f32
    %21 = vector.broadcast %cst_16 : f32 to vector<256x32xf32>
    %22 = arith.cmpf oge, %20, %21 : vector<256x32xf32>
    %cst_17 = arith.constant 1.000000e-01 : f32
    %23 = vector.broadcast %cst_17 : f32 to vector<256x32xf32>
    %24 = arith.mulf %23, %20 : vector<256x32xf32>
    %25 = arith.select %22, %20, %24 : vector<256x32xi1>, vector<256x32xf32>
    %26 = vector.shape_cast %25 : vector<256x32xf32> to vector<16x16x32xf32>
    %c1_18 = arith.constant 1 : index
    %c1_19 = arith.constant 1 : index
    %c0_20 = arith.constant 0 : index
    %27 = vector.load %arg9[%c1_18, %c1_19, %c0_20] : memref<18x18x32xf32, #tpu.memory_space<vmem>>, vector<16x16x32xf32>
    tpu.vector_store %arg9[%c1_18, %c1_19, %c0_20], %26 {strides = array<i32>} : memref<18x18x32xf32, #tpu.memory_space<vmem>>, vector<16x16x32xf32>,
    %c0_21 = arith.constant 0 : index
    %c0_22 = arith.constant 0 : index
    %c0_23 = arith.constant 0 : index
    %28 = vector.load %arg9[%c0_21, %c0_22, %c0_23] : memref<18x18x32xf32, #tpu.memory_space<vmem>>, vector<18x18x32xf32>
    %29 = vector.extract_strided_slice %28 {offsets = [0, 0, 0], sizes = [18, 16, 32], strides = [1, 1, 1]} : vector<18x18x32xf32> to vector<18x16x32xf32>
    %30 = vector.extract_strided_slice %28 {offsets = [0, 1, 0], sizes = [18, 16, 32], strides = [1, 1, 1]} : vector<18x18x32xf32> to vector<18x16x32xf32>
    %31 = vector.extract_strided_slice %28 {offsets = [0, 2, 0], sizes = [18, 16, 32], strides = [1, 1, 1]} : vector<18x18x32xf32> to vector<18x16x32xf32>
    %32 = tpu.concatenate %29, %30, %31 in 2 : vector<18x16x32xf32>, vector<18x16x32xf32>, vector<18x16x32xf32> -> vector<18x16x96xf32>
    %33 = vector.extract_strided_slice %32 {offsets = [0, 0, 0], sizes = [16, 16, 96], strides = [1, 1, 1]} : vector<18x16x96xf32> to vector<16x16x96xf32>
    %34 = vector.extract_strided_slice %32 {offsets = [1, 0, 0], sizes = [16, 16, 96], strides = [1, 1, 1]} : vector<18x16x96xf32> to vector<16x16x96xf32>
    %35 = vector.extract_strided_slice %32 {offsets = [2, 0, 0], sizes = [16, 16, 96], strides = [1, 1, 1]} : vector<18x16x96xf32> to vector<16x16x96xf32>
    %36 = tpu.concatenate %33, %34, %35 in 2 : vector<16x16x96xf32>, vector<16x16x96xf32>, vector<16x16x96xf32> -> vector<16x16x288xf32>
    %37 = vector.shape_cast %36 : vector<16x16x288xf32> to vector<256x288xf32>
    %38 = arith.truncf %37 : vector<256x288xf32> to vector<256x288xbf16>
    %c0_24 = arith.constant 0 : index
    %c0_25 = arith.constant 0 : index
    %39 = vector.load %arg4[%c0_24, %c0_25] : memref<288x32xbf16, #tpu.memory_space<vmem>>, vector<288x32xbf16>
    %cst_26 = arith.constant dense<0.000000e+00> : vector<256x32xf32>
    %40 = tpu.matmul %38, %39, %cst_26 {dimension_numbers = #tpu.dot_dimension_numbers<[1], [0], [0], [1], [0, 0, 1, 1], [], []>} : vector<256x288xbf16>, vector<288x32xbf16>, vector<256x32xf32> -> vector<256x32xf32>
    %c0_27 = arith.constant 0 : index
    %c0_28 = arith.constant 0 : index
    %41 = vector.load %arg5[%c0_27, %c0_28] : memref<1x32xf32, #tpu.memory_space<vmem>>, vector<1x32xf32>
    %42 = vector.broadcast %41 : vector<1x32xf32> to vector<256x32xf32>
    %43 = arith.addf %40, %42 : vector<256x32xf32>
    %cst_29 = arith.constant dense<0.000000e+00> : vector<32xf32>
    %44 = vector.multi_reduction <add>, %43, %cst_29 [0] : vector<256x32xf32> to vector<32xf32>
    %45 = vector.shape_cast %44 : vector<32xf32> to vector<1x32xf32>
    %cst_30 = arith.constant 3.906250e-03 : f32
    %46 = vector.broadcast %cst_30 : f32 to vector<1x32xf32>
    %47 = arith.mulf %45, %46 : vector<1x32xf32>
    %c0_31 = arith.constant 0 : index
    %c0_32 = arith.constant 0 : index
    %48 = vector.load %arg6[%c0_31, %c0_32] : memref<32x2xf32, #tpu.memory_space<vmem>>, vector<32x2xf32>
    %cst_33 = arith.constant dense<0.000000e+00> : vector<1x2xf32>
    %49 = tpu.matmul %47, %48, %cst_33 {dimension_numbers = #tpu.dot_dimension_numbers<[1], [0], [0], [1], [0, 0, 1, 1], [], []>} : vector<1x32xf32>, vector<32x2xf32>, vector<1x2xf32> -> vector<1x2xf32>
    %cst_34 = arith.constant 0.000000e+00 : f32
    %50 = vector.broadcast %cst_34 : f32 to vector<1x2xf32>
    %51 = arith.maximumf %49, %50 : vector<1x2xf32>
    %c0_35 = arith.constant 0 : index
    %c0_36 = arith.constant 0 : index
    %52 = vector.load %arg7[%c0_35, %c0_36] : memref<2x32xf32, #tpu.memory_space<vmem>>, vector<2x32xf32>
    %cst_37 = arith.constant dense<0.000000e+00> : vector<1x32xf32>
    %53 = tpu.matmul %51, %52, %cst_37 {dimension_numbers = #tpu.dot_dimension_numbers<[1], [0], [0], [1], [0, 0, 1, 1], [], []>} : vector<1x2xf32>, vector<2x32xf32>, vector<1x32xf32> -> vector<1x32xf32>
    %54 = arith.negf %53 : vector<1x32xf32>
    %55 = math.exp %54 : vector<1x32xf32>
    %cst_38 = arith.constant 1.000000e+00 : f32
    %56 = vector.broadcast %cst_38 : f32 to vector<1x32xf32>
    %57 = arith.addf %56, %55 : vector<1x32xf32>
    %58 = arith.divf %56, %57 : vector<1x32xf32>
    %59 = vector.broadcast %58 : vector<1x32xf32> to vector<256x32xf32>
    %60 = arith.mulf %43, %59 : vector<256x32xf32>
    %61 = vector.shape_cast %1 : vector<16x16x32xf32> to vector<256x32xf32>
    %62 = arith.addf %60, %61 : vector<256x32xf32>
    %cst_39 = arith.constant 0.000000e+00 : f32
    %63 = vector.broadcast %cst_39 : f32 to vector<256x32xf32>
    %64 = arith.cmpf oge, %62, %63 : vector<256x32xf32>
    %cst_40 = arith.constant 1.000000e-01 : f32
    %65 = vector.broadcast %cst_40 : f32 to vector<256x32xf32>
    %66 = arith.mulf %65, %62 : vector<256x32xf32>
    %67 = arith.select %64, %62, %66 : vector<256x32xi1>, vector<256x32xf32>
    %68 = vector.shape_cast %67 : vector<256x32xf32> to vector<16x16x32xf32>
    %c0_41 = arith.constant 0 : index
    %c0_42 = arith.constant 0 : index
    %c0_43 = arith.constant 0 : index
    %c0_44 = arith.constant 0 : index
    %69 = vector.load %arg8[%c0_41, %c0_42, %c0_43, %c0_44] : memref<1x16x16x32xf32, #tpu.memory_space<vmem>>, vector<1x16x16x32xf32>
    %70 = vector.shape_cast %69 : vector<1x16x16x32xf32> to vector<16x16x32xf32>
    %71 = vector.shape_cast %68 : vector<16x16x32xf32> to vector<1x16x16x32xf32>
    tpu.vector_store %arg8[%c0_41, %c0_42, %c0_43, %c0_44], %71 {strides = array<i32>} : memref<1x16x16x32xf32, #tpu.memory_space<vmem>>, vector<1x16x16x32xf32>,
    return
  }
  func.func @transform_0(%arg0: i32) -> (i32, i32, i32, i32) {
    %c0_i32 = arith.constant 0 : i32
    %c0_i32_0 = arith.constant 0 : i32
    %c0_i32_1 = arith.constant 0 : i32
    %c0_i32_2 = arith.constant 0 : i32
    return %arg0, %c0_i32, %c0_i32_0, %c0_i32_1 : i32, i32, i32, i32
  }
  func.func @transform_1(%arg0: i32) -> (i32, i32) {
    %c0_i32 = arith.constant 0 : i32
    %c0_i32_0 = arith.constant 0 : i32
    %c0_i32_1 = arith.constant 0 : i32
    return %c0_i32, %c0_i32_0 : i32, i32
  }
  func.func @transform_2(%arg0: i32) -> (i32, i32) {
    %c0_i32 = arith.constant 0 : i32
    %c0_i32_0 = arith.constant 0 : i32
    %c0_i32_1 = arith.constant 0 : i32
    return %c0_i32, %c0_i32_0 : i32, i32
  }
  func.func @transform_3(%arg0: i32) -> (i32, i32) {
    %c0_i32 = arith.constant 0 : i32
    %c0_i32_0 = arith.constant 0 : i32
    %c0_i32_1 = arith.constant 0 : i32
    return %c0_i32, %c0_i32_0 : i32, i32
  }
  func.func @transform_4(%arg0: i32) -> (i32, i32) {
    %c0_i32 = arith.constant 0 : i32
    %c0_i32_0 = arith.constant 0 : i32
    %c0_i32_1 = arith.constant 0 : i32
    return %c0_i32, %c0_i32_0 : i32, i32
  }
  func.func @transform_5(%arg0: i32) -> (i32, i32) {
    %c0_i32 = arith.constant 0 : i32
    %c0_i32_0 = arith.constant 0 : i32
    %c0_i32_1 = arith.constant 0 : i32
    return %c0_i32, %c0_i32_0 : i32, i32
  }
  func.func @transform_6(%arg0: i32) -> (i32, i32) {
    %c0_i32 = arith.constant 0 : i32
    %c0_i32_0 = arith.constant 0 : i32
    %c0_i32_1 = arith.constant 0 : i32
    return %c0_i32, %c0_i32_0 : i32, i32
  }
  func.func @transform_7(%arg0: i32) -> (i32, i32, i32, i32) {
    %c0_i32 = arith.constant 0 : i32
    %c0_i32_0 = arith.constant 0 : i32
    %c0_i32_1 = arith.constant 0 : i32
    %c0_i32_2 = arith.constant 0 : i32
    return %arg0, %c0_i32, %c0_i32_0, %c0_i32_1 : i32, i32, i32, i32
  }
}

</mosaic_0001>

<llo_original>
// kernel: residual_block_forward.1
$region0: #{residual_block_forward.1}
  #allocation0 [shape = 'u32[]', space=smem, size = 0x4, offset = 0x4, fixed_abs, tag = 'smem constant byte address 0x4 - core index']
  #allocation1 [shape = 'u32[72,128]{1,0:T(1,128)}', space=vmem, size = 0x9000, scoped, tag = 'internal scratch']
  #allocation2 [shape = 'f32[18,18,32]{2,1,0:T(8,128)}', space=vmem, size = 0x36000, scoped, tag = 'scratch operand']
  %s0 = inlined_call_operand.hbm [shape: f32[2,16,16,32], index: 0, kind: input, shape index: {}]
  %s1 = inlined_call_operand.vmem [shape: bf16[288,32], index: 1, kind: input, shape index: {}]
  %s2 = inlined_call_operand.vmem [shape: f32[1,32], index: 2, kind: input, shape index: {}]
  %s3 = inlined_call_operand.vmem [shape: bf16[288,32], index: 3, kind: input, shape index: {}]
  %s4 = inlined_call_operand.vmem [shape: f32[1,32], index: 4, kind: input, shape index: {}]
  %s5 = inlined_call_operand.vmem [shape: f32[32,2], index: 5, kind: input, shape index: {}]
  %s6 = inlined_call_operand.vmem [shape: f32[2,32], index: 6, kind: input, shape index: {}]
  %s7 = inlined_call_operand.hbm [shape: f32[2,16,16,32], index: 7, kind: output, shape index: {}]
  %s8 = sld [smem:[#allocation0]]
  $region65: #{residual_block_forward.1} parent=0
    _
  %s10 = ssub.s32 1, %s8
  %s11 = scalar_select 0, %s10, %s8
  $region1: #{residual_block_forward.1} parent=0
    #allocation3 [shape = 'u8[262144]{0}', space=vmem, size = 0x40000, scoped, tag = 'input window, operand 0']
    #allocation4 [shape = 's32[2]{0}', space=sflag, size = 0x8, scoped, tag = 'scoped memory for residual_block_forward.1']
    #allocation5 [shape = 's32[2]{0}', space=sflag, size = 0x8, scoped, tag = 'scoped memory for residual_block_forward.1']
    #allocation6 [shape = 'u8[262144]{0}', space=vmem, size = 0x40000, scoped, tag = 'output window, operand 0']
    %12 = vsyncpa [#allocation4], 0
    %s13 = scalar_lea.sflag [#allocation4], 1
    %14 = vsyncpa %s13, 0
    %15 = vsyncpa [#allocation5], 0
    %s16 = scalar_lea.sflag [#allocation5], 1
    %17 = vsyncpa %s16, 0
    loop: start=0, step=1, limit=4
    $region2: #{residual_block_forward.1} parent=1 // loop_pre_header
      _
    $region3: #{residual_block_forward.1} parent=1 // loop_header
      %s19 = sphi 0, %s23
      %p20 = scmp.ge.s32.totalorder %s19, 4
      %s29 = sphi 0, %s31
      %s32 = sphi 0, %s29
      %s33 = sphi 0, %s32
      %s49 = sphi 0, %s33
      %s53 = sphi 0, %s53
      %s55 = sphi 0, %s53
      %s56 = sphi 0, %s55
      %s70 = sphi 0, %s56
      %s74 = sphi 0, %s74
      %s76 = sphi 0, %s74
      %s77 = sphi 0, %s76
      %s91 = sphi 0, %s77
      %s95 = sphi 0, %s95
      %s97 = sphi 0, %s95
      %s98 = sphi 0, %s97
      %s112 = sphi 0, %s98
      %s116 = sphi 0, %s116
      %s118 = sphi 0, %s116
      %s119 = sphi 0, %s118
      %s133 = sphi 0, %s119
      %s137 = sphi 0, %s137
      %s139 = sphi 0, %s137
      %s140 = sphi 0, %s139
      %s154 = sphi 0, %s140
      %s158 = sphi 0, %s158
      %s160 = sphi 0, %s158
      %s161 = sphi 0, %s160
      %s175 = sphi 0, %s161
      %s181 = sphi 0, %s183
      %s184 = sphi 0, %s181
      %s185 = sphi 0, %s184
      %s201 = sphi 0, %s185
    $region4: #{residual_block_forward.1} parent=1 // loop_header_branch
      %22 = sbr.rel (%p20) target = $region8
    $region5: #{residual_block_forward.1} parent=1 // loop_body
      %s24 = ssub.s32 %s19, 1
      %s25 = ssub.s32 %s19, 2
      %s26 = sadd.s32 %s19, 1
      %s27 = ssub.s32 %s19, %s26
      %p28 = scmp.eq.s32.totalorder %s27, 0
      %s30 = sadd.s32 %s29, 1
      %s31 = scalar_select %p28, %s29, %s30
      %p34 = pneg %p28
      %p35 = scmp.eq.s32.totalorder %s19, 1
      %p36 = por %p34, %p35
      %p37 = scmp.ne.s32.totalorder %s29, %s32
      %p38 = scmp.eq.s32.totalorder %s19, 0
      %p39 = por %p37, %p38
      %p40 = scmp.ne.s32.totalorder %s29, %s32
      %p41 = scmp.eq.s32.totalorder %s24, 1
      %p42 = por %p40, %p41
      %p43 = scmp.ne.s32.totalorder %s32, %s33
      %p44 = scmp.eq.s32.totalorder %s24, 0
      %p45 = por %p43, %p44
      %p46 = scmp.ne.s32.totalorder %s32, %s33
      %p47 = scmp.eq.s32.totalorder %s25, 1
      %p48 = por %p46, %p47
      %p50 = scmp.ne.s32.totalorder %s33, %s49
      %p51 = scmp.eq.s32.totalorder %s25, 0
      %p52 = por %p50, %p51
      %s54 = sadd.s32 %s53, 1
      %p57 = scmp.eq.s32.totalorder %s19, 1
      %p58 = scmp.ne.s32.totalorder %s53, %s55
      %p59 = scmp.eq.s32.totalorder %s19, 0
      %p60 = por %p58, %p59
      %p61 = scmp.ne.s32.totalorder %s53, %s55
      %p62 = scmp.eq.s32.totalorder %s24, 1
      %p63 = por %p61, %p62
      %p64 = scmp.ne.s32.totalorder %s55, %s56
      %p65 = scmp.eq.s32.totalorder %s24, 0
      %p66 = por %p64, %p65
      %p67 = scmp.ne.s32.totalorder %s55, %s56
      %p68 = scmp.eq.s32.totalorder %s25, 1
      %p69 = por %p67, %p68
      %p71 = scmp.ne.s32.totalorder %s56, %s70
      %p72 = scmp.eq.s32.totalorder %s25, 0
      %p73 = por %p71, %p72
      %s75 = sadd.s32 %s74, 1
      %p78 = scmp.eq.s32.totalorder %s19, 1
      %p79 = scmp.ne.s32.totalorder %s74, %s76
      %p80 = scmp.eq.s32.totalorder %s19, 0
      %p81 = por %p79, %p80
      %p82 = scmp.ne.s32.totalorder %s74, %s76
      %p83 = scmp.eq.s32.totalorder %s24, 1
      %p84 = por %p82, %p83
      %p85 = scmp.ne.s32.totalorder %s76, %s77
      %p86 = scmp.eq.s32.totalorder %s24, 0
      %p87 = por %p85, %p86
      %p88 = scmp.ne.s32.totalorder %s76, %s77
      %p89 = scmp.eq.s32.totalorder %s25, 1
      %p90 = por %p88, %p89
      %p92 = scmp.ne.s32.totalorder %s77, %s91
      %p93 = scmp.eq.s32.totalorder %s25, 0
      %p94 = por %p92, %p93
      %s96 = sadd.s32 %s95, 1
      %p99 = scmp.eq.s32.totalorder %s19, 1
      %p100 = scmp.ne.s32.totalorder %s95, %s97
      %p101 = scmp.eq.s32.totalorder %s19, 0
      %p102 = por %p100, %p101
      %p103 = scmp.ne.s32.totalorder %s95, %s97
      %p104 = scmp.eq.s32.totalorder %s24, 1
      %p105 = por %p103, %p104
      %p106 = scmp.ne.s32.totalorder %s97, %s98
      %p107 = scmp.eq.s32.totalorder %s24, 0
      %p108 = por %p106, %p107
      %p109 = scmp.ne.s32.totalorder %s97, %s98
      %p110 = scmp.eq.s32.totalorder %s25, 1
      %p111 = por %p109, %p110
      %p113 = scmp.ne.s32.totalorder %s98, %s112
      %p114 = scmp.eq.s32.totalorder %s25, 0
      %p115 = por %p113, %p114
      %s117 = sadd.s32 %s116, 1
      %p120 = scmp.eq.s32.totalorder %s19, 1
      %p121 = scmp.ne.s32.totalorder %s116, %s118
      %p122 = scmp.eq.s32.totalorder %s19, 0
      %p123 = por %p121, %p122
      %p124 = scmp.ne.s32.totalorder %s116, %s118
      %p125 = scmp.eq.s32.totalorder %s24, 1
      %p126 = por %p124, %p125
      %p127 = scmp.ne.s32.totalorder %s118, %s119
      %p128 = scmp.eq.s32.totalorder %s24, 0
      %p129 = por %p127, %p128
      %p130 = scmp.ne.s32.totalorder %s118, %s119
      %p131 = scmp.eq.s32.totalorder %s25, 1
      %p132 = por %p130, %p131
      %p134 = scmp.ne.s32.totalorder %s119, %s133
      %p135 = scmp.eq.s32.totalorder %s25, 0
      %p136 = por %p134, %p135
      %s138 = sadd.s32 %s137, 1
      %p141 = scmp.eq.s32.totalorder %s19, 1
      %p142 = scmp.ne.s32.totalorder %s137, %s139
      %p143 = scmp.eq.s32.totalorder %s19, 0
      %p144 = por %p142, %p143
      %p145 = scmp.ne.s32.totalorder %s137, %s139
      %p146 = scmp.eq.s32.totalorder %s24, 1
      %p147 = por %p145, %p146
      %p148 = scmp.ne.s32.totalorder %s139, %s140
      %p149 = scmp.eq.s32.totalorder %s24, 0
      %p150 = por %p148, %p149
      %p151 = scmp.ne.s32.totalorder %s139, %s140
      %p152 = scmp.eq.s32.totalorder %s25, 1
      %p153 = por %p151, %p152
      %p155 = scmp.ne.s32.totalorder %s140, %s154
      %p156 = scmp.eq.s32.totalorder %s25, 0
      %p157 = por %p155, %p156
      %s159 = sadd.s32 %s158, 1
      %p162 = scmp.eq.s32.totalorder %s19, 1
      %p163 = scmp.ne.s32.totalorder %s158, %s160
      %p164 = scmp.eq.s32.totalorder %s19, 0
      %p165 = por %p163, %p164
      %p166 = scmp.ne.s32.totalorder %s158, %s160
      %p167 = scmp.eq.s32.totalorder %s24, 1
      %p168 = por %p166, %p167
      %p169 = scmp.ne.s32.totalorder %s160, %s161
      %p170 = scmp.eq.s32.totalorder %s24, 0
      %p171 = por %p169, %p170
      %p172 = scmp.ne.s32.totalorder %s160, %s161
      %p173 = scmp.eq.s32.totalorder %s25, 1
      %p174 = por %p172, %p173
      %p176 = scmp.ne.s32.totalorder %s161, %s175
      %p177 = scmp.eq.s32.totalorder %s25, 0
      %p178 = por %p176, %p177
      %s179 = ssub.s32 %s19, %s26
      %p180 = scmp.eq.s32.totalorder %s179, 0
      %s182 = sadd.s32 %s181, 1
      %s183 = scalar_select %p180, %s181, %s182
      %p186 = pneg %p180
      %p187 = scmp.eq.s32.totalorder %s19, 1
      %p188 = por %p186, %p187
      %p189 = scmp.ne.s32.totalorder %s181, %s184
      %p190 = scmp.eq.s32.totalorder %s19, 0
      %p191 = por %p189, %p190
      %p192 = scmp.ne.s32.totalorder %s181, %s184
      %p193 = scmp.eq.s32.totalorder %s24, 1
      %p194 = por %p192, %p193
      %p195 = scmp.ne.s32.totalorder %s184, %s185
      %p196 = scmp.eq.s32.totalorder %s24, 0
      %p197 = por %p195, %p196
      %p198 = scmp.ne.s32.totalorder %s184, %s185
      %p199 = scmp.eq.s32.totalorder %s25, 1
      %p200 = por %p198, %p199
      %p202 = scmp.ne.s32.totalorder %s185, %s201
      %p203 = scmp.eq.s32.totalorder %s25, 0
      %p204 = por %p202, %p203
      %p205 = scmp.le.s32.totalorder 1, %s19
      %p206 = scmp.lt.s32.totalorder %s19, 3
      %p207 = pnand %p205, %p206
      %p208 = pneg %p207
      // Predicated region
      $region9: #{residual_block_forward.1} parent=5 // pred_check
        _
      $region10: #{residual_block_forward.1} parent=5 // pred_check_branch
        %210 = sbr.rel (%p207) target = $region12
      $region11: #{residual_block_forward.1} parent=5 // pred_region
        %s211 = ssub.s32 %s19, 1
        // Predicated region
        $region13: #{residual_block_forward.1} parent=11 // pred_check
          %p212 = pneg %p66
        $region14: #{residual_block_forward.1} parent=11 // pred_check_branch
          %214 = sbr.rel (%p212) target = $region16
        $region15: #{residual_block_forward.1} parent=11 // pred_region
          _
        $region16: #{residual_block_forward.1} parent=11 // pred_fallthru
          _
        // Predicated region
        $region17: #{residual_block_forward.1} parent=11 // pred_check
          %p215 = pneg %p87
        $region18: #{residual_block_forward.1} parent=11 // pred_check_branch
          %217 = sbr.rel (%p215) target = $region20
        $region19: #{residual_block_forward.1} parent=11 // pred_region
          _
        $region20: #{residual_block_forward.1} parent=11 // pred_fallthru
          _
        // Predicated region
        $region21: #{residual_block_forward.1} parent=11 // pred_check
          %p218 = pneg %p108
        $region22: #{residual_block_forward.1} parent=11 // pred_check_branch
          %220 = sbr.rel (%p218) target = $region24
        $region23: #{residual_block_forward.1} parent=11 // pred_region
          _
        $region24: #{residual_block_forward.1} parent=11 // pred_fallthru
          _
        // Predicated region
        $region25: #{residual_block_forward.1} parent=11 // pred_check
          %p221 = pneg %p129
        $region26: #{residual_block_forward.1} parent=11 // pred_check_branch
          %223 = sbr.rel (%p221) target = $region28
        $region27: #{residual_block_forward.1} parent=11 // pred_region
          _
        $region28: #{residual_block_forward.1} parent=11 // pred_fallthru
          _
        // Predicated region
        $region29: #{residual_block_forward.1} parent=11 // pred_check
          %p224 = pneg %p150
        $region30: #{residual_block_forward.1} parent=11 // pred_check_branch
          %226 = sbr.rel (%p224) target = $region32
        $region31: #{residual_block_forward.1} parent=11 // pred_region
          _
        $region32: #{residual_block_forward.1} parent=11 // pred_fallthru
          _
        // Predicated region
        $region33: #{residual_block_forward.1} parent=11 // pred_check
          %p227 = pneg %p171
        $region34: #{residual_block_forward.1} parent=11 // pred_check_branch
          %229 = sbr.rel (%p227) target = $region36
        $region35: #{residual_block_forward.1} parent=11 // pred_region
          _
        $region36: #{residual_block_forward.1} parent=11 // pred_fallthru
          _
      $region12: #{residual_block_forward.1} parent=5 // pred_fallthru
        _
      %p230 = scmp.lt.s32.totalorder %s19, 2
      // Predicated region
      $region37: #{residual_block_forward.1} parent=5 // pred_check
        %p231 = pneg %p230
      $region38: #{residual_block_forward.1} parent=5 // pred_check_branch
        %233 = sbr.rel (%p231) target = $region40
      $region39: #{residual_block_forward.1} parent=5 // pred_region
        // Predicated region
        $region41: #{residual_block_forward.1} parent=39 // pred_check
          %p234 = pneg %p39
        $region42: #{residual_block_forward.1} parent=39 // pred_check_branch
          %236 = sbr.rel (%p234) target = $region44
        $region43: #{residual_block_forward.1} parent=39 // pred_region
          %s237 = sand.u32 %s29, 1
          %s238 = scalar_lea.sflag [#allocation4], %s237
          %s239 = sand.u32 %s29, 1
          %s240 = smul.addr %s239, 256
          %s241 = scalar_lea.vmem [#allocation3], %s240
          %243 = vsyncadd %s238, 0
          %s244 = smul.addr %s19, 32
          %s245 = smul.addr %s244, 8
          %s246 = scalar_lea.hbm %s0, %s245
          %s247 = sshll.u32 %s246, 4
          %s248 = int_to_ptr.hbm [resolvable:$true] %s247
          %s249 = sshll.u32 %s241, 4
          %s250 = int_to_ptr.vmem [resolvable:$true] %s249
          %255 = dma.hbm_to_vmem [thread:$0]  %s248, 4096, %s250, %s238, 128, 128, 8
        $region44: #{residual_block_forward.1} parent=39 // pred_fallthru
          _
      $region40: #{residual_block_forward.1} parent=5 // pred_fallthru
        _
      %p256 = scmp.le.s32.totalorder 1, %s19
      %p257 = scmp.lt.s32.totalorder %s19, 3
      %p258 = pnand %p256, %p257
      %p259 = pneg %p258
      // Predicated region
      $region45: #{residual_block_forward.1} parent=5 // pred_check
        _
      $region46: #{residual_block_forward.1} parent=5 // pred_check_branch
        %261 = sbr.rel (%p258) target = $region48
      $region47: #{residual_block_forward.1} parent=5 // pred_region
        %s262 = ssub.s32 %s19, 1
        %s263 = sand.u32 %s32, 1
        %s264 = scalar_lea.sflag [#allocation4], %s263
        %s265 = sand.u32 %s32, 1
        %s266 = smul.addr %s265, 256
        %s267 = scalar_lea.vmem [#allocation3], %s266
        // Predicated region
        $region49: #{residual_block_forward.1} parent=47 // pred_check
          %p268 = pneg %p45
        $region50: #{residual_block_forward.1} parent=47 // pred_check_branch
          %270 = sbr.rel (%p268) target = $region52
        $region51: #{residual_block_forward.1} parent=47 // pred_region
          %272 = dma.done %s264, 4096
        $region52: #{residual_block_forward.1} parent=47 // pred_fallthru
          _
        %s273 = sand.u32 %s32, 1
        %s274 = scalar_lea.sflag [#allocation4], %s273
        %s275 = sand.u32 %s32, 1
        %s276 = smul.addr %s275, 256
        %s277 = scalar_lea.vmem [#allocation3], %s276
        %p278 = pneg %p45
        %p279 = pneg %p42
        %p280 = pneg %p66
        %p281 = pneg %p63
        %p282 = pneg %p87
        %p283 = pneg %p84
        %p284 = pneg %p108
        %p285 = pneg %p105
        %p286 = pneg %p129
        %p287 = pneg %p126
        %p288 = pneg %p150
        %p289 = pneg %p147
        %p290 = pneg %p171
        %p291 = pneg %p168
        %p292 = pneg %p197
        %p293 = pneg %p194
        %s294 = sand.u32 %s184, 1
        %s295 = scalar_lea.sflag [#allocation5], %s294
        %s296 = sand.u32 %s184, 1
        %s297 = smul.addr %s296, 256
        %s298 = scalar_lea.vmem [#allocation6], %s297
        %v300 = vld [vmem:[%s267] sm:$0xff]
        %v301 = vld [vmem:[%s267 + $0x8] sm:$0xff]
        %v302 = vld [vmem:[%s267 + $0x10] sm:$0xff]
        %v303 = vld [vmem:[%s267 + $0x18] sm:$0xff]
        %v304 = vld [vmem:[%s267 + $0x20] sm:$0xff]
        %v305 = vld [vmem:[%s267 + $0x28] sm:$0xff]
        %v306 = vld [vmem:[%s267 + $0x30] sm:$0xff]
        %v307 = vld [vmem:[%s267 + $0x38] sm:$0xff]
        %v308 = vld [vmem:[%s267 + $0x40] sm:$0xff]
        %v309 = vld [vmem:[%s267 + $0x48] sm:$0xff]
        %v310 = vld [vmem:[%s267 + $0x50] sm:$0xff]
        %v311 = vld [vmem:[%s267 + $0x58] sm:$0xff]
        %v312 = vld [vmem:[%s267 + $0x60] sm:$0xff]
        %v313 = vld [vmem:[%s267 + $0x68] sm:$0xff]
        %v314 = vld [vmem:[%s267 + $0x70] sm:$0xff]
        %v315 = vld [vmem:[%s267 + $0x78] sm:$0xff]
        %v316 = vld [vmem:[%s267 + $0x80] sm:$0xff]
        %v317 = vld [vmem:[%s267 + $0x88] sm:$0xff]
        %v318 = vld [vmem:[%s267 + $0x90] sm:$0xff]
        %v319 = vld [vmem:[%s267 + $0x98] sm:$0xff]
        %v320 = vld [vmem:[%s267 + $0xa0] sm:$0xff]
        %v321 = vld [vmem:[%s267 + $0xa8] sm:$0xff]
        %v322 = vld [vmem:[%s267 + $0xb0] sm:$0xff]
        %v323 = vld [vmem:[%s267 + $0xb8] sm:$0xff]
        %v324 = vld [vmem:[%s267 + $0xc0] sm:$0xff]
        %v325 = vld [vmem:[%s267 + $0xc8] sm:$0xff]
        %v326 = vld [vmem:[%s267 + $0xd0] sm:$0xff]
        %v327 = vld [vmem:[%s267 + $0xd8] sm:$0xff]
        %v328 = vld [vmem:[%s267 + $0xe0] sm:$0xff]
        %v329 = vld [vmem:[%s267 + $0xe8] sm:$0xff]
        %v330 = vld [vmem:[%s267 + $0xf0] sm:$0xff]
        %v331 = vld [vmem:[%s267 + $0xf8] sm:$0xff]
        %vm332 = vcmask 261120
        %333 = vst.msk [vmem:[#allocation2] sm:$0xff] %vm332, 0.0
        %334 = vst.msk [vmem:[#allocation2 + $0x8] sm:$0xff] %vm332, 0.0
        %vm335 = vcmask 254976
        %336 = vst.msk [vmem:[#allocation2 + $0x10] sm:$0x3] %vm335, 0.0
        %337 = vst.msk [vmem:[#allocation2 + $0x18] sm:$0xff] %vm332, 0.0
        %338 = vst.msk [vmem:[#allocation2 + $0x20] sm:$0xff] %vm332, 0.0
        %339 = vst.msk [vmem:[#allocation2 + $0x28] sm:$0x3] %vm335, 0.0
        %340 = vst.msk [vmem:[#allocation2 + $0x30] sm:$0xff] %vm332, 0.0
        %341 = vst.msk [vmem:[#allocation2 + $0x38] sm:$0xff] %vm332, 0.0
        %342 = vst.msk [vmem:[#allocation2 + $0x40] sm:$0x3] %vm335, 0.0
        %343 = vst.msk [vmem:[#allocation2 + $0x48] sm:$0xff] %vm332, 0.0
        %344 = vst.msk [vmem:[#allocation2 + $0x50] sm:$0xff] %vm332, 0.0
        %345 = vst.msk [vmem:[#allocation2 + $0x58] sm:$0x3] %vm335, 0.0
        %346 = vst.msk [vmem:[#allocation2 + $0x60] sm:$0xff] %vm332, 0.0
        %347 = vst.msk [vmem:[#allocation2 + $0x68] sm:$0xff] %vm332, 0.0
        %348 = vst.msk [vmem:[#allocation2 + $0x70] sm:$0x3] %vm335, 0.0
        %349 = vst.msk [vmem:[#allocation2 + $0x78] sm:$0xff] %vm332, 0.0
        %350 = vst.msk [vmem:[#allocation2 + $0x80] sm:$0xff] %vm332, 0.0
        %351 = vst.msk [vmem:[#allocation2 + $0x88] sm:$0x3] %vm335, 0.0
        %352 = vst.msk [vmem:[#allocation2 + $0x90] sm:$0xff] %vm332, 0.0
        %353 = vst.msk [vmem:[#allocation2 + $0x98] sm:$0xff] %vm332, 0.0
        %354 = vst.msk [vmem:[#allocation2 + $0xa0] sm:$0x3] %vm335, 0.0
        %355 = vst.msk [vmem:[#allocation2 + $0xa8] sm:$0xff] %vm332, 0.0
        %356 = vst.msk [vmem:[#allocation2 + $0xb0] sm:$0xff] %vm332, 0.0
        %357 = vst.msk [vmem:[#allocation2 + $0xb8] sm:$0x3] %vm335, 0.0
        %358 = vst.msk [vmem:[#allocation2 + $0xc0] sm:$0xff] %vm332, 0.0
        %359 = vst.msk [vmem:[#allocation2 + $0xc8] sm:$0xff] %vm332, 0.0
        %360 = vst.msk [vmem:[#allocation2 + $0xd0] sm:$0x3] %vm335, 0.0
        %361 = vst.msk [vmem:[#allocation2 + $0xd8] sm:$0xff] %vm332, 0.0
        %362 = vst.msk [vmem:[#allocation2 + $0xe0] sm:$0xff] %vm332, 0.0
        %363 = vst.msk [vmem:[#allocation2 + $0xe8] sm:$0x3] %vm335, 0.0
        %364 = vst.msk [vmem:[#allocation2 + $0xf0] sm:$0xff] %vm332, 0.0
        %365 = vst.msk [vmem:[#allocation2 + $0xf8] sm:$0xff] %vm332, 0.0
        %366 = vst.msk [vmem:[#allocation2 + $0x100] sm:$0x3] %vm335, 0.0
        %367 = vst.msk [vmem:[#allocation2 + $0x108] sm:$0xff] %vm332, 0.0
        %368 = vst.msk [vmem:[#allocation2 + $0x110] sm:$0xff] %vm332, 0.0
        %369 = vst.msk [vmem:[#allocation2 + $0x118] sm:$0x3] %vm335, 0.0
        %370 = vst.msk [vmem:[#allocation2 + $0x120] sm:$0xff] %vm332, 0.0
        %371 = vst.msk [vmem:[#allocation2 + $0x128] sm:$0xff] %vm332, 0.0
        %372 = vst.msk [vmem:[#allocation2 + $0x130] sm:$0x3] %vm335, 0.0
        %373 = vst.msk [vmem:[#allocation2 + $0x138] sm:$0xff] %vm332, 0.0
        %374 = vst.msk [vmem:[#allocation2 + $0x140] sm:$0xff] %vm332, 0.0
        %375 = vst.msk [vmem:[#allocation2 + $0x148] sm:$0x3] %vm335, 0.0
        %376 = vst.msk [vmem:[#allocation2 + $0x150] sm:$0xff] %vm332, 0.0
        %377 = vst.msk [vmem:[#allocation2 + $0x158] sm:$0xff] %vm332, 0.0
        %378 = vst.msk [vmem:[#allocation2 + $0x160] sm:$0x3] %vm335, 0.0
        %379 = vst.msk [vmem:[#allocation2 + $0x168] sm:$0xff] %vm332, 0.0
        %380 = vst.msk [vmem:[#allocation2 + $0x170] sm:$0xff] %vm332, 0.0
        %381 = vst.msk [vmem:[#allocation2 + $0x178] sm:$0x3] %vm335, 0.0
        %382 = vst.msk [vmem:[#allocation2 + $0x180] sm:$0xff] %vm332, 0.0
        %383 = vst.msk [vmem:[#allocation2 + $0x188] sm:$0xff] %vm332, 0.0
        %384 = vst.msk [vmem:[#allocation2 + $0x190] sm:$0x3] %vm335, 0.0
        %385 = vst.msk [vmem:[#allocation2 + $0x198] sm:$0xff] %vm332, 0.0
        %386 = vst.msk [vmem:[#allocation2 + $0x1a0] sm:$0xff] %vm332, 0.0
        %387 = vst.msk [vmem:[#allocation2 + $0x1a8] sm:$0x3] %vm335, 0.0
        %s388 = scalar_lea.vmem [#allocation2], 24
        %389 = vst.msk [vmem:[%s388 + $0x1] sm:$0xff] %vm332, %v300
        %390 = vst.msk [vmem:[%s388 + $0x9] sm:$0xff] %vm332, %v301
        %391 = vst.msk [vmem:[%s388 + $0x19] sm:$0xff] %vm332, %v302
        %392 = vst.msk [vmem:[%s388 + $0x21] sm:$0xff] %vm332, %v303
        %393 = vst.msk [vmem:[%s388 + $0x31] sm:$0xff] %vm332, %v304
        %394 = vst.msk [vmem:[%s388 + $0x39] sm:$0xff] %vm332, %v305
        %395 = vst.msk [vmem:[%s388 + $0x49] sm:$0xff] %vm332, %v306
        %396 = vst.msk [vmem:[%s388 + $0x51] sm:$0xff] %vm332, %v307
        %397 = vst.msk [vmem:[%s388 + $0x61] sm:$0xff] %vm332, %v308
        %398 = vst.msk [vmem:[%s388 + $0x69] sm:$0xff] %vm332, %v309
        %399 = vst.msk [vmem:[%s388 + $0x79] sm:$0xff] %vm332, %v310
        %400 = vst.msk [vmem:[%s388 + $0x81] sm:$0xff] %vm332, %v311
        %401 = vst.msk [vmem:[%s388 + $0x91] sm:$0xff] %vm332, %v312
        %402 = vst.msk [vmem:[%s388 + $0x99] sm:$0xff] %vm332, %v313
        %403 = vst.msk [vmem:[%s388 + $0xa9] sm:$0xff] %vm332, %v314
        %404 = vst.msk [vmem:[%s388 + $0xb1] sm:$0xff] %vm332, %v315
        %405 = vst.msk [vmem:[%s388 + $0xc1] sm:$0xff] %vm332, %v316
        %406 = vst.msk [vmem:[%s388 + $0xc9] sm:$0xff] %vm332, %v317
        %407 = vst.msk [vmem:[%s388 + $0xd9] sm:$0xff] %vm332, %v318
        %408 = vst.msk [vmem:[%s388 + $0xe1] sm:$0xff] %vm332, %v319
        %409 = vst.msk [vmem:[%s388 + $0xf1] sm:$0xff] %vm332, %v320
        %410 = vst.msk [vmem:[%s388 + $0xf9] sm:$0xff] %vm332, %v321
        %411 = vst.msk [vmem:[%s388 + $0x109] sm:$0xff] %vm332, %v322
        %412 = vst.msk [vmem:[%s388 + $0x111] sm:$0xff] %vm332, %v323
        %413 = vst.msk [vmem:[%s388 + $0x121] sm:$0xff] %vm332, %v324
        %414 = vst.msk [vmem:[%s388 + $0x129] sm:$0xff] %vm332, %v325
        %415 = vst.msk [vmem:[%s388 + $0x139] sm:$0xff] %vm332, %v326
        %416 = vst.msk [vmem:[%s388 + $0x141] sm:$0xff] %vm332, %v327
        %417 = vst.msk [vmem:[%s388 + $0x151] sm:$0xff] %vm332, %v328
        %418 = vst.msk [vmem:[%s388 + $0x159] sm:$0xff] %vm332, %v329
        %419 = vst.msk [vmem:[%s388 + $0x169] sm:$0xff] %vm332, %v330
        %420 = vst.msk [vmem:[%s388 + $0x171] sm:$0xff] %vm332, %v331
        %v421 = vld [vmem:[#allocation2] sm:$0xff]
        %v422 = vld [vmem:[#allocation2 + $0x8] sm:$0xff]
        %v423 = vld [vmem:[#allocation2 + $0x10] sm:$0x3]
        %v424 = vld [vmem:[#allocation2 + $0x18] sm:$0xff]
        %v425 = vld [vmem:[#allocation2 + $0x20] sm:$0xff]
        %v426 = vld [vmem:[#allocation2 + $0x28] sm:$0x3]
        %v427 = vld [vmem:[#allocation2 + $0x30] sm:$0xff]
        %v428 = vld [vmem:[#allocation2 + $0x38] sm:$0xff]
        %v429 = vld [vmem:[#allocation2 + $0x40] sm:$0x3]
        %v430 = vld [vmem:[#allocation2 + $0x48] sm:$0xff]
        %v431 = vld [vmem:[#allocation2 + $0x50] sm:$0xff]
        %v432 = vld [vmem:[#allocation2 + $0x58] sm:$0x3]
        %v433 = vld [vmem:[#allocation2 + $0x60] sm:$0xff]
        %v434 = vld [vmem:[#allocation2 + $0x68] sm:$0xff]
        %v435 = vld [vmem:[#allocation2 + $0x70] sm:$0x3]
        %v436 = vld [vmem:[#allocation2 + $0x78] sm:$0xff]
        %v437 = vld [vmem:[#allocation2 + $0x80] sm:$0xff]
        %v438 = vld [vmem:[#allocation2 + $0x88] sm:$0x3]
        %v439 = vld [vmem:[#allocation2 + $0x90] sm:$0xff]
        %v440 = vld [vmem:[#allocation2 + $0x98] sm:$0xff]
        %v441 = vld [vmem:[#allocation2 + $0xa0] sm:$0x3]
        %v442 = vld [vmem:[#allocation2 + $0xa8] sm:$0xff]
        %v443 = vld [vmem:[#allocation2 + $0xb0] sm:$0xff]
        %v444 = vld [vmem:[#allocation2 + $0xb8] sm:$0x3]
        %v445 = vld [vmem:[#allocation2 + $0xc0] sm:$0xff]
        %v446 = vld [vmem:[#allocation2 + $0xc8] sm:$0xff]
        %v447 = vld [vmem:[#allocation2 + $0xd0] sm:$0x3]
        %v448 = vld [vmem:[#allocation2 + $0xd8] sm:$0xff]
        %v449 = vld [vmem:[#allocation2 + $0xe0] sm:$0xff]
        %v450 = vld [vmem:[#allocation2 + $0xe8] sm:$0x3]
        %v451 = vld [vmem:[#allocation2 + $0xf0] sm:$0xff]
        %v452 = vld [vmem:[#allocation2 + $0xf8] sm:$0xff]
        %v453 = vld [vmem:[#allocation2 + $0x100] sm:$0x3]
        %v454 = vld [vmem:[#allocation2 + $0x108] sm:$0xff]
        %v455 = vld [vmem:[#allocation2 + $0x110] sm:$0xff]
        %v456 = vld [vmem:[#allocation2 + $0x118] sm:$0x3]
        %v457 = vld [vmem:[#allocation2 + $0x120] sm:$0xff]
        %v458 = vld [vmem:[#allocation2 + $0x128] sm:$0xff]
        %v459 = vld [vmem:[#allocation2 + $0x130] sm:$0x3]
        %v460 = vld [vmem:[#allocation2 + $0x138] sm:$0xff]
        %v461 = vld [vmem:[#allocation2 + $0x140] sm:$0xff]
        %v462 = vld [vmem:[#allocation2 + $0x148] sm:$0x3]
        %v463 = vld [vmem:[#allocation2 + $0x150] sm:$0xff]
        %v464 = vld [vmem:[#allocation2 + $0x158] sm:$0xff]
        %v465 = vld [vmem:[#allocation2 + $0x160] sm:$0x3]
        %v466 = vld [vmem:[#allocation2 + $0x168] sm:$0xff]
        %v467 = vld [vmem:[#allocation2 + $0x170] sm:$0xff]
        %v468 = vld [vmem:[#allocation2 + $0x178] sm:$0x3]
        %v469 = vld [vmem:[#allocation2 + $0x180] sm:$0xff]
        %v470 = vld [vmem:[#allocation2 + $0x188] sm:$0xff]
        %v471 = vld [vmem:[#allocation2 + $0x190] sm:$0x3]
        %v472 = vld [vmem:[#allocation2 + $0x198] sm:$0xff]
        %v473 = vld [vmem:[#allocation2 + $0x1a0] sm:$0xff]
        %v474 = vld [vmem:[#allocation2 + $0x1a8] sm:$0x3]
        %vm529 = vcmask 1046528
        %v530 = vrot.slane %v421, 1
        %v531 = vrot.slane %v422, 1
        %v532 = vsel %vm529, %v530, %v531
        %v533 = vrot.slane %v423, 1
        %v534 = vsel %vm529, %v531, %v533
        %v535 = vrot.slane %v424, 1
        %v536 = vrot.slane %v425, 1
        %v537 = vsel %vm529, %v535, %v536
        %v538 = vrot.slane %v426, 1
        %v539 = vsel %vm529, %v536, %v538
        %v540 = vrot.slane %v427, 1
        %v541 = vrot.slane %v428, 1
        %v542 = vsel %vm529, %v540, %v541
        %v543 = vrot.slane %v429, 1
        %v544 = vsel %vm529, %v541, %v543
        %v545 = vrot.slane %v430, 1
        %v546 = vrot.slane %v431, 1
        %v547 = vsel %vm529, %v545, %v546
        %v548 = vrot.slane %v432, 1
        %v549 = vsel %vm529, %v546, %v548
        %v550 = vrot.slane %v433, 1
        %v551 = vrot.slane %v434, 1
        %v552 = vsel %vm529, %v550, %v551
        %v553 = vrot.slane %v435, 1
        %v554 = vsel %vm529, %v551, %v553
        %v555 = vrot.slane %v436, 1
        %v556 = vrot.slane %v437, 1
        %v557 = vsel %vm529, %v555, %v556
        %v558 = vrot.slane %v438, 1
        %v559 = vsel %vm529, %v556, %v558
        %v560 = vrot.slane %v439, 1
        %v561 = vrot.slane %v440, 1
        %v562 = vsel %vm529, %v560, %v561
        %v563 = vrot.slane %v441, 1
        %v564 = vsel %vm529, %v561, %v563
        %v565 = vrot.slane %v442, 1
        %v566 = vrot.slane %v443, 1
        %v567 = vsel %vm529, %v565, %v566
        %v568 = vrot.slane %v444, 1
        %v569 = vsel %vm529, %v566, %v568
        %v570 = vrot.slane %v445, 1
        %v571 = vrot.slane %v446, 1
        %v572 = vsel %vm529, %v570, %v571
        %v573 = vrot.slane %v447, 1
        %v574 = vsel %vm529, %v571, %v573
        %v575 = vrot.slane %v448, 1
        %v576 = vrot.slane %v449, 1
        %v577 = vsel %vm529, %v575, %v576
        %v578 = vrot.slane %v450, 1
        %v579 = vsel %vm529, %v576, %v578
        %v580 = vrot.slane %v451, 1
        %v581 = vrot.slane %v452, 1
        %v582 = vsel %vm529, %v580, %v581
        %v583 = vrot.slane %v453, 1
        %v584 = vsel %vm529, %v581, %v583
        %v585 = vrot.slane %v454, 1
        %v586 = vrot.slane %v455, 1
        %v587 = vsel %vm529, %v585, %v586
        %v588 = vrot.slane %v456, 1
        %v589 = vsel %vm529, %v586, %v588
        %v590 = vrot.slane %v457, 1
        %v591 = vrot.slane %v458, 1
        %v592 = vsel %vm529, %v590, %v591
        %v593 = vrot.slane %v459, 1
        %v594 = vsel %vm529, %v591, %v593
        %v595 = vrot.slane %v460, 1
        %v596 = vrot.slane %v461, 1
        %v597 = vsel %vm529, %v595, %v596
        %v598 = vrot.slane %v462, 1
        %v599 = vsel %vm529, %v596, %v598
        %v600 = vrot.slane %v463, 1
        %v601 = vrot.slane %v464, 1
        %v602 = vsel %vm529, %v600, %v601
        %v603 = vrot.slane %v465, 1
        %v604 = vsel %vm529, %v601, %v603
        %v605 = vrot.slane %v466, 1
        %v606 = vrot.slane %v467, 1
        %v607 = vsel %vm529, %v605, %v606
        %v608 = vrot.slane %v468, 1
        %v609 = vsel %vm529, %v606, %v608
        %v610 = vrot.slane %v469, 1
        %v611 = vrot.slane %v470, 1
        %v612 = vsel %vm529, %v610, %v611
        %v613 = vrot.slane %v471, 1
        %v614 = vsel %vm529, %v611, %v613
        %v615 = vrot.slane %v472, 1
        %v616 = vrot.slane %v473, 1
        %v617 = vsel %vm529, %v615, %v616
        %v618 = vrot.slane %v474, 1
        %v619 = vsel %vm529, %v616, %v618
        %620 = vrot.lane.b32.xlu0 %v532, 32
        %v621 = vpop.permute.xlu0 %620
        %622 = vrot.lane.b32.xlu0 %v534, 32
        %v623 = vpop.permute.xlu0 %622
        %624 = vrot.lane.b32.xlu0 %v537, 32
        %v625 = vpop.permute.xlu0 %624
        %626 = vrot.lane.b32.xlu0 %v539, 32
        %v627 = vpop.permute.xlu0 %626
        %628 = vrot.lane.b32.xlu0 %v542, 32
        %v629 = vpop.permute.xlu0 %628
        %630 = vrot.lane.b32.xlu0 %v544, 32
        %v631 = vpop.permute.xlu0 %630
        %632 = vrot.lane.b32.xlu0 %v547, 32
        %v633 = vpop.permute.xlu0 %632
        %634 = vrot.lane.b32.xlu0 %v549, 32
        %v635 = vpop.permute.xlu0 %634
        %636 = vrot.lane.b32.xlu0 %v552, 32
        %v637 = vpop.permute.xlu0 %636
        %638 = vrot.lane.b32.xlu0 %v554, 32
        %v639 = vpop.permute.xlu0 %638
        %640 = vrot.lane.b32.xlu0 %v557, 32
        %v641 = vpop.permute.xlu0 %640
        %642 = vrot.lane.b32.xlu0 %v559, 32
        %v643 = vpop.permute.xlu0 %642
        %644 = vrot.lane.b32.xlu0 %v562, 32
        %v645 = vpop.permute.xlu0 %644
        %646 = vrot.lane.b32.xlu0 %v564, 32
        %v647 = vpop.permute.xlu0 %646
        %648 = vrot.lane.b32.xlu0 %v567, 32
        %v649 = vpop.permute.xlu0 %648
        %650 = vrot.lane.b32.xlu0 %v569, 32
        %v651 = vpop.permute.xlu0 %650
        %652 = vrot.lane.b32.xlu0 %v572, 32
        %v653 = vpop.permute.xlu0 %652
        %654 = vrot.lane.b32.xlu0 %v574, 32
        %v655 = vpop.permute.xlu0 %654
        %656 = vrot.lane.b32.xlu0 %v577, 32
        %v657 = vpop.permute.xlu0 %656
        %658 = vrot.lane.b32.xlu0 %v579, 32
        %v659 = vpop.permute.xlu0 %658
        %660 = vrot.lane.b32.xlu0 %v582, 32
        %v661 = vpop.permute.xlu0 %660
        %662 = vrot.lane.b32.xlu0 %v584, 32
        %v663 = vpop.permute.xlu0 %662
        %664 = vrot.lane.b32.xlu0 %v587, 32
        %v665 = vpop.permute.xlu0 %664
        %666 = vrot.lane.b32.xlu0 %v589, 32
        %v667 = vpop.permute.xlu0 %666
        %668 = vrot.lane.b32.xlu0 %v592, 32
        %v669 = vpop.permute.xlu0 %668
        %670 = vrot.lane.b32.xlu0 %v594, 32
        %v671 = vpop.permute.xlu0 %670
        %672 = vrot.lane.b32.xlu0 %v597, 32
        %v673 = vpop.permute.xlu0 %672
        %674 = vrot.lane.b32.xlu0 %v599, 32
        %v675 = vpop.permute.xlu0 %674
        %676 = vrot.lane.b32.xlu0 %v602, 32
        %v677 = vpop.permute.xlu0 %676
        %678 = vrot.lane.b32.xlu0 %v604, 32
        %v679 = vpop.permute.xlu0 %678
        %680 = vrot.lane.b32.xlu0 %v607, 32
        %v681 = vpop.permute.xlu0 %680
        %682 = vrot.lane.b32.xlu0 %v609, 32
        %v683 = vpop.permute.xlu0 %682
        %684 = vrot.lane.b32.xlu0 %v612, 32
        %v685 = vpop.permute.xlu0 %684
        %686 = vrot.lane.b32.xlu0 %v614, 32
        %v687 = vpop.permute.xlu0 %686
        %688 = vrot.lane.b32.xlu0 %v617, 32
        %v689 = vpop.permute.xlu0 %688
        %690 = vrot.lane.b32.xlu0 %v619, 32
        %v691 = vpop.permute.xlu0 %690
        %vm728 = vcmask 1045504
        %v729 = vrot.slane %v421, 2
        %v730 = vrot.slane %v422, 2
        %v731 = vsel %vm728, %v729, %v730
        %v732 = vrot.slane %v423, 2
        %v733 = vsel %vm728, %v730, %v732
        %v734 = vrot.slane %v424, 2
        %v735 = vrot.slane %v425, 2
        %v736 = vsel %vm728, %v734, %v735
        %v737 = vrot.slane %v426, 2
        %v738 = vsel %vm728, %v735, %v737
        %v739 = vrot.slane %v427, 2
        %v740 = vrot.slane %v428, 2
        %v741 = vsel %vm728, %v739, %v740
        %v742 = vrot.slane %v429, 2
        %v743 = vsel %vm728, %v740, %v742
        %v744 = vrot.slane %v430, 2
        %v745 = vrot.slane %v431, 2
        %v746 = vsel %vm728, %v744, %v745
        %v747 = vrot.slane %v432, 2
        %v748 = vsel %vm728, %v745, %v747
        %v749 = vrot.slane %v433, 2
        %v750 = vrot.slane %v434, 2
        %v751 = vsel %vm728, %v749, %v750
        %v752 = vrot.slane %v435, 2
        %v753 = vsel %vm728, %v750, %v752
        %v754 = vrot.slane %v436, 2
        %v755 = vrot.slane %v437, 2
        %v756 = vsel %vm728, %v754, %v755
        %v757 = vrot.slane %v438, 2
        %v758 = vsel %vm728, %v755, %v757
        %v759 = vrot.slane %v439, 2
        %v760 = vrot.slane %v440, 2
        %v761 = vsel %vm728, %v759, %v760
        %v762 = vrot.slane %v441, 2
        %v763 = vsel %vm728, %v760, %v762
        %v764 = vrot.slane %v442, 2
        %v765 = vrot.slane %v443, 2
        %v766 = vsel %vm728, %v764, %v765
        %v767 = vrot.slane %v444, 2
        %v768 = vsel %vm728, %v765, %v767
        %v769 = vrot.slane %v445, 2
        %v770 = vrot.slane %v446, 2
        %v771 = vsel %vm728, %v769, %v770
        %v772 = vrot.slane %v447, 2
        %v773 = vsel %vm728, %v770, %v772
        %v774 = vrot.slane %v448, 2
        %v775 = vrot.slane %v449, 2
        %v776 = vsel %vm728, %v774, %v775
        %v777 = vrot.slane %v450, 2
        %v778 = vsel %vm728, %v775, %v777
        %v779 = vrot.slane %v451, 2
        %v780 = vrot.slane %v452, 2
        %v781 = vsel %vm728, %v779, %v780
        %v782 = vrot.slane %v453, 2
        %v783 = vsel %vm728, %v780, %v782
        %v784 = vrot.slane %v454, 2
        %v785 = vrot.slane %v455, 2
        %v786 = vsel %vm728, %v784, %v785
        %v787 = vrot.slane %v456, 2
        %v788 = vsel %vm728, %v785, %v787
        %v789 = vrot.slane %v457, 2
        %v790 = vrot.slane %v458, 2
        %v791 = vsel %vm728, %v789, %v790
        %v792 = vrot.slane %v459, 2
        %v793 = vsel %vm728, %v790, %v792
        %v794 = vrot.slane %v460, 2
        %v795 = vrot.slane %v461, 2
        %v796 = vsel %vm728, %v794, %v795
        %v797 = vrot.slane %v462, 2
        %v798 = vsel %vm728, %v795, %v797
        %v799 = vrot.slane %v463, 2
        %v800 = vrot.slane %v464, 2
        %v801 = vsel %vm728, %v799, %v800
        %v802 = vrot.slane %v465, 2
        %v803 = vsel %vm728, %v800, %v802
        %v804 = vrot.slane %v466, 2
        %v805 = vrot.slane %v467, 2
        %v806 = vsel %vm728, %v804, %v805
        %v807 = vrot.slane %v468, 2
        %v808 = vsel %vm728, %v805, %v807
        %v809 = vrot.slane %v469, 2
        %v810 = vrot.slane %v470, 2
        %v811 = vsel %vm728, %v809, %v810
        %v812 = vrot.slane %v471, 2
        %v813 = vsel %vm728, %v810, %v812
        %v814 = vrot.slane %v472, 2
        %v815 = vrot.slane %v473, 2
        %v816 = vsel %vm728, %v814, %v815
        %v817 = vrot.slane %v474, 2
        %v818 = vsel %vm728, %v815, %v817
        %819 = vrot.lane.b32.xlu0 %v731, 64
        %v820 = vpop.permute.xlu0 %819
        %821 = vrot.lane.b32.xlu0 %v733, 64
        %v822 = vpop.permute.xlu0 %821
        %823 = vrot.lane.b32.xlu0 %v736, 64
        %v824 = vpop.permute.xlu0 %823
        %825 = vrot.lane.b32.xlu0 %v738, 64
        %v826 = vpop.permute.xlu0 %825
        %827 = vrot.lane.b32.xlu0 %v741, 64
        %v828 = vpop.permute.xlu0 %827
        %829 = vrot.lane.b32.xlu0 %v743, 64
        %v830 = vpop.permute.xlu0 %829
        %831 = vrot.lane.b32.xlu0 %v746, 64
        %v832 = vpop.permute.xlu0 %831
        %833 = vrot.lane.b32.xlu0 %v748, 64
        %v834 = vpop.permute.xlu0 %833
        %835 = vrot.lane.b32.xlu0 %v751, 64
        %v836 = vpop.permute.xlu0 %835
        %837 = vrot.lane.b32.xlu0 %v753, 64
        %v838 = vpop.permute.xlu0 %837
        %839 = vrot.lane.b32.xlu0 %v756, 64
        %v840 = vpop.permute.xlu0 %839
        %841 = vrot.lane.b32.xlu0 %v758, 64
        %v842 = vpop.permute.xlu0 %841
        %843 = vrot.lane.b32.xlu0 %v761, 64
        %v844 = vpop.permute.xlu0 %843
        %845 = vrot.lane.b32.xlu0 %v763, 64
        %v846 = vpop.permute.xlu0 %845
        %847 = vrot.lane.b32.xlu0 %v766, 64
        %v848 = vpop.permute.xlu0 %847
        %849 = vrot.lane.b32.xlu0 %v768, 64
        %v850 = vpop.permute.xlu0 %849
        %851 = vrot.lane.b32.xlu0 %v771, 64
        %v852 = vpop.permute.xlu0 %851
        %853 = vrot.lane.b32.xlu0 %v773, 64
        %v854 = vpop.permute.xlu0 %853
        %855 = vrot.lane.b32.xlu0 %v776, 64
        %v856 = vpop.permute.xlu0 %855
        %857 = vrot.lane.b32.xlu0 %v778, 64
        %v858 = vpop.permute.xlu0 %857
        %859 = vrot.lane.b32.xlu0 %v781, 64
        %v860 = vpop.permute.xlu0 %859
        %861 = vrot.lane.b32.xlu0 %v783, 64
        %v862 = vpop.permute.xlu0 %861
        %863 = vrot.lane.b32.xlu0 %v786, 64
        %v864 = vpop.permute.xlu0 %863
        %865 = vrot.lane.b32.xlu0 %v788, 64
        %v866 = vpop.permute.xlu0 %865
        %867 = vrot.lane.b32.xlu0 %v791, 64
        %v868 = vpop.permute.xlu0 %867
        %869 = vrot.lane.b32.xlu0 %v793, 64
        %v870 = vpop.permute.xlu0 %869
        %871 = vrot.lane.b32.xlu0 %v796, 64
        %v872 = vpop.permute.xlu0 %871
        %873 = vrot.lane.b32.xlu0 %v798, 64
        %v874 = vpop.permute.xlu0 %873
        %875 = vrot.lane.b32.xlu0 %v801, 64
        %v876 = vpop.permute.xlu0 %875
        %877 = vrot.lane.b32.xlu0 %v803, 64
        %v878 = vpop.permute.xlu0 %877
        %879 = vrot.lane.b32.xlu0 %v806, 64
        %v880 = vpop.permute.xlu0 %879
        %881 = vrot.lane.b32.xlu0 %v808, 64
        %v882 = vpop.permute.xlu0 %881
        %883 = vrot.lane.b32.xlu0 %v811, 64
        %v884 = vpop.permute.xlu0 %883
        %885 = vrot.lane.b32.xlu0 %v813, 64
        %v886 = vpop.permute.xlu0 %885
        %887 = vrot.lane.b32.xlu0 %v816, 64
        %v888 = vpop.permute.xlu0 %887
        %889 = vrot.lane.b32.xlu0 %v818, 64
        %v890 = vpop.permute.xlu0 %889
        %v927 = vsel %vm332, %v421, %v621
        %v928 = vsel %vm332, %v422, %v623
        %v929 = vsel %vm332, %v424, %v625
        %v930 = vsel %vm332, %v425, %v627
        %v931 = vsel %vm332, %v427, %v629
        %v932 = vsel %vm332, %v428, %v631
        %v933 = vsel %vm332, %v430, %v633
        %v934 = vsel %vm332, %v431, %v635
        %v935 = vsel %vm332, %v433, %v637
        %v936 = vsel %vm332, %v434, %v639
        %v937 = vsel %vm332, %v436, %v641
        %v938 = vsel %vm332, %v437, %v643
        %v939 = vsel %vm332, %v439, %v645
        %v940 = vsel %vm332, %v440, %v647
        %v941 = vsel %vm332, %v442, %v649
        %v942 = vsel %vm332, %v443, %v651
        %v943 = vsel %vm332, %v445, %v653
        %v944 = vsel %vm332, %v446, %v655
        %v945 = vsel %vm332, %v448, %v657
        %v946 = vsel %vm332, %v449, %v659
        %v947 = vsel %vm332, %v451, %v661
        %v948 = vsel %vm332, %v452, %v663
        %v949 = vsel %vm332, %v454, %v665
        %v950 = vsel %vm332, %v455, %v667
        %v951 = vsel %vm332, %v457, %v669
        %v952 = vsel %vm332, %v458, %v671
        %v953 = vsel %vm332, %v460, %v673
        %v954 = vsel %vm332, %v461, %v675
        %v955 = vsel %vm332, %v463, %v677
        %v956 = vsel %vm332, %v464, %v679
        %v957 = vsel %vm332, %v466, %v681
        %v958 = vsel %vm332, %v467, %v683
        %v959 = vsel %vm332, %v469, %v685
        %v960 = vsel %vm332, %v470, %v687
        %v961 = vsel %vm332, %v472, %v689
        %v962 = vsel %vm332, %v473, %v691
        %vm963 = vcmask 523264
        %v964 = vsel %vm963, %v927, %v820
        %v965 = vsel %vm963, %v928, %v822
        %v966 = vsel %vm963, %v929, %v824
        %v967 = vsel %vm963, %v930, %v826
        %v968 = vsel %vm963, %v931, %v828
        %v969 = vsel %vm963, %v932, %v830
        %v970 = vsel %vm963, %v933, %v832
        %v971 = vsel %vm963, %v934, %v834
        %v972 = vsel %vm963, %v935, %v836
        %v973 = vsel %vm963, %v936, %v838
        %v974 = vsel %vm963, %v937, %v840
        %v975 = vsel %vm963, %v938, %v842
        %v976 = vsel %vm963, %v939, %v844
        %v977 = vsel %vm963, %v940, %v846
        %v978 = vsel %vm963, %v941, %v848
        %v979 = vsel %vm963, %v942, %v850
        %v980 = vsel %vm963, %v943, %v852
        %v981 = vsel %vm963, %v944, %v854
        %v982 = vsel %vm963, %v945, %v856
        %v983 = vsel %vm963, %v946, %v858
        %v984 = vsel %vm963, %v947, %v860
        %v985 = vsel %vm963, %v948, %v862
        %v986 = vsel %vm963, %v949, %v864
        %v987 = vsel %vm963, %v950, %v866
        %v988 = vsel %vm963, %v951, %v868
        %v989 = vsel %vm963, %v952, %v870
        %v990 = vsel %vm963, %v953, %v872
        %v991 = vsel %vm963, %v954, %v874
        %v992 = vsel %vm963, %v955, %v876
        %v993 = vsel %vm963, %v956, %v878
        %v994 = vsel %vm963, %v957, %v880
        %v995 = vsel %vm963, %v958, %v882
        %v996 = vsel %vm963, %v959, %v884
        %v997 = vsel %vm963, %v960, %v886
        %v998 = vsel %vm963, %v961, %v888
        %v999 = vsel %vm963, %v962, %v890
        %1032 = vrot.lane.b32.xlu0 %v966, 96
        %v1033 = vpop.permute.xlu0 %1032
        %1034 = vrot.lane.b32.xlu0 %v967, 96
        %v1035 = vpop.permute.xlu0 %1034
        %1036 = vrot.lane.b32.xlu0 %v968, 96
        %v1037 = vpop.permute.xlu0 %1036
        %1038 = vrot.lane.b32.xlu0 %v969, 96
        %v1039 = vpop.permute.xlu0 %1038
        %1040 = vrot.lane.b32.xlu0 %v970, 96
        %v1041 = vpop.permute.xlu0 %1040
        %1042 = vrot.lane.b32.xlu0 %v971, 96
        %v1043 = vpop.permute.xlu0 %1042
        %1044 = vrot.lane.b32.xlu0 %v972, 96
        %v1045 = vpop.permute.xlu0 %1044
        %1046 = vrot.lane.b32.xlu0 %v973, 96
        %v1047 = vpop.permute.xlu0 %1046
        %1048 = vrot.lane.b32.xlu0 %v974, 96
        %v1049 = vpop.permute.xlu0 %1048
        %1050 = vrot.lane.b32.xlu0 %v975, 96
        %v1051 = vpop.permute.xlu0 %1050
        %1052 = vrot.lane.b32.xlu0 %v976, 96
        %v1053 = vpop.permute.xlu0 %1052
        %1054 = vrot.lane.b32.xlu0 %v977, 96
        %v1055 = vpop.permute.xlu0 %1054
        %1056 = vrot.lane.b32.xlu0 %v978, 96
        %v1057 = vpop.permute.xlu0 %1056
        %1058 = vrot.lane.b32.xlu0 %v979, 96
        %v1059 = vpop.permute.xlu0 %1058
        %1060 = vrot.lane.b32.xlu0 %v980, 96
        %v1061 = vpop.permute.xlu0 %1060
        %1062 = vrot.lane.b32.xlu0 %v981, 96
        %v1063 = vpop.permute.xlu0 %1062
        %1064 = vrot.lane.b32.xlu0 %v982, 96
        %v1065 = vpop.permute.xlu0 %1064
        %1066 = vrot.lane.b32.xlu0 %v983, 96
        %v1067 = vpop.permute.xlu0 %1066
        %1068 = vrot.lane.b32.xlu0 %v984, 96
        %v1069 = vpop.permute.xlu0 %1068
        %1070 = vrot.lane.b32.xlu0 %v985, 96
        %v1071 = vpop.permute.xlu0 %1070
        %1072 = vrot.lane.b32.xlu0 %v986, 96
        %v1073 = vpop.permute.xlu0 %1072
        %1074 = vrot.lane.b32.xlu0 %v987, 96
        %v1075 = vpop.permute.xlu0 %1074
        %1076 = vrot.lane.b32.xlu0 %v988, 96
        %v1077 = vpop.permute.xlu0 %1076
        %1078 = vrot.lane.b32.xlu0 %v989, 96
        %v1079 = vpop.permute.xlu0 %1078
        %1080 = vrot.lane.b32.xlu0 %v990, 96
        %v1081 = vpop.permute.xlu0 %1080
        %1082 = vrot.lane.b32.xlu0 %v991, 96
        %v1083 = vpop.permute.xlu0 %1082
        %1084 = vrot.lane.b32.xlu0 %v992, 96
        %v1085 = vpop.permute.xlu0 %1084
        %1086 = vrot.lane.b32.xlu0 %v993, 96
        %v1087 = vpop.permute.xlu0 %1086
        %1088 = vrot.lane.b32.xlu0 %v994, 96
        %v1089 = vpop.permute.xlu0 %1088
        %1090 = vrot.lane.b32.xlu0 %v995, 96
        %v1091 = vpop.permute.xlu0 %1090
        %1092 = vrot.lane.b32.xlu0 %v996, 96
        %v1093 = vpop.permute.xlu0 %1092
        %1094 = vrot.lane.b32.xlu0 %v997, 96
        %v1095 = vpop.permute.xlu0 %1094
        %1130 = vrot.lane.b32.xlu0 %v968, 64
        %v1131 = vpop.permute.xlu0 %1130
        %1132 = vrot.lane.b32.xlu0 %v969, 64
        %v1133 = vpop.permute.xlu0 %1132
        %1134 = vrot.lane.b32.xlu0 %v970, 64
        %v1135 = vpop.permute.xlu0 %1134
        %1136 = vrot.lane.b32.xlu0 %v971, 64
        %v1137 = vpop.permute.xlu0 %1136
        %1138 = vrot.lane.b32.xlu0 %v972, 64
        %v1139 = vpop.permute.xlu0 %1138
        %1140 = vrot.lane.b32.xlu0 %v973, 64
        %v1141 = vpop.permute.xlu0 %1140
        %1142 = vrot.lane.b32.xlu0 %v974, 64
        %v1143 = vpop.permute.xlu0 %1142
        %1144 = vrot.lane.b32.xlu0 %v975, 64
        %v1145 = vpop.permute.xlu0 %1144
        %1146 = vrot.lane.b32.xlu0 %v976, 64
        %v1147 = vpop.permute.xlu0 %1146
        %1148 = vrot.lane.b32.xlu0 %v977, 64
        %v1149 = vpop.permute.xlu0 %1148
        %1150 = vrot.lane.b32.xlu0 %v978, 64
        %v1151 = vpop.permute.xlu0 %1150
        %1152 = vrot.lane.b32.xlu0 %v979, 64
        %v1153 = vpop.permute.xlu0 %1152
        %1154 = vrot.lane.b32.xlu0 %v980, 64
        %v1155 = vpop.permute.xlu0 %1154
        %1156 = vrot.lane.b32.xlu0 %v981, 64
        %v1157 = vpop.permute.xlu0 %1156
        %1158 = vrot.lane.b32.xlu0 %v982, 64
        %v1159 = vpop.permute.xlu0 %1158
        %1160 = vrot.lane.b32.xlu0 %v983, 64
        %v1161 = vpop.permute.xlu0 %1160
        %1162 = vrot.lane.b32.xlu0 %v984, 64
        %v1163 = vpop.permute.xlu0 %1162
        %1164 = vrot.lane.b32.xlu0 %v985, 64
        %v1165 = vpop.permute.xlu0 %1164
        %1166 = vrot.lane.b32.xlu0 %v986, 64
        %v1167 = vpop.permute.xlu0 %1166
        %1168 = vrot.lane.b32.xlu0 %v987, 64
        %v1169 = vpop.permute.xlu0 %1168
        %1170 = vrot.lane.b32.xlu0 %v988, 64
        %v1171 = vpop.permute.xlu0 %1170
        %1172 = vrot.lane.b32.xlu0 %v989, 64
        %v1173 = vpop.permute.xlu0 %1172
        %1174 = vrot.lane.b32.xlu0 %v990, 64
        %v1175 = vpop.permute.xlu0 %1174
        %1176 = vrot.lane.b32.xlu0 %v991, 64
        %v1177 = vpop.permute.xlu0 %1176
        %1178 = vrot.lane.b32.xlu0 %v992, 64
        %v1179 = vpop.permute.xlu0 %1178
        %1180 = vrot.lane.b32.xlu0 %v993, 64
        %v1181 = vpop.permute.xlu0 %1180
        %1182 = vrot.lane.b32.xlu0 %v994, 64
        %v1183 = vpop.permute.xlu0 %1182
        %1184 = vrot.lane.b32.xlu0 %v995, 64
        %v1185 = vpop.permute.xlu0 %1184
        %1186 = vrot.lane.b32.xlu0 %v996, 64
        %v1187 = vpop.permute.xlu0 %1186
        %1188 = vrot.lane.b32.xlu0 %v997, 64
        %v1189 = vpop.permute.xlu0 %1188
        %1190 = vrot.lane.b32.xlu0 %v998, 64
        %v1191 = vpop.permute.xlu0 %1190
        %1192 = vrot.lane.b32.xlu0 %v999, 64
        %v1193 = vpop.permute.xlu0 %1192
        %vm1226 = vcmask 785408
        %v1227 = vsel %vm1226, %v964, %v1033
        %v1228 = vsel %vm1226, %v965, %v1035
        %v1229 = vsel %vm1226, %v966, %v1037
        %v1230 = vsel %vm1226, %v967, %v1039
        %v1231 = vsel %vm1226, %v968, %v1041
        %v1232 = vsel %vm1226, %v969, %v1043
        %v1233 = vsel %vm1226, %v970, %v1045
        %v1234 = vsel %vm1226, %v971, %v1047
        %v1235 = vsel %vm1226, %v972, %v1049
        %v1236 = vsel %vm1226, %v973, %v1051
        %v1237 = vsel %vm1226, %v974, %v1053
        %v1238 = vsel %vm1226, %v975, %v1055
        %v1239 = vsel %vm1226, %v976, %v1057
        %v1240 = vsel %vm1226, %v977, %v1059
        %v1241 = vsel %vm1226, %v978, %v1061
        %v1242 = vsel %vm1226, %v979, %v1063
        %v1243 = vsel %vm1226, %v980, %v1065
        %v1244 = vsel %vm1226, %v981, %v1067
        %v1245 = vsel %vm1226, %v982, %v1069
        %v1246 = vsel %vm1226, %v983, %v1071
        %v1247 = vsel %vm1226, %v984, %v1073
        %v1248 = vsel %vm1226, %v985, %v1075
        %v1249 = vsel %vm1226, %v986, %v1077
        %v1250 = vsel %vm1226, %v987, %v1079
        %v1251 = vsel %vm1226, %v988, %v1081
        %v1252 = vsel %vm1226, %v989, %v1083
        %v1253 = vsel %vm1226, %v990, %v1085
        %v1254 = vsel %vm1226, %v991, %v1087
        %v1255 = vsel %vm1226, %v992, %v1089
        %v1256 = vsel %vm1226, %v993, %v1091
        %v1257 = vsel %vm1226, %v994, %v1093
        %v1258 = vsel %vm1226, %v995, %v1095
        %v1259 = vsel %vm963, %v1033, %v1131
        %v1260 = vsel %vm963, %v1035, %v1133
        %v1261 = vsel %vm963, %v1037, %v1135
        %v1262 = vsel %vm963, %v1039, %v1137
        %v1263 = vsel %vm963, %v1041, %v1139
        %v1264 = vsel %vm963, %v1043, %v1141
        %v1265 = vsel %vm963, %v1045, %v1143
        %v1266 = vsel %vm963, %v1047, %v1145
        %v1267 = vsel %vm963, %v1049, %v1147
        %v1268 = vsel %vm963, %v1051, %v1149
        %v1269 = vsel %vm963, %v1053, %v1151
        %v1270 = vsel %vm963, %v1055, %v1153
        %v1271 = vsel %vm963, %v1057, %v1155
        %v1272 = vsel %vm963, %v1059, %v1157
        %v1273 = vsel %vm963, %v1061, %v1159
        %v1274 = vsel %vm963, %v1063, %v1161
        %v1275 = vsel %vm963, %v1065, %v1163
        %v1276 = vsel %vm963, %v1067, %v1165
        %v1277 = vsel %vm963, %v1069, %v1167
        %v1278 = vsel %vm963, %v1071, %v1169
        %v1279 = vsel %vm963, %v1073, %v1171
        %v1280 = vsel %vm963, %v1075, %v1173
        %v1281 = vsel %vm963, %v1077, %v1175
        %v1282 = vsel %vm963, %v1079, %v1177
        %v1283 = vsel %vm963, %v1081, %v1179
        %v1284 = vsel %vm963, %v1083, %v1181
        %v1285 = vsel %vm963, %v1085, %v1183
        %v1286 = vsel %vm963, %v1087, %v1185
        %v1287 = vsel %vm963, %v1089, %v1187
        %v1288 = vsel %vm963, %v1091, %v1189
        %v1289 = vsel %vm963, %v1093, %v1191
        %v1290 = vsel %vm963, %v1095, %v1193
        %v1291 = vpack.c.bf16 %v1228, %v1227
        %v1292 = vpack.c.bf16 %v1260, %v1259
        %v1293 = vpack.c.bf16 %v1133, %v1131
        %v1294 = vpack.c.bf16 %v1230, %v1229
        %v1295 = vpack.c.bf16 %v1262, %v1261
        %v1296 = vpack.c.bf16 %v1137, %v1135
        %v1297 = vpack.c.bf16 %v1232, %v1231
        %v1298 = vpack.c.bf16 %v1264, %v1263
        %v1299 = vpack.c.bf16 %v1141, %v1139
        %v1300 = vpack.c.bf16 %v1234, %v1233
        %v1301 = vpack.c.bf16 %v1266, %v1265
        %v1302 = vpack.c.bf16 %v1145, %v1143
        %v1303 = vpack.c.bf16 %v1236, %v1235
        %v1304 = vpack.c.bf16 %v1268, %v1267
        %v1305 = vpack.c.bf16 %v1149, %v1147
        %v1306 = vpack.c.bf16 %v1238, %v1237
        %v1307 = vpack.c.bf16 %v1270, %v1269
        %v1308 = vpack.c.bf16 %v1153, %v1151
        %v1309 = vpack.c.bf16 %v1240, %v1239
        %v1310 = vpack.c.bf16 %v1272, %v1271
        %v1311 = vpack.c.bf16 %v1157, %v1155
        %v1312 = vpack.c.bf16 %v1242, %v1241
        %v1313 = vpack.c.bf16 %v1274, %v1273
        %v1314 = vpack.c.bf16 %v1161, %v1159
        %v1315 = vpack.c.bf16 %v1244, %v1243
        %v1316 = vpack.c.bf16 %v1276, %v1275
        %v1317 = vpack.c.bf16 %v1165, %v1163
        %v1318 = vpack.c.bf16 %v1246, %v1245
        %v1319 = vpack.c.bf16 %v1278, %v1277
        %v1320 = vpack.c.bf16 %v1169, %v1167
        %v1321 = vpack.c.bf16 %v1248, %v1247
        %v1322 = vpack.c.bf16 %v1280, %v1279
        %v1323 = vpack.c.bf16 %v1173, %v1171
        %v1324 = vpack.c.bf16 %v1250, %v1249
        %v1325 = vpack.c.bf16 %v1282, %v1281
        %v1326 = vpack.c.bf16 %v1177, %v1175
        %v1327 = vpack.c.bf16 %v1252, %v1251
        %v1328 = vpack.c.bf16 %v1284, %v1283
        %v1329 = vpack.c.bf16 %v1181, %v1179
        %v1330 = vpack.c.bf16 %v1254, %v1253
        %v1331 = vpack.c.bf16 %v1286, %v1285
        %v1332 = vpack.c.bf16 %v1185, %v1183
        %v1333 = vpack.c.bf16 %v1256, %v1255
        %v1334 = vpack.c.bf16 %v1288, %v1287
        %v1335 = vpack.c.bf16 %v1189, %v1187
        %v1336 = vpack.c.bf16 %v1258, %v1257
        %v1337 = vpack.c.bf16 %v1290, %v1289
        %v1338 = vpack.c.bf16 %v1193, %v1191
        %v1339 = vld [vmem:[%s1] sm:$0xf]
        %v1340 = vld [vmem:[%s1 + $0x4] sm:$0xf]
        %v1341 = vld [vmem:[%s1 + $0x8] sm:$0xf]
        %v1342 = vld [vmem:[%s1 + $0xc] sm:$0xf]
        %v1343 = vld [vmem:[%s1 + $0x10] sm:$0xf]
        %v1344 = vld [vmem:[%s1 + $0x14] sm:$0xf]
        %v1345 = vld [vmem:[%s1 + $0x18] sm:$0xf]
        %v1346 = vld [vmem:[%s1 + $0x1c] sm:$0xf]
        %v1347 = vld [vmem:[%s1 + $0x20] sm:$0xf]
        %v1348 = vld [vmem:[%s1 + $0x24] sm:$0xf]
        %v1349 = vld [vmem:[%s1 + $0x28] sm:$0xf]
        %v1350 = vld [vmem:[%s1 + $0x2c] sm:$0xf]
        %v1351 = vld [vmem:[%s1 + $0x30] sm:$0xf]
        %v1352 = vld [vmem:[%s1 + $0x34] sm:$0xf]
        %v1353 = vld [vmem:[%s1 + $0x38] sm:$0xf]
        %v1354 = vld [vmem:[%s1 + $0x3c] sm:$0xf]
        %v1355 = vld [vmem:[%s1 + $0x40] sm:$0xf]
        %v1356 = vld [vmem:[%s1 + $0x44] sm:$0xf]
        %v1357 = vld [vmem:[%s1 + $0x48] sm:$0xf]
        %v1358 = vld [vmem:[%s1 + $0x4c] sm:$0xf]
        %v1359 = vld [vmem:[%s1 + $0x50] sm:$0xf]
        %v1360 = vld [vmem:[%s1 + $0x54] sm:$0xf]
        %v1361 = vld [vmem:[%s1 + $0x58] sm:$0xf]
        %v1362 = vld [vmem:[%s1 + $0x5c] sm:$0xf]
        %v1363 = vld [vmem:[%s1 + $0x60] sm:$0xf]
        %v1364 = vld [vmem:[%s1 + $0x64] sm:$0xf]
        %v1365 = vld [vmem:[%s1 + $0x68] sm:$0xf]
        %v1366 = vld [vmem:[%s1 + $0x6c] sm:$0xf]
        %v1367 = vld [vmem:[%s1 + $0x70] sm:$0xf]
        %v1368 = vld [vmem:[%s1 + $0x74] sm:$0xf]
        %v1369 = vld [vmem:[%s1 + $0x78] sm:$0xf]
        %v1370 = vld [vmem:[%s1 + $0x7c] sm:$0xf]
        %v1371 = vld [vmem:[%s1 + $0x80] sm:$0xf]
        %v1372 = vld [vmem:[%s1 + $0x84] sm:$0xf]
        %v1373 = vld [vmem:[%s1 + $0x88] sm:$0xf]
        %v1374 = vld [vmem:[%s1 + $0x8c] sm:$0xf]
        %v1375 = vld [vmem:[%s2] sm:$0x1]
        %v1377 = vperm.slane %v1375, 0
        %v1415 = vunpack.c.l.b16 %v1339
        %v1416 = vunpack.c.l.b16 %v1340
        %v1417 = vunpack.c.l.b16 %v1341
        %v1418 = vunpack.c.l.b16 %v1342
        %v1419 = vunpack.c.l.b16 %v1343
        %v1420 = vunpack.c.l.b16 %v1344
        %v1421 = vunpack.c.l.b16 %v1345
        %v1422 = vunpack.c.l.b16 %v1346
        %v1423 = vunpack.c.l.b16 %v1347
        %v1424 = vunpack.c.l.b16 %v1348
        %v1425 = vunpack.c.l.b16 %v1349
        %v1426 = vunpack.c.l.b16 %v1350
        %v1427 = vunpack.c.l.b16 %v1351
        %v1428 = vunpack.c.l.b16 %v1352
        %v1429 = vunpack.c.l.b16 %v1353
        %v1430 = vunpack.c.l.b16 %v1354
        %v1431 = vunpack.c.l.b16 %v1355
        %v1432 = vunpack.c.l.b16 %v1356
        %v1433 = vunpack.c.l.b16 %v1357
        %v1434 = vunpack.c.l.b16 %v1358
        %v1435 = vunpack.c.l.b16 %v1359
        %v1436 = vunpack.c.l.b16 %v1360
        %v1437 = vunpack.c.l.b16 %v1361
        %v1438 = vunpack.c.l.b16 %v1362
        %v1439 = vunpack.c.l.b16 %v1363
        %v1440 = vunpack.c.l.b16 %v1364
        %v1441 = vunpack.c.l.b16 %v1365
        %v1442 = vunpack.c.l.b16 %v1366
        %v1443 = vunpack.c.l.b16 %v1367
        %v1444 = vunpack.c.l.b16 %v1368
        %v1445 = vunpack.c.l.b16 %v1369
        %v1446 = vunpack.c.l.b16 %v1370
        %v1447 = vunpack.c.l.b16 %v1371
        %v1448 = vunpack.c.l.b16 %v1372
        %v1449 = vunpack.c.l.b16 %v1373
        %v1450 = vunpack.c.l.b16 %v1374
        %v1451 = vpack.c.b16 %v1416, %v1415
        %v1452 = vpack.c.b16 %v1418, %v1417
        %v1453 = vpack.c.b16 %v1420, %v1419
        %v1454 = vpack.c.b16 %v1422, %v1421
        %v1455 = vpack.c.b16 %v1424, %v1423
        %v1456 = vpack.c.b16 %v1426, %v1425
        %v1457 = vpack.c.b16 %v1428, %v1427
        %v1458 = vpack.c.b16 %v1430, %v1429
        %v1459 = vpack.c.b16 %v1432, %v1431
        %v1460 = vpack.c.b16 %v1434, %v1433
        %v1461 = vpack.c.b16 %v1436, %v1435
        %v1462 = vpack.c.b16 %v1438, %v1437
        %v1463 = vpack.c.b16 %v1440, %v1439
        %v1464 = vpack.c.b16 %v1442, %v1441
        %v1465 = vpack.c.b16 %v1444, %v1443
        %v1466 = vpack.c.b16 %v1446, %v1445
        %v1467 = vpack.c.b16 %v1448, %v1447
        %v1468 = vpack.c.b16 %v1450, %v1449
        %v1488 = vsel %vm332, %v1293, 0
        %v1491 = vsel %vm332, %v1296, 0
        %v1494 = vsel %vm332, %v1299, 0
        %v1497 = vsel %vm332, %v1302, 0
        %v1500 = vsel %vm332, %v1305, 0
        %v1503 = vsel %vm332, %v1308, 0
        %v1506 = vsel %vm332, %v1311, 0
        %v1509 = vsel %vm332, %v1314, 0
        %v1512 = vsel %vm332, %v1317, 0
        %v1515 = vsel %vm332, %v1320, 0
        %v1518 = vsel %vm332, %v1323, 0
        %v1521 = vsel %vm332, %v1326, 0
        %v1524 = vsel %vm332, %v1329, 0
        %v1527 = vsel %vm332, %v1332, 0
        %v1530 = vsel %vm332, %v1335, 0
        %v1533 = vsel %vm332, %v1338, 0
        %1535 = vmatpush.bf16.msra.mxu0 %v1458
        %1536 = vmatpush.bf16.msra.mxu0 %v1457
        %1537 = vmatpush.bf16.msra.mxu0 %v1456
        %1538 = vmatpush.bf16.msra.mxu0 %v1455
        %1539 = vmatpush.bf16.msra.mxu0 %v1454
        %1540 = vmatpush.bf16.msra.mxu0 %v1453
        %1541 = vmatpush.bf16.msra.mxu0 %v1452
        %1542 = vmatpush.bf16.msra.mxu0 %v1451
        %1543 = vmatmul.bf16.gmra.mxu0 %v1291
        %v1544 = vpop.f32.mrf.mxu0
        %v1545 = vadd.f32 %v1377, %v1544
        %v1546 = vpop.f32.mrf.mxu0
        %v1547 = vadd.f32 %v1377, %v1546
        %1548 = vmatmul.bf16.gmra.mxu0 %v1294
        %v1549 = vpop.f32.mrf.mxu0
        %v1550 = vadd.f32 %v1377, %v1549
        %v1551 = vpop.f32.mrf.mxu0
        %v1552 = vadd.f32 %v1377, %v1551
        %1553 = vmatmul.bf16.gmra.mxu0 %v1297
        %v1554 = vpop.f32.mrf.mxu0
        %v1555 = vadd.f32 %v1377, %v1554
        %v1556 = vpop.f32.mrf.mxu0
        %v1557 = vadd.f32 %v1377, %v1556
        %1558 = vmatmul.bf16.gmra.mxu0 %v1300
        %v1559 = vpop.f32.mrf.mxu0
        %v1560 = vadd.f32 %v1377, %v1559
        %v1561 = vpop.f32.mrf.mxu0
        %v1562 = vadd.f32 %v1377, %v1561
        %1563 = vmatmul.bf16.gmra.mxu0 %v1303
        %v1564 = vpop.f32.mrf.mxu0
        %v1565 = vadd.f32 %v1377, %v1564
        %v1566 = vpop.f32.mrf.mxu0
        %v1567 = vadd.f32 %v1377, %v1566
        %1568 = vmatmul.bf16.gmra.mxu0 %v1306
        %v1569 = vpop.f32.mrf.mxu0
        %v1570 = vadd.f32 %v1377, %v1569
        %v1571 = vpop.f32.mrf.mxu0
        %v1572 = vadd.f32 %v1377, %v1571
        %1573 = vmatmul.bf16.gmra.mxu0 %v1309
        %v1574 = vpop.f32.mrf.mxu0
        %v1575 = vadd.f32 %v1377, %v1574
        %v1576 = vpop.f32.mrf.mxu0
        %v1577 = vadd.f32 %v1377, %v1576
        %1578 = vmatmul.bf16.gmra.mxu0 %v1312
        %v1579 = vpop.f32.mrf.mxu0
        %v1580 = vadd.f32 %v1377, %v1579
        %v1581 = vpop.f32.mrf.mxu0
        %v1582 = vadd.f32 %v1377, %v1581
        %1583 = vmatmul.bf16.gmra.mxu0 %v1315
        %v1584 = vpop.f32.mrf.mxu0
        %v1585 = vadd.f32 %v1377, %v1584
        %v1586 = vpop.f32.mrf.mxu0
        %v1587 = vadd.f32 %v1377, %v1586
        %1588 = vmatmul.bf16.gmra.mxu0 %v1318
        %v1589 = vpop.f32.mrf.mxu0
        %v1590 = vadd.f32 %v1377, %v1589
        %v1591 = vpop.f32.mrf.mxu0
        %v1592 = vadd.f32 %v1377, %v1591
        %1593 = vmatmul.bf16.gmra.mxu0 %v1321
        %v1594 = vpop.f32.mrf.mxu0
        %v1595 = vadd.f32 %v1377, %v1594
        %v1596 = vpop.f32.mrf.mxu0
        %v1597 = vadd.f32 %v1377, %v1596
        %1598 = vmatmul.bf16.gmra.mxu0 %v1324
        %v1599 = vpop.f32.mrf.mxu0
        %v1600 = vadd.f32 %v1377, %v1599
        %v1601 = vpop.f32.mrf.mxu0
        %v1602 = vadd.f32 %v1377, %v1601
        %1603 = vmatmul.bf16.gmra.mxu0 %v1327
        %v1604 = vpop.f32.mrf.mxu0
        %v1605 = vadd.f32 %v1377, %v1604
        %v1606 = vpop.f32.mrf.mxu0
        %v1607 = vadd.f32 %v1377, %v1606
        %1608 = vmatmul.bf16.gmra.mxu0 %v1330
        %v1609 = vpop.f32.mrf.mxu0
        %v1610 = vadd.f32 %v1377, %v1609
        %v1611 = vpop.f32.mrf.mxu0
        %v1612 = vadd.f32 %v1377, %v1611
        %1613 = vmatmul.bf16.gmra.mxu0 %v1333
        %v1614 = vpop.f32.mrf.mxu0
        %v1615 = vadd.f32 %v1377, %v1614
        %v1616 = vpop.f32.mrf.mxu0
        %v1617 = vadd.f32 %v1377, %v1616
        %1618 = vmatmul.bf16.gmra.mxu0 %v1336
        %v1619 = vpop.f32.mrf.mxu0
        %v1620 = vadd.f32 %v1377, %v1619
        %v1621 = vpop.f32.mrf.mxu0
        %v1622 = vadd.f32 %v1377, %v1621
        %1623 = vdwg.mxu0
        %1624 = vmatpush.bf16.msra.mxu0 %v1466
        %1625 = vmatpush.bf16.msra.mxu0 %v1465
        %1626 = vmatpush.bf16.msra.mxu0 %v1464
        %1627 = vmatpush.bf16.msra.mxu0 %v1463
        %1628 = vmatpush.bf16.msra.mxu0 %v1462
        %1629 = vmatpush.bf16.msra.mxu0 %v1461
        %1630 = vmatpush.bf16.msra.mxu0 %v1460
        %1631 = vmatpush.bf16.msra.mxu0 %v1459
        %1632 = vmatmul.bf16.gmra.mxu0 %v1292
        %v1633 = vpop.f32.mrf.mxu0
        %v1634 = vadd.f32 %v1545, %v1633
        %v1635 = vpop.f32.mrf.mxu0
        %v1636 = vadd.f32 %v1547, %v1635
        %1637 = vmatmul.bf16.gmra.mxu0 %v1295
        %v1638 = vpop.f32.mrf.mxu0
        %v1639 = vadd.f32 %v1550, %v1638
        %v1640 = vpop.f32.mrf.mxu0
        %v1641 = vadd.f32 %v1552, %v1640
        %1642 = vmatmul.bf16.gmra.mxu0 %v1298
        %v1643 = vpop.f32.mrf.mxu0
        %v1644 = vadd.f32 %v1555, %v1643
        %v1645 = vpop.f32.mrf.mxu0
        %v1646 = vadd.f32 %v1557, %v1645
        %1647 = vmatmul.bf16.gmra.mxu0 %v1301
        %v1648 = vpop.f32.mrf.mxu0
        %v1649 = vadd.f32 %v1560, %v1648
        %v1650 = vpop.f32.mrf.mxu0
        %v1651 = vadd.f32 %v1562, %v1650
        %1652 = vmatmul.bf16.gmra.mxu0 %v1304
        %v1653 = vpop.f32.mrf.mxu0
        %v1654 = vadd.f32 %v1565, %v1653
        %v1655 = vpop.f32.mrf.mxu0
        %v1656 = vadd.f32 %v1567, %v1655
        %1657 = vmatmul.bf16.gmra.mxu0 %v1307
        %v1658 = vpop.f32.mrf.mxu0
        %v1659 = vadd.f32 %v1570, %v1658
        %v1660 = vpop.f32.mrf.mxu0
        %v1661 = vadd.f32 %v1572, %v1660
        %1662 = vmatmul.bf16.gmra.mxu0 %v1310
        %v1663 = vpop.f32.mrf.mxu0
        %v1664 = vadd.f32 %v1575, %v1663
        %v1665 = vpop.f32.mrf.mxu0
        %v1666 = vadd.f32 %v1577, %v1665
        %1667 = vmatmul.bf16.gmra.mxu0 %v1313
        %v1668 = vpop.f32.mrf.mxu0
        %v1669 = vadd.f32 %v1580, %v1668
        %v1670 = vpop.f32.mrf.mxu0
        %v1671 = vadd.f32 %v1582, %v1670
        %1672 = vmatmul.bf16.gmra.mxu0 %v1316
        %v1673 = vpop.f32.mrf.mxu0
        %v1674 = vadd.f32 %v1585, %v1673
        %v1675 = vpop.f32.mrf.mxu0
        %v1676 = vadd.f32 %v1587, %v1675
        %1677 = vmatmul.bf16.gmra.mxu0 %v1319
        %v1678 = vpop.f32.mrf.mxu0
        %v1679 = vadd.f32 %v1590, %v1678
        %v1680 = vpop.f32.mrf.mxu0
        %v1681 = vadd.f32 %v1592, %v1680
        %1682 = vmatmul.bf16.gmra.mxu0 %v1322
        %v1683 = vpop.f32.mrf.mxu0
        %v1684 = vadd.f32 %v1595, %v1683
        %v1685 = vpop.f32.mrf.mxu0
        %v1686 = vadd.f32 %v1597, %v1685
        %1687 = vmatmul.bf16.gmra.mxu0 %v1325
        %v1688 = vpop.f32.mrf.mxu0
        %v1689 = vadd.f32 %v1600, %v1688
        %v1690 = vpop.f32.mrf.mxu0
        %v1691 = vadd.f32 %v1602, %v1690
        %1692 = vmatmul.bf16.gmra.mxu0 %v1328
        %v1693 = vpop.f32.mrf.mxu0
        %v1694 = vadd.f32 %v1605, %v1693
        %v1695 = vpop.f32.mrf.mxu0
        %v1696 = vadd.f32 %v1607, %v1695
        %1697 = vmatmul.bf16.gmra.mxu0 %v1331
        %v1698 = vpop.f32.mrf.mxu0
        %v1699 = vadd.f32 %v1610, %v1698
        %v1700 = vpop.f32.mrf.mxu0
        %v1701 = vadd.f32 %v1612, %v1700
        %1702 = vmatmul.bf16.gmra.mxu0 %v1334
        %v1703 = vpop.f32.mrf.mxu0
        %v1704 = vadd.f32 %v1615, %v1703
        %v1705 = vpop.f32.mrf.mxu0
        %v1706 = vadd.f32 %v1617, %v1705
        %1707 = vmatmul.bf16.gmra.mxu0 %v1337
        %v1708 = vpop.f32.mrf.mxu0
        %v1709 = vadd.f32 %v1620, %v1708
        %v1710 = vpop.f32.mrf.mxu0
        %v1711 = vadd.f32 %v1622, %v1710
        %1712 = vdwg.mxu0
        %1713 = vmatpush.bf16.msra.mxu0 0
        %1714 = vmatpush.bf16.msra.mxu0 0
        %1715 = vmatpush.bf16.msra.mxu0 0
        %1716 = vmatpush.bf16.msra.mxu0 0
        %1717 = vmatpush.bf16.msra.mxu0 0
        %1718 = vmatpush.bf16.msra.mxu0 0
        %1719 = vmatpush.bf16.msra.mxu0 %v1468
        %1720 = vmatpush.bf16.msra.mxu0 %v1467
        %1721 = vmatmul.bf16.gmra.mxu0 %v1488
        %v1722 = vpop.f32.mrf.mxu0
        %v1723 = vadd.f32 %v1634, %v1722
        %v1724 = vpop.f32.mrf.mxu0
        %v1725 = vadd.f32 %v1636, %v1724
        %1726 = vmatmul.bf16.gmra.mxu0 %v1491
        %v1727 = vpop.f32.mrf.mxu0
        %v1728 = vadd.f32 %v1639, %v1727
        %v1729 = vpop.f32.mrf.mxu0
        %v1730 = vadd.f32 %v1641, %v1729
        %1731 = vmatmul.bf16.gmra.mxu0 %v1494
        %v1732 = vpop.f32.mrf.mxu0
        %v1733 = vadd.f32 %v1644, %v1732
        %v1734 = vpop.f32.mrf.mxu0
        %v1735 = vadd.f32 %v1646, %v1734
        %1736 = vmatmul.bf16.gmra.mxu0 %v1497
        %v1737 = vpop.f32.mrf.mxu0
        %v1738 = vadd.f32 %v1649, %v1737
        %v1739 = vpop.f32.mrf.mxu0
        %v1740 = vadd.f32 %v1651, %v1739
        %1741 = vmatmul.bf16.gmra.mxu0 %v1500
        %v1742 = vpop.f32.mrf.mxu0
        %v1743 = vadd.f32 %v1654, %v1742
        %v1744 = vpop.f32.mrf.mxu0
        %v1745 = vadd.f32 %v1656, %v1744
        %1746 = vmatmul.bf16.gmra.mxu0 %v1503
        %v1747 = vpop.f32.mrf.mxu0
        %v1748 = vadd.f32 %v1659, %v1747
        %v1749 = vpop.f32.mrf.mxu0
        %v1750 = vadd.f32 %v1661, %v1749
        %1751 = vmatmul.bf16.gmra.mxu0 %v1506
        %v1752 = vpop.f32.mrf.mxu0
        %v1753 = vadd.f32 %v1664, %v1752
        %v1754 = vpop.f32.mrf.mxu0
        %v1755 = vadd.f32 %v1666, %v1754
        %1756 = vmatmul.bf16.gmra.mxu0 %v1509
        %v1757 = vpop.f32.mrf.mxu0
        %v1758 = vadd.f32 %v1669, %v1757
        %v1759 = vpop.f32.mrf.mxu0
        %v1760 = vadd.f32 %v1671, %v1759
        %1761 = vmatmul.bf16.gmra.mxu0 %v1512
        %v1762 = vpop.f32.mrf.mxu0
        %v1763 = vadd.f32 %v1674, %v1762
        %v1764 = vpop.f32.mrf.mxu0
        %v1765 = vadd.f32 %v1676, %v1764
        %1766 = vmatmul.bf16.gmra.mxu0 %v1515
        %v1767 = vpop.f32.mrf.mxu0
        %v1768 = vadd.f32 %v1679, %v1767
        %v1769 = vpop.f32.mrf.mxu0
        %v1770 = vadd.f32 %v1681, %v1769
        %1771 = vmatmul.bf16.gmra.mxu0 %v1518
        %v1772 = vpop.f32.mrf.mxu0
        %v1773 = vadd.f32 %v1684, %v1772
        %v1774 = vpop.f32.mrf.mxu0
        %v1775 = vadd.f32 %v1686, %v1774
        %1776 = vmatmul.bf16.gmra.mxu0 %v1521
        %v1777 = vpop.f32.mrf.mxu0
        %v1778 = vadd.f32 %v1689, %v1777
        %v1779 = vpop.f32.mrf.mxu0
        %v1780 = vadd.f32 %v1691, %v1779
        %1781 = vmatmul.bf16.gmra.mxu0 %v1524
        %v1782 = vpop.f32.mrf.mxu0
        %v1783 = vadd.f32 %v1694, %v1782
        %v1784 = vpop.f32.mrf.mxu0
        %v1785 = vadd.f32 %v1696, %v1784
        %1786 = vmatmul.bf16.gmra.mxu0 %v1527
        %v1787 = vpop.f32.mrf.mxu0
        %v1788 = vadd.f32 %v1699, %v1787
        %v1789 = vpop.f32.mrf.mxu0
        %v1790 = vadd.f32 %v1701, %v1789
        %1791 = vmatmul.bf16.gmra.mxu0 %v1530
        %v1792 = vpop.f32.mrf.mxu0
        %v1793 = vadd.f32 %v1704, %v1792
        %v1794 = vpop.f32.mrf.mxu0
        %v1795 = vadd.f32 %v1706, %v1794
        %1796 = vmatmul.bf16.gmra.mxu0 %v1533
        %v1797 = vpop.f32.mrf.mxu0
        %v1798 = vadd.f32 %v1709, %v1797
        %v1799 = vpop.f32.mrf.mxu0
        %v1800 = vadd.f32 %v1711, %v1799
        %1801 = vdwg.mxu0
        %vm1802 = vcmp.ge.f32.partialorder %v1723, 0.0
        %vm1803 = vcmp.ge.f32.partialorder %v1725, 0.0
        %vm1804 = vcmp.ge.f32.partialorder %v1728, 0.0
        %vm1805 = vcmp.ge.f32.partialorder %v1730, 0.0
        %vm1806 = vcmp.ge.f32.partialorder %v1733, 0.0
        %vm1807 = vcmp.ge.f32.partialorder %v1735, 0.0
        %vm1808 = vcmp.ge.f32.partialorder %v1738, 0.0
        %vm1809 = vcmp.ge.f32.partialorder %v1740, 0.0
        %vm1810 = vcmp.ge.f32.partialorder %v1743, 0.0
        %vm1811 = vcmp.ge.f32.partialorder %v1745, 0.0
        %vm1812 = vcmp.ge.f32.partialorder %v1748, 0.0
        %vm1813 = vcmp.ge.f32.partialorder %v1750, 0.0
        %vm1814 = vcmp.ge.f32.partialorder %v1753, 0.0
        %vm1815 = vcmp.ge.f32.partialorder %v1755, 0.0
        %vm1816 = vcmp.ge.f32.partialorder %v1758, 0.0
        %vm1817 = vcmp.ge.f32.partialorder %v1760, 0.0
        %vm1818 = vcmp.ge.f32.partialorder %v1763, 0.0
        %vm1819 = vcmp.ge.f32.partialorder %v1765, 0.0
        %vm1820 = vcmp.ge.f32.partialorder %v1768, 0.0
        %vm1821 = vcmp.ge.f32.partialorder %v1770, 0.0
        %vm1822 = vcmp.ge.f32.partialorder %v1773, 0.0
        %vm1823 = vcmp.ge.f32.partialorder %v1775, 0.0
        %vm1824 = vcmp.ge.f32.partialorder %v1778, 0.0
        %vm1825 = vcmp.ge.f32.partialorder %v1780, 0.0
        %vm1826 = vcmp.ge.f32.partialorder %v1783, 0.0
        %vm1827 = vcmp.ge.f32.partialorder %v1785, 0.0
        %vm1828 = vcmp.ge.f32.partialorder %v1788, 0.0
        %vm1829 = vcmp.ge.f32.partialorder %v1790, 0.0
        %vm1830 = vcmp.ge.f32.partialorder %v1793, 0.0
        %vm1831 = vcmp.ge.f32.partialorder %v1795, 0.0
        %vm1832 = vcmp.ge.f32.partialorder %v1798, 0.0
        %vm1833 = vcmp.ge.f32.partialorder %v1800, 0.0
        %v1834 = vmul.f32 %v1723, 0.1
        %v1835 = vmul.f32 %v1725, 0.1
        %v1836 = vmul.f32 %v1728, 0.1
        %v1837 = vmul.f32 %v1730, 0.1
        %v1838 = vmul.f32 %v1733, 0.1
        %v1839 = vmul.f32 %v1735, 0.1
        %v1840 = vmul.f32 %v1738, 0.1
        %v1841 = vmul.f32 %v1740, 0.1
        %v1842 = vmul.f32 %v1743, 0.1
        %v1843 = vmul.f32 %v1745, 0.1
        %v1844 = vmul.f32 %v1748, 0.1
        %v1845 = vmul.f32 %v1750, 0.1
        %v1846 = vmul.f32 %v1753, 0.1
        %v1847 = vmul.f32 %v1755, 0.1
        %v1848 = vmul.f32 %v1758, 0.1
        %v1849 = vmul.f32 %v1760, 0.1
        %v1850 = vmul.f32 %v1763, 0.1
        %v1851 = vmul.f32 %v1765, 0.1
        %v1852 = vmul.f32 %v1768, 0.1
        %v1853 = vmul.f32 %v1770, 0.1
        %v1854 = vmul.f32 %v1773, 0.1
        %v1855 = vmul.f32 %v1775, 0.1
        %v1856 = vmul.f32 %v1778, 0.1
        %v1857 = vmul.f32 %v1780, 0.1
        %v1858 = vmul.f32 %v1783, 0.1
        %v1859 = vmul.f32 %v1785, 0.1
        %v1860 = vmul.f32 %v1788, 0.1
        %v1861 = vmul.f32 %v1790, 0.1
        %v1862 = vmul.f32 %v1793, 0.1
        %v1863 = vmul.f32 %v1795, 0.1
        %v1864 = vmul.f32 %v1798, 0.1
        %v1865 = vmul.f32 %v1800, 0.1
        %v1866 = vsel %vm1802, %v1723, %v1834
        %v1867 = vsel %vm1803, %v1725, %v1835
        %v1868 = vsel %vm1804, %v1728, %v1836
        %v1869 = vsel %vm1805, %v1730, %v1837
        %v1870 = vsel %vm1806, %v1733, %v1838
        %v1871 = vsel %vm1807, %v1735, %v1839
        %v1872 = vsel %vm1808, %v1738, %v1840
        %v1873 = vsel %vm1809, %v1740, %v1841
        %v1874 = vsel %vm1810, %v1743, %v1842
        %v1875 = vsel %vm1811, %v1745, %v1843
        %v1876 = vsel %vm1812, %v1748, %v1844
        %v1877 = vsel %vm1813, %v1750, %v1845
        %v1878 = vsel %vm1814, %v1753, %v1846
        %v1879 = vsel %vm1815, %v1755, %v1847
        %v1880 = vsel %vm1816, %v1758, %v1848
        %v1881 = vsel %vm1817, %v1760, %v1849
        %v1882 = vsel %vm1818, %v1763, %v1850
        %v1883 = vsel %vm1819, %v1765, %v1851
        %v1884 = vsel %vm1820, %v1768, %v1852
        %v1885 = vsel %vm1821, %v1770, %v1853
        %v1886 = vsel %vm1822, %v1773, %v1854
        %v1887 = vsel %vm1823, %v1775, %v1855
        %v1888 = vsel %vm1824, %v1778, %v1856
        %v1889 = vsel %vm1825, %v1780, %v1857
        %v1890 = vsel %vm1826, %v1783, %v1858
        %v1891 = vsel %vm1827, %v1785, %v1859
        %v1892 = vsel %vm1828, %v1788, %v1860
        %v1893 = vsel %vm1829, %v1790, %v1861
        %v1894 = vsel %vm1830, %v1793, %v1862
        %v1895 = vsel %vm1831, %v1795, %v1863
        %v1896 = vsel %vm1832, %v1798, %v1864
        %v1897 = vsel %vm1833, %v1800, %v1865
        %1898 = vst.msk [vmem:[%s388 + $0x1] sm:$0xff] %vm332, %v1866
        %1899 = vst.msk [vmem:[%s388 + $0x9] sm:$0xff] %vm332, %v1867
        %1900 = vst.msk [vmem:[%s388 + $0x19] sm:$0xff] %vm332, %v1868
        %1901 = vst.msk [vmem:[%s388 + $0x21] sm:$0xff] %vm332, %v1869
        %1902 = vst.msk [vmem:[%s388 + $0x31] sm:$0xff] %vm332, %v1870
        %1903 = vst.msk [vmem:[%s388 + $0x39] sm:$0xff] %vm332, %v1871
        %1904 = vst.msk [vmem:[%s388 + $0x49] sm:$0xff] %vm332, %v1872
        %1905 = vst.msk [vmem:[%s388 + $0x51] sm:$0xff] %vm332, %v1873
        %1906 = vst.msk [vmem:[%s388 + $0x61] sm:$0xff] %vm332, %v1874
        %1907 = vst.msk [vmem:[%s388 + $0x69] sm:$0xff] %vm332, %v1875
        %1908 = vst.msk [vmem:[%s388 + $0x79] sm:$0xff] %vm332, %v1876
        %1909 = vst.msk [vmem:[%s388 + $0x81] sm:$0xff] %vm332, %v1877
        %1910 = vst.msk [vmem:[%s388 + $0x91] sm:$0xff] %vm332, %v1878
        %1911 = vst.msk [vmem:[%s388 + $0x99] sm:$0xff] %vm332, %v1879
        %1912 = vst.msk [vmem:[%s388 + $0xa9] sm:$0xff] %vm332, %v1880
        %1913 = vst.msk [vmem:[%s388 + $0xb1] sm:$0xff] %vm332, %v1881
        %1914 = vst.msk [vmem:[%s388 + $0xc1] sm:$0xff] %vm332, %v1882
        %1915 = vst.msk [vmem:[%s388 + $0xc9] sm:$0xff] %vm332, %v1883
        %1916 = vst.msk [vmem:[%s388 + $0xd9] sm:$0xff] %vm332, %v1884
        %1917 = vst.msk [vmem:[%s388 + $0xe1] sm:$0xff] %vm332, %v1885
        %1918 = vst.msk [vmem:[%s388 + $0xf1] sm:$0xff] %vm332, %v1886
        %1919 = vst.msk [vmem:[%s388 + $0xf9] sm:$0xff] %vm332, %v1887
        %1920 = vst.msk [vmem:[%s388 + $0x109] sm:$0xff] %vm332, %v1888
        %1921 = vst.msk [vmem:[%s388 + $0x111] sm:$0xff] %vm332, %v1889
        %1922 = vst.msk [vmem:[%s388 + $0x121] sm:$0xff] %vm332, %v1890
        %1923 = vst.msk [vmem:[%s388 + $0x129] sm:$0xff] %vm332, %v1891
        %1924 = vst.msk [vmem:[%s388 + $0x139] sm:$0xff] %vm332, %v1892
        %1925 = vst.msk [vmem:[%s388 + $0x141] sm:$0xff] %vm332, %v1893
        %1926 = vst.msk [vmem:[%s388 + $0x151] sm:$0xff] %vm332, %v1894
        %1927 = vst.msk [vmem:[%s388 + $0x159] sm:$0xff] %vm332, %v1895
        %1928 = vst.msk [vmem:[%s388 + $0x169] sm:$0xff] %vm332, %v1896
        %1929 = vst.msk [vmem:[%s388 + $0x171] sm:$0xff] %vm332, %v1897
        %v1930 = vld [vmem:[#allocation2] sm:$0xff]
        %v1931 = vld [vmem:[#allocation2 + $0x8] sm:$0xff]
        %v1932 = vld [vmem:[#allocation2 + $0x10] sm:$0x3]
        %v1933 = vld [vmem:[#allocation2 + $0x18] sm:$0xff]
        %v1934 = vld [vmem:[#allocation2 + $0x20] sm:$0xff]
        %v1935 = vld [vmem:[#allocation2 + $0x28] sm:$0x3]
        %v1936 = vld [vmem:[#allocation2 + $0x30] sm:$0xff]
        %v1937 = vld [vmem:[#allocation2 + $0x38] sm:$0xff]
        %v1938 = vld [vmem:[#allocation2 + $0x40] sm:$0x3]
        %v1939 = vld [vmem:[#allocation2 + $0x48] sm:$0xff]
        %v1940 = vld [vmem:[#allocation2 + $0x50] sm:$0xff]
        %v1941 = vld [vmem:[#allocation2 + $0x58] sm:$0x3]
        %v1942 = vld [vmem:[#allocation2 + $0x60] sm:$0xff]
        %v1943 = vld [vmem:[#allocation2 + $0x68] sm:$0xff]
        %v1944 = vld [vmem:[#allocation2 + $0x70] sm:$0x3]
        %v1945 = vld [vmem:[#allocation2 + $0x78] sm:$0xff]
        %v1946 = vld [vmem:[#allocation2 + $0x80] sm:$0xff]
        %v1947 = vld [vmem:[#allocation2 + $0x88] sm:$0x3]
        %v1948 = vld [vmem:[#allocation2 + $0x90] sm:$0xff]
        %v1949 = vld [vmem:[#allocation2 + $0x98] sm:$0xff]
        %v1950 = vld [vmem:[#allocation2 + $0xa0] sm:$0x3]
        %v1951 = vld [vmem:[#allocation2 + $0xa8] sm:$0xff]
        %v1952 = vld [vmem:[#allocation2 + $0xb0] sm:$0xff]
        %v1953 = vld [vmem:[#allocation2 + $0xb8] sm:$0x3]
        %v1954 = vld [vmem:[#allocation2 + $0xc0] sm:$0xff]
        %v1955 = vld [vmem:[#allocation2 + $0xc8] sm:$0xff]
        %v1956 = vld [vmem:[#allocation2 + $0xd0] sm:$0x3]
        %v1957 = vld [vmem:[#allocation2 + $0xd8] sm:$0xff]
        %v1958 = vld [vmem:[#allocation2 + $0xe0] sm:$0xff]
        %v1959 = vld [vmem:[#allocation2 + $0xe8] sm:$0x3]
        %v1960 = vld [vmem:[#allocation2 + $0xf0] sm:$0xff]
        %v1961 = vld [vmem:[#allocation2 + $0xf8] sm:$0xff]
        %v1962 = vld [vmem:[#allocation2 + $0x100] sm:$0x3]
        %v1963 = vld [vmem:[#allocation2 + $0x108] sm:$0xff]
        %v1964 = vld [vmem:[#allocation2 + $0x110] sm:$0xff]
        %v1965 = vld [vmem:[#allocation2 + $0x118] sm:$0x3]
        %v1966 = vld [vmem:[#allocation2 + $0x120] sm:$0xff]
        %v1967 = vld [vmem:[#allocation2 + $0x128] sm:$0xff]
        %v1968 = vld [vmem:[#allocation2 + $0x130] sm:$0x3]
        %v1969 = vld [vmem:[#allocation2 + $0x138] sm:$0xff]
        %v1970 = vld [vmem:[#allocation2 + $0x140] sm:$0xff]
        %v1971 = vld [vmem:[#allocation2 + $0x148] sm:$0x3]
        %v1972 = vld [vmem:[#allocation2 + $0x150] sm:$0xff]
        %v1973 = vld [vmem:[#allocation2 + $0x158] sm:$0xff]
        %v1974 = vld [vmem:[#allocation2 + $0x160] sm:$0x3]
        %v1975 = vld [vmem:[#allocation2 + $0x168] sm:$0xff]
        %v1976 = vld [vmem:[#allocation2 + $0x170] sm:$0xff]
        %v1977 = vld [vmem:[#allocation2 + $0x178] sm:$0x3]
        %v1978 = vld [vmem:[#allocation2 + $0x180] sm:$0xff]
        %v1979 = vld [vmem:[#allocation2 + $0x188] sm:$0xff]
        %v1980 = vld [vmem:[#allocation2 + $0x190] sm:$0x3]
        %v1981 = vld [vmem:[#allocation2 + $0x198] sm:$0xff]
        %v1982 = vld [vmem:[#allocation2 + $0x1a0] sm:$0xff]
        %v1983 = vld [vmem:[#allocation2 + $0x1a8] sm:$0x3]
        %v2038 = vrot.slane %v1930, 1
        %v2039 = vrot.slane %v1931, 1
        %v2040 = vsel %vm529, %v2038, %v2039
        %v2041 = vrot.slane %v1932, 1
        %v2042 = vsel %vm529, %v2039, %v2041
        %v2043 = vrot.slane %v1933, 1
        %v2044 = vrot.slane %v1934, 1
        %v2045 = vsel %vm529, %v2043, %v2044
        %v2046 = vrot.slane %v1935, 1
        %v2047 = vsel %vm529, %v2044, %v2046
        %v2048 = vrot.slane %v1936, 1
        %v2049 = vrot.slane %v1937, 1
        %v2050 = vsel %vm529, %v2048, %v2049
        %v2051 = vrot.slane %v1938, 1
        %v2052 = vsel %vm529, %v2049, %v2051
        %v2053 = vrot.slane %v1939, 1
        %v2054 = vrot.slane %v1940, 1
        %v2055 = vsel %vm529, %v2053, %v2054
        %v2056 = vrot.slane %v1941, 1
        %v2057 = vsel %vm529, %v2054, %v2056
        %v2058 = vrot.slane %v1942, 1
        %v2059 = vrot.slane %v1943, 1
        %v2060 = vsel %vm529, %v2058, %v2059
        %v2061 = vrot.slane %v1944, 1
        %v2062 = vsel %vm529, %v2059, %v2061
        %v2063 = vrot.slane %v1945, 1
        %v2064 = vrot.slane %v1946, 1
        %v2065 = vsel %vm529, %v2063, %v2064
        %v2066 = vrot.slane %v1947, 1
        %v2067 = vsel %vm529, %v2064, %v2066
        %v2068 = vrot.slane %v1948, 1
        %v2069 = vrot.slane %v1949, 1
        %v2070 = vsel %vm529, %v2068, %v2069
        %v2071 = vrot.slane %v1950, 1
        %v2072 = vsel %vm529, %v2069, %v2071
        %v2073 = vrot.slane %v1951, 1
        %v2074 = vrot.slane %v1952, 1
        %v2075 = vsel %vm529, %v2073, %v2074
        %v2076 = vrot.slane %v1953, 1
        %v2077 = vsel %vm529, %v2074, %v2076
        %v2078 = vrot.slane %v1954, 1
        %v2079 = vrot.slane %v1955, 1
        %v2080 = vsel %vm529, %v2078, %v2079
        %v2081 = vrot.slane %v1956, 1
        %v2082 = vsel %vm529, %v2079, %v2081
        %v2083 = vrot.slane %v1957, 1
        %v2084 = vrot.slane %v1958, 1
        %v2085 = vsel %vm529, %v2083, %v2084
        %v2086 = vrot.slane %v1959, 1
        %v2087 = vsel %vm529, %v2084, %v2086
        %v2088 = vrot.slane %v1960, 1
        %v2089 = vrot.slane %v1961, 1
        %v2090 = vsel %vm529, %v2088, %v2089
        %v2091 = vrot.slane %v1962, 1
        %v2092 = vsel %vm529, %v2089, %v2091
        %v2093 = vrot.slane %v1963, 1
        %v2094 = vrot.slane %v1964, 1
        %v2095 = vsel %vm529, %v2093, %v2094
        %v2096 = vrot.slane %v1965, 1
        %v2097 = vsel %vm529, %v2094, %v2096
        %v2098 = vrot.slane %v1966, 1
        %v2099 = vrot.slane %v1967, 1
        %v2100 = vsel %vm529, %v2098, %v2099
        %v2101 = vrot.slane %v1968, 1
        %v2102 = vsel %vm529, %v2099, %v2101
        %v2103 = vrot.slane %v1969, 1
        %v2104 = vrot.slane %v1970, 1
        %v2105 = vsel %vm529, %v2103, %v2104
        %v2106 = vrot.slane %v1971, 1
        %v2107 = vsel %vm529, %v2104, %v2106
        %v2108 = vrot.slane %v1972, 1
        %v2109 = vrot.slane %v1973, 1
        %v2110 = vsel %vm529, %v2108, %v2109
        %v2111 = vrot.slane %v1974, 1
        %v2112 = vsel %vm529, %v2109, %v2111
        %v2113 = vrot.slane %v1975, 1
        %v2114 = vrot.slane %v1976, 1
        %v2115 = vsel %vm529, %v2113, %v2114
        %v2116 = vrot.slane %v1977, 1
        %v2117 = vsel %vm529, %v2114, %v2116
        %v2118 = vrot.slane %v1978, 1
        %v2119 = vrot.slane %v1979, 1
        %v2120 = vsel %vm529, %v2118, %v2119
        %v2121 = vrot.slane %v1980, 1
        %v2122 = vsel %vm529, %v2119, %v2121
        %v2123 = vrot.slane %v1981, 1
        %v2124 = vrot.slane %v1982, 1
        %v2125 = vsel %vm529, %v2123, %v2124
        %v2126 = vrot.slane %v1983, 1
        %v2127 = vsel %vm529, %v2124, %v2126
        %2128 = vrot.lane.b32.xlu0 %v2040, 32
        %v2129 = vpop.permute.xlu0 %2128
        %2130 = vrot.lane.b32.xlu0 %v2042, 32
        %v2131 = vpop.permute.xlu0 %2130
        %2132 = vrot.lane.b32.xlu0 %v2045, 32
        %v2133 = vpop.permute.xlu0 %2132
        %2134 = vrot.lane.b32.xlu0 %v2047, 32
        %v2135 = vpop.permute.xlu0 %2134
        %2136 = vrot.lane.b32.xlu0 %v2050, 32
        %v2137 = vpop.permute.xlu0 %2136
        %2138 = vrot.lane.b32.xlu0 %v2052, 32
        %v2139 = vpop.permute.xlu0 %2138
        %2140 = vrot.lane.b32.xlu0 %v2055, 32
        %v2141 = vpop.permute.xlu0 %2140
        %2142 = vrot.lane.b32.xlu0 %v2057, 32
        %v2143 = vpop.permute.xlu0 %2142
        %2144 = vrot.lane.b32.xlu0 %v2060, 32
        %v2145 = vpop.permute.xlu0 %2144
        %2146 = vrot.lane.b32.xlu0 %v2062, 32
        %v2147 = vpop.permute.xlu0 %2146
        %2148 = vrot.lane.b32.xlu0 %v2065, 32
        %v2149 = vpop.permute.xlu0 %2148
        %2150 = vrot.lane.b32.xlu0 %v2067, 32
        %v2151 = vpop.permute.xlu0 %2150
        %2152 = vrot.lane.b32.xlu0 %v2070, 32
        %v2153 = vpop.permute.xlu0 %2152
        %2154 = vrot.lane.b32.xlu0 %v2072, 32
        %v2155 = vpop.permute.xlu0 %2154
        %2156 = vrot.lane.b32.xlu0 %v2075, 32
        %v2157 = vpop.permute.xlu0 %2156
        %2158 = vrot.lane.b32.xlu0 %v2077, 32
        %v2159 = vpop.permute.xlu0 %2158
        %2160 = vrot.lane.b32.xlu0 %v2080, 32
        %v2161 = vpop.permute.xlu0 %2160
        %2162 = vrot.lane.b32.xlu0 %v2082, 32
        %v2163 = vpop.permute.xlu0 %2162
        %2164 = vrot.lane.b32.xlu0 %v2085, 32
        %v2165 = vpop.permute.xlu0 %2164
        %2166 = vrot.lane.b32.xlu0 %v2087, 32
        %v2167 = vpop.permute.xlu0 %2166
        %2168 = vrot.lane.b32.xlu0 %v2090, 32
        %v2169 = vpop.permute.xlu0 %2168
        %2170 = vrot.lane.b32.xlu0 %v2092, 32
        %v2171 = vpop.permute.xlu0 %2170
        %2172 = vrot.lane.b32.xlu0 %v2095, 32
        %v2173 = vpop.permute.xlu0 %2172
        %2174 = vrot.lane.b32.xlu0 %v2097, 32
        %v2175 = vpop.permute.xlu0 %2174
        %2176 = vrot.lane.b32.xlu0 %v2100, 32
        %v2177 = vpop.permute.xlu0 %2176
        %2178 = vrot.lane.b32.xlu0 %v2102, 32
        %v2179 = vpop.permute.xlu0 %2178
        %2180 = vrot.lane.b32.xlu0 %v2105, 32
        %v2181 = vpop.permute.xlu0 %2180
        %2182 = vrot.lane.b32.xlu0 %v2107, 32
        %v2183 = vpop.permute.xlu0 %2182
        %2184 = vrot.lane.b32.xlu0 %v2110, 32
        %v2185 = vpop.permute.xlu0 %2184
        %2186 = vrot.lane.b32.xlu0 %v2112, 32
        %v2187 = vpop.permute.xlu0 %2186
        %2188 = vrot.lane.b32.xlu0 %v2115, 32
        %v2189 = vpop.permute.xlu0 %2188
        %2190 = vrot.lane.b32.xlu0 %v2117, 32
        %v2191 = vpop.permute.xlu0 %2190
        %2192 = vrot.lane.b32.xlu0 %v2120, 32
        %v2193 = vpop.permute.xlu0 %2192
        %2194 = vrot.lane.b32.xlu0 %v2122, 32
        %v2195 = vpop.permute.xlu0 %2194
        %2196 = vrot.lane.b32.xlu0 %v2125, 32
        %v2197 = vpop.permute.xlu0 %2196
        %2198 = vrot.lane.b32.xlu0 %v2127, 32
        %v2199 = vpop.permute.xlu0 %2198
        %v2236 = vrot.slane %v1930, 2
        %v2237 = vrot.slane %v1931, 2
        %v2238 = vsel %vm728, %v2236, %v2237
        %v2239 = vrot.slane %v1932, 2
        %v2240 = vsel %vm728, %v2237, %v2239
        %v2241 = vrot.slane %v1933, 2
        %v2242 = vrot.slane %v1934, 2
        %v2243 = vsel %vm728, %v2241, %v2242
        %v2244 = vrot.slane %v1935, 2
        %v2245 = vsel %vm728, %v2242, %v2244
        %v2246 = vrot.slane %v1936, 2
        %v2247 = vrot.slane %v1937, 2
        %v2248 = vsel %vm728, %v2246, %v2247
        %v2249 = vrot.slane %v1938, 2
        %v2250 = vsel %vm728, %v2247, %v2249
        %v2251 = vrot.slane %v1939, 2
        %v2252 = vrot.slane %v1940, 2
        %v2253 = vsel %vm728, %v2251, %v2252
        %v2254 = vrot.slane %v1941, 2
        %v2255 = vsel %vm728, %v2252, %v2254
        %v2256 = vrot.slane %v1942, 2
        %v2257 = vrot.slane %v1943, 2
        %v2258 = vsel %vm728, %v2256, %v2257
        %v2259 = vrot.slane %v1944, 2
        %v2260 = vsel %vm728, %v2257, %v2259
        %v2261 = vrot.slane %v1945, 2
        %v2262 = vrot.slane %v1946, 2
        %v2263 = vsel %vm728, %v2261, %v2262
        %v2264 = vrot.slane %v1947, 2
        %v2265 = vsel %vm728, %v2262, %v2264
        %v2266 = vrot.slane %v1948, 2
        %v2267 = vrot.slane %v1949, 2
        %v2268 = vsel %vm728, %v2266, %v2267
        %v2269 = vrot.slane %v1950, 2
        %v2270 = vsel %vm728, %v2267, %v2269
        %v2271 = vrot.slane %v1951, 2
        %v2272 = vrot.slane %v1952, 2
        %v2273 = vsel %vm728, %v2271, %v2272
        %v2274 = vrot.slane %v1953, 2
        %v2275 = vsel %vm728, %v2272, %v2274
        %v2276 = vrot.slane %v1954, 2
        %v2277 = vrot.slane %v1955, 2
        %v2278 = vsel %vm728, %v2276, %v2277
        %v2279 = vrot.slane %v1956, 2
        %v2280 = vsel %vm728, %v2277, %v2279
        %v2281 = vrot.slane %v1957, 2
        %v2282 = vrot.slane %v1958, 2
        %v2283 = vsel %vm728, %v2281, %v2282
        %v2284 = vrot.slane %v1959, 2
        %v2285 = vsel %vm728, %v2282, %v2284
        %v2286 = vrot.slane %v1960, 2
        %v2287 = vrot.slane %v1961, 2
        %v2288 = vsel %vm728, %v2286, %v2287
        %v2289 = vrot.slane %v1962, 2
        %v2290 = vsel %vm728, %v2287, %v2289
        %v2291 = vrot.slane %v1963, 2
        %v2292 = vrot.slane %v1964, 2
        %v2293 = vsel %vm728, %v2291, %v2292
        %v2294 = vrot.slane %v1965, 2
        %v2295 = vsel %vm728, %v2292, %v2294
        %v2296 = vrot.slane %v1966, 2
        %v2297 = vrot.slane %v1967, 2
        %v2298 = vsel %vm728, %v2296, %v2297
        %v2299 = vrot.slane %v1968, 2
        %v2300 = vsel %vm728, %v2297, %v2299
        %v2301 = vrot.slane %v1969, 2
        %v2302 = vrot.slane %v1970, 2
        %v2303 = vsel %vm728, %v2301, %v2302
        %v2304 = vrot.slane %v1971, 2
        %v2305 = vsel %vm728, %v2302, %v2304
        %v2306 = vrot.slane %v1972, 2
        %v2307 = vrot.slane %v1973, 2
        %v2308 = vsel %vm728, %v2306, %v2307
        %v2309 = vrot.slane %v1974, 2
        %v2310 = vsel %vm728, %v2307, %v2309
        %v2311 = vrot.slane %v1975, 2
        %v2312 = vrot.slane %v1976, 2
        %v2313 = vsel %vm728, %v2311, %v2312
        %v2314 = vrot.slane %v1977, 2
        %v2315 = vsel %vm728, %v2312, %v2314
        %v2316 = vrot.slane %v1978, 2
        %v2317 = vrot.slane %v1979, 2
        %v2318 = vsel %vm728, %v2316, %v2317
        %v2319 = vrot.slane %v1980, 2
        %v2320 = vsel %vm728, %v2317, %v2319
        %v2321 = vrot.slane %v1981, 2
        %v2322 = vrot.slane %v1982, 2
        %v2323 = vsel %vm728, %v2321, %v2322
        %v2324 = vrot.slane %v1983, 2
        %v2325 = vsel %vm728, %v2322, %v2324
        %2326 = vrot.lane.b32.xlu0 %v2238, 64
        %v2327 = vpop.permute.xlu0 %2326
        %2328 = vrot.lane.b32.xlu0 %v2240, 64
        %v2329 = vpop.permute.xlu0 %2328
        %2330 = vrot.lane.b32.xlu0 %v2243, 64
        %v2331 = vpop.permute.xlu0 %2330
        %2332 = vrot.lane.b32.xlu0 %v2245, 64
        %v2333 = vpop.permute.xlu0 %2332
        %2334 = vrot.lane.b32.xlu0 %v2248, 64
        %v2335 = vpop.permute.xlu0 %2334
        %2336 = vrot.lane.b32.xlu0 %v2250, 64
        %v2337 = vpop.permute.xlu0 %2336
        %2338 = vrot.lane.b32.xlu0 %v2253, 64
        %v2339 = vpop.permute.xlu0 %2338
        %2340 = vrot.lane.b32.xlu0 %v2255, 64
        %v2341 = vpop.permute.xlu0 %2340
        %2342 = vrot.lane.b32.xlu0 %v2258, 64
        %v2343 = vpop.permute.xlu0 %2342
        %2344 = vrot.lane.b32.xlu0 %v2260, 64
        %v2345 = vpop.permute.xlu0 %2344
        %2346 = vrot.lane.b32.xlu0 %v2263, 64
        %v2347 = vpop.permute.xlu0 %2346
        %2348 = vrot.lane.b32.xlu0 %v2265, 64
        %v2349 = vpop.permute.xlu0 %2348
        %2350 = vrot.lane.b32.xlu0 %v2268, 64
        %v2351 = vpop.permute.xlu0 %2350
        %2352 = vrot.lane.b32.xlu0 %v2270, 64
        %v2353 = vpop.permute.xlu0 %2352
        %2354 = vrot.lane.b32.xlu0 %v2273, 64
        %v2355 = vpop.permute.xlu0 %2354
        %2356 = vrot.lane.b32.xlu0 %v2275, 64
        %v2357 = vpop.permute.xlu0 %2356
        %2358 = vrot.lane.b32.xlu0 %v2278, 64
        %v2359 = vpop.permute.xlu0 %2358
        %2360 = vrot.lane.b32.xlu0 %v2280, 64
        %v2361 = vpop.permute.xlu0 %2360
        %2362 = vrot.lane.b32.xlu0 %v2283, 64
        %v2363 = vpop.permute.xlu0 %2362
        %2364 = vrot.lane.b32.xlu0 %v2285, 64
        %v2365 = vpop.permute.xlu0 %2364
        %2366 = vrot.lane.b32.xlu0 %v2288, 64
        %v2367 = vpop.permute.xlu0 %2366
        %2368 = vrot.lane.b32.xlu0 %v2290, 64
        %v2369 = vpop.permute.xlu0 %2368
        %2370 = vrot.lane.b32.xlu0 %v2293, 64
        %v2371 = vpop.permute.xlu0 %2370
        %2372 = vrot.lane.b32.xlu0 %v2295, 64
        %v2373 = vpop.permute.xlu0 %2372
        %2374 = vrot.lane.b32.xlu0 %v2298, 64
        %v2375 = vpop.permute.xlu0 %2374
        %2376 = vrot.lane.b32.xlu0 %v2300, 64
        %v2377 = vpop.permute.xlu0 %2376
        %2378 = vrot.lane.b32.xlu0 %v2303, 64
        %v2379 = vpop.permute.xlu0 %2378
        %2380 = vrot.lane.b32.xlu0 %v2305, 64
        %v2381 = vpop.permute.xlu0 %2380
        %2382 = vrot.lane.b32.xlu0 %v2308, 64
        %v2383 = vpop.permute.xlu0 %2382
        %2384 = vrot.lane.b32.xlu0 %v2310, 64
        %v2385 = vpop.permute.xlu0 %2384
        %2386 = vrot.lane.b32.xlu0 %v2313, 64
        %v2387 = vpop.permute.xlu0 %2386
        %2388 = vrot.lane.b32.xlu0 %v2315, 64
        %v2389 = vpop.permute.xlu0 %2388
        %2390 = vrot.lane.b32.xlu0 %v2318, 64
        %v2391 = vpop.permute.xlu0 %2390
        %2392 = vrot.lane.b32.xlu0 %v2320, 64
        %v2393 = vpop.permute.xlu0 %2392
        %2394 = vrot.lane.b32.xlu0 %v2323, 64
        %v2395 = vpop.permute.xlu0 %2394
        %2396 = vrot.lane.b32.xlu0 %v2325, 64
        %v2397 = vpop.permute.xlu0 %2396
        %v2434 = vsel %vm332, %v1930, %v2129
        %v2435 = vsel %vm332, %v1931, %v2131
        %v2436 = vsel %vm332, %v1933, %v2133
        %v2437 = vsel %vm332, %v1934, %v2135
        %v2438 = vsel %vm332, %v1936, %v2137
        %v2439 = vsel %vm332, %v1937, %v2139
        %v2440 = vsel %vm332, %v1939, %v2141
        %v2441 = vsel %vm332, %v1940, %v2143
        %v2442 = vsel %vm332, %v1942, %v2145
        %v2443 = vsel %vm332, %v1943, %v2147
        %v2444 = vsel %vm332, %v1945, %v2149
        %v2445 = vsel %vm332, %v1946, %v2151
        %v2446 = vsel %vm332, %v1948, %v2153
        %v2447 = vsel %vm332, %v1949, %v2155
        %v2448 = vsel %vm332, %v1951, %v2157
        %v2449 = vsel %vm332, %v1952, %v2159
        %v2450 = vsel %vm332, %v1954, %v2161
        %v2451 = vsel %vm332, %v1955, %v2163
        %v2452 = vsel %vm332, %v1957, %v2165
        %v2453 = vsel %vm332, %v1958, %v2167
        %v2454 = vsel %vm332, %v1960, %v2169
        %v2455 = vsel %vm332, %v1961, %v2171
        %v2456 = vsel %vm332, %v1963, %v2173
        %v2457 = vsel %vm332, %v1964, %v2175
        %v2458 = vsel %vm332, %v1966, %v2177
        %v2459 = vsel %vm332, %v1967, %v2179
        %v2460 = vsel %vm332, %v1969, %v2181
        %v2461 = vsel %vm332, %v1970, %v2183
        %v2462 = vsel %vm332, %v1972, %v2185
        %v2463 = vsel %vm332, %v1973, %v2187
        %v2464 = vsel %vm332, %v1975, %v2189
        %v2465 = vsel %vm332, %v1976, %v2191
        %v2466 = vsel %vm332, %v1978, %v2193
        %v2467 = vsel %vm332, %v1979, %v2195
        %v2468 = vsel %vm332, %v1981, %v2197
        %v2469 = vsel %vm332, %v1982, %v2199
        %v2470 = vsel %vm963, %v2434, %v2327
        %v2471 = vsel %vm963, %v2435, %v2329
        %v2472 = vsel %vm963, %v2436, %v2331
        %v2473 = vsel %vm963, %v2437, %v2333
        %v2474 = vsel %vm963, %v2438, %v2335
        %v2475 = vsel %vm963, %v2439, %v2337
        %v2476 = vsel %vm963, %v2440, %v2339
        %v2477 = vsel %vm963, %v2441, %v2341
        %v2478 = vsel %vm963, %v2442, %v2343
        %v2479 = vsel %vm963, %v2443, %v2345
        %v2480 = vsel %vm963, %v2444, %v2347
        %v2481 = vsel %vm963, %v2445, %v2349
        %v2482 = vsel %vm963, %v2446, %v2351
        %v2483 = vsel %vm963, %v2447, %v2353
        %v2484 = vsel %vm963, %v2448, %v2355
        %v2485 = vsel %vm963, %v2449, %v2357
        %v2486 = vsel %vm963, %v2450, %v2359
        %v2487 = vsel %vm963, %v2451, %v2361
        %v2488 = vsel %vm963, %v2452, %v2363
        %v2489 = vsel %vm963, %v2453, %v2365
        %v2490 = vsel %vm963, %v2454, %v2367
        %v2491 = vsel %vm963, %v2455, %v2369
        %v2492 = vsel %vm963, %v2456, %v2371
        %v2493 = vsel %vm963, %v2457, %v2373
        %v2494 = vsel %vm963, %v2458, %v2375
        %v2495 = vsel %vm963, %v2459, %v2377
        %v2496 = vsel %vm963, %v2460, %v2379
        %v2497 = vsel %vm963, %v2461, %v2381
        %v2498 = vsel %vm963, %v2462, %v2383
        %v2499 = vsel %vm963, %v2463, %v2385
        %v2500 = vsel %vm963, %v2464, %v2387
        %v2501 = vsel %vm963, %v2465, %v2389
        %v2502 = vsel %vm963, %v2466, %v2391
        %v2503 = vsel %vm963, %v2467, %v2393
        %v2504 = vsel %vm963, %v2468, %v2395
        %v2505 = vsel %vm963, %v2469, %v2397
        %2538 = vrot.lane.b32.xlu0 %v2472, 96
        %v2539 = vpop.permute.xlu0 %2538
        %2540 = vrot.lane.b32.xlu0 %v2473, 96
        %v2541 = vpop.permute.xlu0 %2540
        %2542 = vrot.lane.b32.xlu0 %v2474, 96
        %v2543 = vpop.permute.xlu0 %2542
        %2544 = vrot.lane.b32.xlu0 %v2475, 96
        %v2545 = vpop.permute.xlu0 %2544
        %2546 = vrot.lane.b32.xlu0 %v2476, 96
        %v2547 = vpop.permute.xlu0 %2546
        %2548 = vrot.lane.b32.xlu0 %v2477, 96
        %v2549 = vpop.permute.xlu0 %2548
        %2550 = vrot.lane.b32.xlu0 %v2478, 96
        %v2551 = vpop.permute.xlu0 %2550
        %2552 = vrot.lane.b32.xlu0 %v2479, 96
        %v2553 = vpop.permute.xlu0 %2552
        %2554 = vrot.lane.b32.xlu0 %v2480, 96
        %v2555 = vpop.permute.xlu0 %2554
        %2556 = vrot.lane.b32.xlu0 %v2481, 96
        %v2557 = vpop.permute.xlu0 %2556
        %2558 = vrot.lane.b32.xlu0 %v2482, 96
        %v2559 = vpop.permute.xlu0 %2558
        %2560 = vrot.lane.b32.xlu0 %v2483, 96
        %v2561 = vpop.permute.xlu0 %2560
        %2562 = vrot.lane.b32.xlu0 %v2484, 96
        %v2563 = vpop.permute.xlu0 %2562
        %2564 = vrot.lane.b32.xlu0 %v2485, 96
        %v2565 = vpop.permute.xlu0 %2564
        %2566 = vrot.lane.b32.xlu0 %v2486, 96
        %v2567 = vpop.permute.xlu0 %2566
        %2568 = vrot.lane.b32.xlu0 %v2487, 96
        %v2569 = vpop.permute.xlu0 %2568
        %2570 = vrot.lane.b32.xlu0 %v2488, 96
        %v2571 = vpop.permute.xlu0 %2570
        %2572 = vrot.lane.b32.xlu0 %v2489, 96
        %v2573 = vpop.permute.xlu0 %2572
        %2574 = vrot.lane.b32.xlu0 %v2490, 96
        %v2575 = vpop.permute.xlu0 %2574
        %2576 = vrot.lane.b32.xlu0 %v2491, 96
        %v2577 = vpop.permute.xlu0 %2576
        %2578 = vrot.lane.b32.xlu0 %v2492, 96
        %v2579 = vpop.permute.xlu0 %2578
        %2580 = vrot.lane.b32.xlu0 %v2493, 96
        %v2581 = vpop.permute.xlu0 %2580
        %2582 = vrot.lane.b32.xlu0 %v2494, 96
        %v2583 = vpop.permute.xlu0 %2582
        %2584 = vrot.lane.b32.xlu0 %v2495, 96
        %v2585 = vpop.permute.xlu0 %2584
        %2586 = vrot.lane.b32.xlu0 %v2496, 96
        %v2587 = vpop.permute.xlu0 %2586
        %2588 = vrot.lane.b32.xlu0 %v2497, 96
        %v2589 = vpop.permute.xlu0 %2588
        %2590 = vrot.lane.b32.xlu0 %v2498, 96
        %v2591 = vpop.permute.xlu0 %2590
        %2592 = vrot.lane.b32.xlu0 %v2499, 96
        %v2593 = vpop.permute.xlu0 %2592
        %2594 = vrot.lane.b32.xlu0 %v2500, 96
        %v2595 = vpop.permute.xlu0 %2594
        %2596 = vrot.lane.b32.xlu0 %v2501, 96
        %v2597 = vpop.permute.xlu0 %2596
        %2598 = vrot.lane.b32.xlu0 %v2502, 96
        %v2599 = vpop.permute.xlu0 %2598
        %2600 = vrot.lane.b32.xlu0 %v2503, 96
        %v2601 = vpop.permute.xlu0 %2600
        %2636 = vrot.lane.b32.xlu0 %v2474, 64
        %v2637 = vpop.permute.xlu0 %2636
        %2638 = vrot.lane.b32.xlu0 %v2475, 64
        %v2639 = vpop.permute.xlu0 %2638
        %2640 = vrot.lane.b32.xlu0 %v2476, 64
        %v2641 = vpop.permute.xlu0 %2640
        %2642 = vrot.lane.b32.xlu0 %v2477, 64
        %v2643 = vpop.permute.xlu0 %2642
        %2644 = vrot.lane.b32.xlu0 %v2478, 64
        %v2645 = vpop.permute.xlu0 %2644
        %2646 = vrot.lane.b32.xlu0 %v2479, 64
        %v2647 = vpop.permute.xlu0 %2646
        %2648 = vrot.lane.b32.xlu0 %v2480, 64
        %v2649 = vpop.permute.xlu0 %2648
        %2650 = vrot.lane.b32.xlu0 %v2481, 64
        %v2651 = vpop.permute.xlu0 %2650
        %2652 = vrot.lane.b32.xlu0 %v2482, 64
        %v2653 = vpop.permute.xlu0 %2652
        %2654 = vrot.lane.b32.xlu0 %v2483, 64
        %v2655 = vpop.permute.xlu0 %2654
        %2656 = vrot.lane.b32.xlu0 %v2484, 64
        %v2657 = vpop.permute.xlu0 %2656
        %2658 = vrot.lane.b32.xlu0 %v2485, 64
        %v2659 = vpop.permute.xlu0 %2658
        %2660 = vrot.lane.b32.xlu0 %v2486, 64
        %v2661 = vpop.permute.xlu0 %2660
        %2662 = vrot.lane.b32.xlu0 %v2487, 64
        %v2663 = vpop.permute.xlu0 %2662
        %2664 = vrot.lane.b32.xlu0 %v2488, 64
        %v2665 = vpop.permute.xlu0 %2664
        %2666 = vrot.lane.b32.xlu0 %v2489, 64
        %v2667 = vpop.permute.xlu0 %2666
        %2668 = vrot.lane.b32.xlu0 %v2490, 64
        %v2669 = vpop.permute.xlu0 %2668
        %2670 = vrot.lane.b32.xlu0 %v2491, 64
        %v2671 = vpop.permute.xlu0 %2670
        %2672 = vrot.lane.b32.xlu0 %v2492, 64
        %v2673 = vpop.permute.xlu0 %2672
        %2674 = vrot.lane.b32.xlu0 %v2493, 64
        %v2675 = vpop.permute.xlu0 %2674
        %2676 = vrot.lane.b32.xlu0 %v2494, 64
        %v2677 = vpop.permute.xlu0 %2676
        %2678 = vrot.lane.b32.xlu0 %v2495, 64
        %v2679 = vpop.permute.xlu0 %2678
        %2680 = vrot.lane.b32.xlu0 %v2496, 64
        %v2681 = vpop.permute.xlu0 %2680
        %2682 = vrot.lane.b32.xlu0 %v2497, 64
        %v2683 = vpop.permute.xlu0 %2682
        %2684 = vrot.lane.b32.xlu0 %v2498, 64
        %v2685 = vpop.permute.xlu0 %2684
        %2686 = vrot.lane.b32.xlu0 %v2499, 64
        %v2687 = vpop.permute.xlu0 %2686
        %2688 = vrot.lane.b32.xlu0 %v2500, 64
        %v2689 = vpop.permute.xlu0 %2688
        %2690 = vrot.lane.b32.xlu0 %v2501, 64
        %v2691 = vpop.permute.xlu0 %2690
        %2692 = vrot.lane.b32.xlu0 %v2502, 64
        %v2693 = vpop.permute.xlu0 %2692
        %2694 = vrot.lane.b32.xlu0 %v2503, 64
        %v2695 = vpop.permute.xlu0 %2694
        %2696 = vrot.lane.b32.xlu0 %v2504, 64
        %v2697 = vpop.permute.xlu0 %2696
        %2698 = vrot.lane.b32.xlu0 %v2505, 64
        %v2699 = vpop.permute.xlu0 %2698
        %v2732 = vsel %vm1226, %v2470, %v2539
        %v2733 = vsel %vm1226, %v2471, %v2541
        %v2734 = vsel %vm1226, %v2472, %v2543
        %v2735 = vsel %vm1226, %v2473, %v2545
        %v2736 = vsel %vm1226, %v2474, %v2547
        %v2737 = vsel %vm1226, %v2475, %v2549
        %v2738 = vsel %vm1226, %v2476, %v2551
        %v2739 = vsel %vm1226, %v2477, %v2553
        %v2740 = vsel %vm1226, %v2478, %v2555
        %v2741 = vsel %vm1226, %v2479, %v2557
        %v2742 = vsel %vm1226, %v2480, %v2559
        %v2743 = vsel %vm1226, %v2481, %v2561
        %v2744 = vsel %vm1226, %v2482, %v2563
        %v2745 = vsel %vm1226, %v2483, %v2565
        %v2746 = vsel %vm1226, %v2484, %v2567
        %v2747 = vsel %vm1226, %v2485, %v2569
        %v2748 = vsel %vm1226, %v2486, %v2571
        %v2749 = vsel %vm1226, %v2487, %v2573
        %v2750 = vsel %vm1226, %v2488, %v2575
        %v2751 = vsel %vm1226, %v2489, %v2577
        %v2752 = vsel %vm1226, %v2490, %v2579
        %v2753 = vsel %vm1226, %v2491, %v2581
        %v2754 = vsel %vm1226, %v2492, %v2583
        %v2755 = vsel %vm1226, %v2493, %v2585
        %v2756 = vsel %vm1226, %v2494, %v2587
        %v2757 = vsel %vm1226, %v2495, %v2589
        %v2758 = vsel %vm1226, %v2496, %v2591
        %v2759 = vsel %vm1226, %v2497, %v2593
        %v2760 = vsel %vm1226, %v2498, %v2595
        %v2761 = vsel %vm1226, %v2499, %v2597
        %v2762 = vsel %vm1226, %v2500, %v2599
        %v2763 = vsel %vm1226, %v2501, %v2601
        %v2764 = vsel %vm963, %v2539, %v2637
        %v2765 = vsel %vm963, %v2541, %v2639
        %v2766 = vsel %vm963, %v2543, %v2641
        %v2767 = vsel %vm963, %v2545, %v2643
        %v2768 = vsel %vm963, %v2547, %v2645
        %v2769 = vsel %vm963, %v2549, %v2647
        %v2770 = vsel %vm963, %v2551, %v2649
        %v2771 = vsel %vm963, %v2553, %v2651
        %v2772 = vsel %vm963, %v2555, %v2653
        %v2773 = vsel %vm963, %v2557, %v2655
        %v2774 = vsel %vm963, %v2559, %v2657
        %v2775 = vsel %vm963, %v2561, %v2659
        %v2776 = vsel %vm963, %v2563, %v2661
        %v2777 = vsel %vm963, %v2565, %v2663
        %v2778 = vsel %vm963, %v2567, %v2665
        %v2779 = vsel %vm963, %v2569, %v2667
        %v2780 = vsel %vm963, %v2571, %v2669
        %v2781 = vsel %vm963, %v2573, %v2671
        %v2782 = vsel %vm963, %v2575, %v2673
        %v2783 = vsel %vm963, %v2577, %v2675
        %v2784 = vsel %vm963, %v2579, %v2677
        %v2785 = vsel %vm963, %v2581, %v2679
        %v2786 = vsel %vm963, %v2583, %v2681
        %v2787 = vsel %vm963, %v2585, %v2683
        %v2788 = vsel %vm963, %v2587, %v2685
        %v2789 = vsel %vm963, %v2589, %v2687
        %v2790 = vsel %vm963, %v2591, %v2689
        %v2791 = vsel %vm963, %v2593, %v2691
        %v2792 = vsel %vm963, %v2595, %v2693
        %v2793 = vsel %vm963, %v2597, %v2695
        %v2794 = vsel %vm963, %v2599, %v2697
        %v2795 = vsel %vm963, %v2601, %v2699
        %v2796 = vpack.c.bf16 %v2733, %v2732
        %v2797 = vpack.c.bf16 %v2765, %v2764
        %v2798 = vpack.c.bf16 %v2639, %v2637
        %v2799 = vpack.c.bf16 %v2735, %v2734
        %v2800 = vpack.c.bf16 %v2767, %v2766
        %v2801 = vpack.c.bf16 %v2643, %v2641
        %v2802 = vpack.c.bf16 %v2737, %v2736
        %v2803 = vpack.c.bf16 %v2769, %v2768
        %v2804 = vpack.c.bf16 %v2647, %v2645
        %v2805 = vpack.c.bf16 %v2739, %v2738
        %v2806 = vpack.c.bf16 %v2771, %v2770
        %v2807 = vpack.c.bf16 %v2651, %v2649
        %v2808 = vpack.c.bf16 %v2741, %v2740
        %v2809 = vpack.c.bf16 %v2773, %v2772
        %v2810 = vpack.c.bf16 %v2655, %v2653
        %v2811 = vpack.c.bf16 %v2743, %v2742
        %v2812 = vpack.c.bf16 %v2775, %v2774
        %v2813 = vpack.c.bf16 %v2659, %v2657
        %v2814 = vpack.c.bf16 %v2745, %v2744
        %v2815 = vpack.c.bf16 %v2777, %v2776
        %v2816 = vpack.c.bf16 %v2663, %v2661
        %v2817 = vpack.c.bf16 %v2747, %v2746
        %v2818 = vpack.c.bf16 %v2779, %v2778
        %v2819 = vpack.c.bf16 %v2667, %v2665
        %v2820 = vpack.c.bf16 %v2749, %v2748
        %v2821 = vpack.c.bf16 %v2781, %v2780
        %v2822 = vpack.c.bf16 %v2671, %v2669
        %v2823 = vpack.c.bf16 %v2751, %v2750
        %v2824 = vpack.c.bf16 %v2783, %v2782
        %v2825 = vpack.c.bf16 %v2675, %v2673
        %v2826 = vpack.c.bf16 %v2753, %v2752
        %v2827 = vpack.c.bf16 %v2785, %v2784
        %v2828 = vpack.c.bf16 %v2679, %v2677
        %v2829 = vpack.c.bf16 %v2755, %v2754
        %v2830 = vpack.c.bf16 %v2787, %v2786
        %v2831 = vpack.c.bf16 %v2683, %v2681
        %v2832 = vpack.c.bf16 %v2757, %v2756
        %v2833 = vpack.c.bf16 %v2789, %v2788
        %v2834 = vpack.c.bf16 %v2687, %v2685
        %v2835 = vpack.c.bf16 %v2759, %v2758
        %v2836 = vpack.c.bf16 %v2791, %v2790
        %v2837 = vpack.c.bf16 %v2691, %v2689
        %v2838 = vpack.c.bf16 %v2761, %v2760
        %v2839 = vpack.c.bf16 %v2793, %v2792
        %v2840 = vpack.c.bf16 %v2695, %v2693
        %v2841 = vpack.c.bf16 %v2763, %v2762
        %v2842 = vpack.c.bf16 %v2795, %v2794
        %v2843 = vpack.c.bf16 %v2699, %v2697
        %v2844 = vld [vmem:[%s3] sm:$0xf]
        %v2845 = vld [vmem:[%s3 + $0x4] sm:$0xf]
        %v2846 = vld [vmem:[%s3 + $0x8] sm:$0xf]
        %v2847 = vld [vmem:[%s3 + $0xc] sm:$0xf]
        %v2848 = vld [vmem:[%s3 + $0x10] sm:$0xf]
        %v2849 = vld [vmem:[%s3 + $0x14] sm:$0xf]
        %v2850 = vld [vmem:[%s3 + $0x18] sm:$0xf]
        %v2851 = vld [vmem:[%s3 + $0x1c] sm:$0xf]
        %v2852 = vld [vmem:[%s3 + $0x20] sm:$0xf]
        %v2853 = vld [vmem:[%s3 + $0x24] sm:$0xf]
        %v2854 = vld [vmem:[%s3 + $0x28] sm:$0xf]
        %v2855 = vld [vmem:[%s3 + $0x2c] sm:$0xf]
        %v2856 = vld [vmem:[%s3 + $0x30] sm:$0xf]
        %v2857 = vld [vmem:[%s3 + $0x34] sm:$0xf]
        %v2858 = vld [vmem:[%s3 + $0x38] sm:$0xf]
        %v2859 = vld [vmem:[%s3 + $0x3c] sm:$0xf]
        %v2860 = vld [vmem:[%s3 + $0x40] sm:$0xf]
        %v2861 = vld [vmem:[%s3 + $0x44] sm:$0xf]
        %v2862 = vld [vmem:[%s3 + $0x48] sm:$0xf]
        %v2863 = vld [vmem:[%s3 + $0x4c] sm:$0xf]
        %v2864 = vld [vmem:[%s3 + $0x50] sm:$0xf]
        %v2865 = vld [vmem:[%s3 + $0x54] sm:$0xf]
        %v2866 = vld [vmem:[%s3 + $0x58] sm:$0xf]
        %v2867 = vld [vmem:[%s3 + $0x5c] sm:$0xf]
        %v2868 = vld [vmem:[%s3 + $0x60] sm:$0xf]
        %v2869 = vld [vmem:[%s3 + $0x64] sm:$0xf]
        %v2870 = vld [vmem:[%s3 + $0x68] sm:$0xf]
        %v2871 = vld [vmem:[%s3 + $0x6c] sm:$0xf]
        %v2872 = vld [vmem:[%s3 + $0x70] sm:$0xf]
        %v2873 = vld [vmem:[%s3 + $0x74] sm:$0xf]
        %v2874 = vld [vmem:[%s3 + $0x78] sm:$0xf]
        %v2875 = vld [vmem:[%s3 + $0x7c] sm:$0xf]
        %v2876 = vld [vmem:[%s3 + $0x80] sm:$0xf]
        %v2877 = vld [vmem:[%s3 + $0x84] sm:$0xf]
        %v2878 = vld [vmem:[%s3 + $0x88] sm:$0xf]
        %v2879 = vld [vmem:[%s3 + $0x8c] sm:$0xf]
        %v2880 = vld [vmem:[%s4] sm:$0x1]
        %v2882 = vperm.slane %v2880, 0
        %v2920 = vunpack.c.l.b16 %v2844
        %v2921 = vunpack.c.l.b16 %v2845
        %v2922 = vunpack.c.l.b16 %v2846
        %v2923 = vunpack.c.l.b16 %v2847
        %v2924 = vunpack.c.l.b16 %v2848
        %v2925 = vunpack.c.l.b16 %v2849
        %v2926 = vunpack.c.l.b16 %v2850
        %v2927 = vunpack.c.l.b16 %v2851
        %v2928 = vunpack.c.l.b16 %v2852
        %v2929 = vunpack.c.l.b16 %v2853
        %v2930 = vunpack.c.l.b16 %v2854
        %v2931 = vunpack.c.l.b16 %v2855
        %v2932 = vunpack.c.l.b16 %v2856
        %v2933 = vunpack.c.l.b16 %v2857
        %v2934 = vunpack.c.l.b16 %v2858
        %v2935 = vunpack.c.l.b16 %v2859
        %v2936 = vunpack.c.l.b16 %v2860
        %v2937 = vunpack.c.l.b16 %v2861
        %v2938 = vunpack.c.l.b16 %v2862
        %v2939 = vunpack.c.l.b16 %v2863
        %v2940 = vunpack.c.l.b16 %v2864
        %v2941 = vunpack.c.l.b16 %v2865
        %v2942 = vunpack.c.l.b16 %v2866
        %v2943 = vunpack.c.l.b16 %v2867
        %v2944 = vunpack.c.l.b16 %v2868
        %v2945 = vunpack.c.l.b16 %v2869
        %v2946 = vunpack.c.l.b16 %v2870
        %v2947 = vunpack.c.l.b16 %v2871
        %v2948 = vunpack.c.l.b16 %v2872
        %v2949 = vunpack.c.l.b16 %v2873
        %v2950 = vunpack.c.l.b16 %v2874
        %v2951 = vunpack.c.l.b16 %v2875
        %v2952 = vunpack.c.l.b16 %v2876
        %v2953 = vunpack.c.l.b16 %v2877
        %v2954 = vunpack.c.l.b16 %v2878
        %v2955 = vunpack.c.l.b16 %v2879
        %v2956 = vpack.c.b16 %v2921, %v2920
        %v2957 = vpack.c.b16 %v2923, %v2922
        %v2958 = vpack.c.b16 %v2925, %v2924
        %v2959 = vpack.c.b16 %v2927, %v2926
        %v2960 = vpack.c.b16 %v2929, %v2928
        %v2961 = vpack.c.b16 %v2931, %v2930
        %v2962 = vpack.c.b16 %v2933, %v2932
        %v2963 = vpack.c.b16 %v2935, %v2934
        %v2964 = vpack.c.b16 %v2937, %v2936
        %v2965 = vpack.c.b16 %v2939, %v2938
        %v2966 = vpack.c.b16 %v2941, %v2940
        %v2967 = vpack.c.b16 %v2943, %v2942
        %v2968 = vpack.c.b16 %v2945, %v2944
        %v2969 = vpack.c.b16 %v2947, %v2946
        %v2970 = vpack.c.b16 %v2949, %v2948
        %v2971 = vpack.c.b16 %v2951, %v2950
        %v2972 = vpack.c.b16 %v2953, %v2952
        %v2973 = vpack.c.b16 %v2955, %v2954
        %v2993 = vsel %vm332, %v2798, 0
        %v2996 = vsel %vm332, %v2801, 0
        %v2999 = vsel %vm332, %v2804, 0
        %v3002 = vsel %vm332, %v2807, 0
        %v3005 = vsel %vm332, %v2810, 0
        %v3008 = vsel %vm332, %v2813, 0
        %v3011 = vsel %vm332, %v2816, 0
        %v3014 = vsel %vm332, %v2819, 0
        %v3017 = vsel %vm332, %v2822, 0
        %v3020 = vsel %vm332, %v2825, 0
        %v3023 = vsel %vm332, %v2828, 0
        %v3026 = vsel %vm332, %v2831, 0
        %v3029 = vsel %vm332, %v2834, 0
        %v3032 = vsel %vm332, %v2837, 0
        %v3035 = vsel %vm332, %v2840, 0
        %v3038 = vsel %vm332, %v2843, 0
        %3040 = vmatpush.bf16.msra.mxu0 %v2963
        %3041 = vmatpush.bf16.msra.mxu0 %v2962
        %3042 = vmatpush.bf16.msra.mxu0 %v2961
        %3043 = vmatpush.bf16.msra.mxu0 %v2960
        %3044 = vmatpush.bf16.msra.mxu0 %v2959
        %3045 = vmatpush.bf16.msra.mxu0 %v2958
        %3046 = vmatpush.bf16.msra.mxu0 %v2957
        %3047 = vmatpush.bf16.msra.mxu0 %v2956
        %3048 = vmatmul.bf16.gmra.mxu0 %v2796
        %v3049 = vpop.f32.mrf.mxu0
        %v3050 = vadd.f32 %v2882, %v3049
        %v3051 = vpop.f32.mrf.mxu0
        %v3052 = vadd.f32 %v2882, %v3051
        %3053 = vmatmul.bf16.gmra.mxu0 %v2799
        %v3054 = vpop.f32.mrf.mxu0
        %v3055 = vadd.f32 %v2882, %v3054
        %v3056 = vpop.f32.mrf.mxu0
        %v3057 = vadd.f32 %v2882, %v3056
        %3058 = vmatmul.bf16.gmra.mxu0 %v2802
        %v3059 = vpop.f32.mrf.mxu0
        %v3060 = vadd.f32 %v2882, %v3059
        %v3061 = vpop.f32.mrf.mxu0
        %v3062 = vadd.f32 %v2882, %v3061
        %3063 = vmatmul.bf16.gmra.mxu0 %v2805
        %v3064 = vpop.f32.mrf.mxu0
        %v3065 = vadd.f32 %v2882, %v3064
        %v3066 = vpop.f32.mrf.mxu0
        %v3067 = vadd.f32 %v2882, %v3066
        %3068 = vmatmul.bf16.gmra.mxu0 %v2808
        %v3069 = vpop.f32.mrf.mxu0
        %v3070 = vadd.f32 %v2882, %v3069
        %v3071 = vpop.f32.mrf.mxu0
        %v3072 = vadd.f32 %v2882, %v3071
        %3073 = vmatmul.bf16.gmra.mxu0 %v2811
        %v3074 = vpop.f32.mrf.mxu0
        %v3075 = vadd.f32 %v2882, %v3074
        %v3076 = vpop.f32.mrf.mxu0
        %v3077 = vadd.f32 %v2882, %v3076
        %3078 = vmatmul.bf16.gmra.mxu0 %v2814
        %v3079 = vpop.f32.mrf.mxu0
        %v3080 = vadd.f32 %v2882, %v3079
        %v3081 = vpop.f32.mrf.mxu0
        %v3082 = vadd.f32 %v2882, %v3081
        %3083 = vmatmul.bf16.gmra.mxu0 %v2817
        %v3084 = vpop.f32.mrf.mxu0
        %v3085 = vadd.f32 %v2882, %v3084
        %v3086 = vpop.f32.mrf.mxu0
        %v3087 = vadd.f32 %v2882, %v3086
        %3088 = vmatmul.bf16.gmra.mxu0 %v2820
        %v3089 = vpop.f32.mrf.mxu0
        %v3090 = vadd.f32 %v2882, %v3089
        %v3091 = vpop.f32.mrf.mxu0
        %v3092 = vadd.f32 %v2882, %v3091
        %3093 = vmatmul.bf16.gmra.mxu0 %v2823
        %v3094 = vpop.f32.mrf.mxu0
        %v3095 = vadd.f32 %v2882, %v3094
        %v3096 = vpop.f32.mrf.mxu0
        %v3097 = vadd.f32 %v2882, %v3096
        %3098 = vmatmul.bf16.gmra.mxu0 %v2826
        %v3099 = vpop.f32.mrf.mxu0
        %v3100 = vadd.f32 %v2882, %v3099
        %v3101 = vpop.f32.mrf.mxu0
        %v3102 = vadd.f32 %v2882, %v3101
        %3103 = vmatmul.bf16.gmra.mxu0 %v2829
        %v3104 = vpop.f32.mrf.mxu0
        %v3105 = vadd.f32 %v2882, %v3104
        %v3106 = vpop.f32.mrf.mxu0
        %v3107 = vadd.f32 %v2882, %v3106
        %3108 = vmatmul.bf16.gmra.mxu0 %v2832
        %v3109 = vpop.f32.mrf.mxu0
        %v3110 = vadd.f32 %v2882, %v3109
        %v3111 = vpop.f32.mrf.mxu0
        %v3112 = vadd.f32 %v2882, %v3111
        %3113 = vmatmul.bf16.gmra.mxu0 %v2835
        %v3114 = vpop.f32.mrf.mxu0
        %v3115 = vadd.f32 %v2882, %v3114
        %v3116 = vpop.f32.mrf.mxu0
        %v3117 = vadd.f32 %v2882, %v3116
        %3118 = vmatmul.bf16.gmra.mxu0 %v2838
        %v3119 = vpop.f32.mrf.mxu0
        %v3120 = vadd.f32 %v2882, %v3119
        %v3121 = vpop.f32.mrf.mxu0
        %v3122 = vadd.f32 %v2882, %v3121
        %3123 = vmatmul.bf16.gmra.mxu0 %v2841
        %v3124 = vpop.f32.mrf.mxu0
        %v3125 = vadd.f32 %v2882, %v3124
        %v3126 = vpop.f32.mrf.mxu0
        %v3127 = vadd.f32 %v2882, %v3126
        %3128 = vdwg.mxu0
        %3129 = vmatpush.bf16.msra.mxu0 %v2971
        %3130 = vmatpush.bf16.msra.mxu0 %v2970
        %3131 = vmatpush.bf16.msra.mxu0 %v2969
        %3132 = vmatpush.bf16.msra.mxu0 %v2968
        %3133 = vmatpush.bf16.msra.mxu0 %v2967
        %3134 = vmatpush.bf16.msra.mxu0 %v2966
        %3135 = vmatpush.bf16.msra.mxu0 %v2965
        %3136 = vmatpush.bf16.msra.mxu0 %v2964
        %3137 = vmatmul.bf16.gmra.mxu0 %v2797
        %v3138 = vpop.f32.mrf.mxu0
        %v3139 = vadd.f32 %v3050, %v3138
        %v3140 = vpop.f32.mrf.mxu0
        %v3141 = vadd.f32 %v3052, %v3140
        %3142 = vmatmul.bf16.gmra.mxu0 %v2800
        %v3143 = vpop.f32.mrf.mxu0
        %v3144 = vadd.f32 %v3055, %v3143
        %v3145 = vpop.f32.mrf.mxu0
        %v3146 = vadd.f32 %v3057, %v3145
        %3147 = vmatmul.bf16.gmra.mxu0 %v2803
        %v3148 = vpop.f32.mrf.mxu0
        %v3149 = vadd.f32 %v3060, %v3148
        %v3150 = vpop.f32.mrf.mxu0
        %v3151 = vadd.f32 %v3062, %v3150
        %3152 = vmatmul.bf16.gmra.mxu0 %v2806
        %v3153 = vpop.f32.mrf.mxu0
        %v3154 = vadd.f32 %v3065, %v3153
        %v3155 = vpop.f32.mrf.mxu0
        %v3156 = vadd.f32 %v3067, %v3155
        %3157 = vmatmul.bf16.gmra.mxu0 %v2809
        %v3158 = vpop.f32.mrf.mxu0
        %v3159 = vadd.f32 %v3070, %v3158
        %v3160 = vpop.f32.mrf.mxu0
        %v3161 = vadd.f32 %v3072, %v3160
        %3162 = vmatmul.bf16.gmra.mxu0 %v2812
        %v3163 = vpop.f32.mrf.mxu0
        %v3164 = vadd.f32 %v3075, %v3163
        %v3165 = vpop.f32.mrf.mxu0
        %v3166 = vadd.f32 %v3077, %v3165
        %3167 = vmatmul.bf16.gmra.mxu0 %v2815
        %v3168 = vpop.f32.mrf.mxu0
        %v3169 = vadd.f32 %v3080, %v3168
        %v3170 = vpop.f32.mrf.mxu0
        %v3171 = vadd.f32 %v3082, %v3170
        %3172 = vmatmul.bf16.gmra.mxu0 %v2818
        %v3173 = vpop.f32.mrf.mxu0
        %v3174 = vadd.f32 %v3085, %v3173
        %v3175 = vpop.f32.mrf.mxu0
        %v3176 = vadd.f32 %v3087, %v3175
        %3177 = vmatmul.bf16.gmra.mxu0 %v2821
        %v3178 = vpop.f32.mrf.mxu0
        %v3179 = vadd.f32 %v3090, %v3178
        %v3180 = vpop.f32.mrf.mxu0
        %v3181 = vadd.f32 %v3092, %v3180
        %3182 = vmatmul.bf16.gmra.mxu0 %v2824
        %v3183 = vpop.f32.mrf.mxu0
        %v3184 = vadd.f32 %v3095, %v3183
        %v3185 = vpop.f32.mrf.mxu0
        %v3186 = vadd.f32 %v3097, %v3185
        %3187 = vmatmul.bf16.gmra.mxu0 %v2827
        %v3188 = vpop.f32.mrf.mxu0
        %v3189 = vadd.f32 %v3100, %v3188
        %v3190 = vpop.f32.mrf.mxu0
        %v3191 = vadd.f32 %v3102, %v3190
        %3192 = vmatmul.bf16.gmra.mxu0 %v2830
        %v3193 = vpop.f32.mrf.mxu0
        %v3194 = vadd.f32 %v3105, %v3193
        %v3195 = vpop.f32.mrf.mxu0
        %v3196 = vadd.f32 %v3107, %v3195
        %3197 = vmatmul.bf16.gmra.mxu0 %v2833
        %v3198 = vpop.f32.mrf.mxu0
        %v3199 = vadd.f32 %v3110, %v3198
        %v3200 = vpop.f32.mrf.mxu0
        %v3201 = vadd.f32 %v3112, %v3200
        %3202 = vmatmul.bf16.gmra.mxu0 %v2836
        %v3203 = vpop.f32.mrf.mxu0
        %v3204 = vadd.f32 %v3115, %v3203
        %v3205 = vpop.f32.mrf.mxu0
        %v3206 = vadd.f32 %v3117, %v3205
        %3207 = vmatmul.bf16.gmra.mxu0 %v2839
        %v3208 = vpop.f32.mrf.mxu0
        %v3209 = vadd.f32 %v3120, %v3208
        %v3210 = vpop.f32.mrf.mxu0
        %v3211 = vadd.f32 %v3122, %v3210
        %3212 = vmatmul.bf16.gmra.mxu0 %v2842
        %v3213 = vpop.f32.mrf.mxu0
        %v3214 = vadd.f32 %v3125, %v3213
        %v3215 = vpop.f32.mrf.mxu0
        %v3216 = vadd.f32 %v3127, %v3215
        %3217 = vdwg.mxu0
        %3218 = vmatpush.bf16.msra.mxu0 0
        %3219 = vmatpush.bf16.msra.mxu0 0
        %3220 = vmatpush.bf16.msra.mxu0 0
        %3221 = vmatpush.bf16.msra.mxu0 0
        %3222 = vmatpush.bf16.msra.mxu0 0
        %3223 = vmatpush.bf16.msra.mxu0 0
        %3224 = vmatpush.bf16.msra.mxu0 %v2973
        %3225 = vmatpush.bf16.msra.mxu0 %v2972
        %3226 = vmatmul.bf16.gmra.mxu0 %v2993
        %v3227 = vpop.f32.mrf.mxu0
        %v3228 = vadd.f32 %v3139, %v3227
        %v3229 = vpop.f32.mrf.mxu0
        %v3230 = vadd.f32 %v3141, %v3229
        %3231 = vmatmul.bf16.gmra.mxu0 %v2996
        %v3232 = vpop.f32.mrf.mxu0
        %v3233 = vadd.f32 %v3144, %v3232
        %v3234 = vpop.f32.mrf.mxu0
        %v3235 = vadd.f32 %v3146, %v3234
        %3236 = vmatmul.bf16.gmra.mxu0 %v2999
        %v3237 = vpop.f32.mrf.mxu0
        %v3238 = vadd.f32 %v3149, %v3237
        %v3239 = vpop.f32.mrf.mxu0
        %v3240 = vadd.f32 %v3151, %v3239
        %3241 = vmatmul.bf16.gmra.mxu0 %v3002
        %v3242 = vpop.f32.mrf.mxu0
        %v3243 = vadd.f32 %v3154, %v3242
        %v3244 = vpop.f32.mrf.mxu0
        %v3245 = vadd.f32 %v3156, %v3244
        %3246 = vmatmul.bf16.gmra.mxu0 %v3005
        %v3247 = vpop.f32.mrf.mxu0
        %v3248 = vadd.f32 %v3159, %v3247
        %v3249 = vpop.f32.mrf.mxu0
        %v3250 = vadd.f32 %v3161, %v3249
        %3251 = vmatmul.bf16.gmra.mxu0 %v3008
        %v3252 = vpop.f32.mrf.mxu0
        %v3253 = vadd.f32 %v3164, %v3252
        %v3254 = vpop.f32.mrf.mxu0
        %v3255 = vadd.f32 %v3166, %v3254
        %3256 = vmatmul.bf16.gmra.mxu0 %v3011
        %v3257 = vpop.f32.mrf.mxu0
        %v3258 = vadd.f32 %v3169, %v3257
        %v3259 = vpop.f32.mrf.mxu0
        %v3260 = vadd.f32 %v3171, %v3259
        %3261 = vmatmul.bf16.gmra.mxu0 %v3014
        %v3262 = vpop.f32.mrf.mxu0
        %v3263 = vadd.f32 %v3174, %v3262
        %v3264 = vpop.f32.mrf.mxu0
        %v3265 = vadd.f32 %v3176, %v3264
        %3266 = vmatmul.bf16.gmra.mxu0 %v3017
        %v3267 = vpop.f32.mrf.mxu0
        %v3268 = vadd.f32 %v3179, %v3267
        %v3269 = vpop.f32.mrf.mxu0
        %v3270 = vadd.f32 %v3181, %v3269
        %3271 = vmatmul.bf16.gmra.mxu0 %v3020
        %v3272 = vpop.f32.mrf.mxu0
        %v3273 = vadd.f32 %v3184, %v3272
        %v3274 = vpop.f32.mrf.mxu0
        %v3275 = vadd.f32 %v3186, %v3274
        %3276 = vmatmul.bf16.gmra.mxu0 %v3023
        %v3277 = vpop.f32.mrf.mxu0
        %v3278 = vadd.f32 %v3189, %v3277
        %v3279 = vpop.f32.mrf.mxu0
        %v3280 = vadd.f32 %v3191, %v3279
        %3281 = vmatmul.bf16.gmra.mxu0 %v3026
        %v3282 = vpop.f32.mrf.mxu0
        %v3283 = vadd.f32 %v3194, %v3282
        %v3284 = vpop.f32.mrf.mxu0
        %v3285 = vadd.f32 %v3196, %v3284
        %3286 = vmatmul.bf16.gmra.mxu0 %v3029
        %v3287 = vpop.f32.mrf.mxu0
        %v3288 = vadd.f32 %v3199, %v3287
        %v3289 = vpop.f32.mrf.mxu0
        %v3290 = vadd.f32 %v3201, %v3289
        %3291 = vmatmul.bf16.gmra.mxu0 %v3032
        %v3292 = vpop.f32.mrf.mxu0
        %v3293 = vadd.f32 %v3204, %v3292
        %v3294 = vpop.f32.mrf.mxu0
        %v3295 = vadd.f32 %v3206, %v3294
        %3296 = vmatmul.bf16.gmra.mxu0 %v3035
        %v3297 = vpop.f32.mrf.mxu0
        %v3298 = vadd.f32 %v3209, %v3297
        %v3299 = vpop.f32.mrf.mxu0
        %v3300 = vadd.f32 %v3211, %v3299
        %3301 = vmatmul.bf16.gmra.mxu0 %v3038
        %v3302 = vpop.f32.mrf.mxu0
        %v3303 = vadd.f32 %v3214, %v3302
        %v3304 = vpop.f32.mrf.mxu0
        %v3305 = vadd.f32 %v3216, %v3304
        %3306 = vdwg.mxu0
        %v3307 = vsel %vm332, %v3228, 0.0
        %v3308 = vsel %vm332, %v3230, 0.0
        %v3309 = vadd.f32 %v3307, %v3308
        %v3310 = vsel %vm332, %v3233, 0.0
        %v3311 = vadd.f32 %v3309, %v3310
        %v3312 = vsel %vm332, %v3235, 0.0
        %v3313 = vadd.f32 %v3311, %v3312
        %v3314 = vsel %vm332, %v3238, 0.0
        %v3315 = vadd.f32 %v3313, %v3314
        %v3316 = vsel %vm332, %v3240, 0.0
        %v3317 = vadd.f32 %v3315, %v3316
        %v3318 = vsel %vm332, %v3243, 0.0
        %v3319 = vadd.f32 %v3317, %v3318
        %v3320 = vsel %vm332, %v3245, 0.0
        %v3321 = vadd.f32 %v3319, %v3320
        %v3322 = vsel %vm332, %v3248, 0.0
        %v3323 = vadd.f32 %v3321, %v3322
        %v3324 = vsel %vm332, %v3250, 0.0
        %v3325 = vadd.f32 %v3323, %v3324
        %v3326 = vsel %vm332, %v3253, 0.0
        %v3327 = vadd.f32 %v3325, %v3326
        %v3328 = vsel %vm332, %v3255, 0.0
        %v3329 = vadd.f32 %v3327, %v3328
        %v3330 = vsel %vm332, %v3258, 0.0
        %v3331 = vadd.f32 %v3329, %v3330
        %v3332 = vsel %vm332, %v3260, 0.0
        %v3333 = vadd.f32 %v3331, %v3332
        %v3334 = vsel %vm332, %v3263, 0.0
        %v3335 = vadd.f32 %v3333, %v3334
        %v3336 = vsel %vm332, %v3265, 0.0
        %v3337 = vadd.f32 %v3335, %v3336
        %v3338 = vsel %vm332, %v3268, 0.0
        %v3339 = vadd.f32 %v3337, %v3338
        %v3340 = vsel %vm332, %v3270, 0.0
        %v3341 = vadd.f32 %v3339, %v3340
        %v3342 = vsel %vm332, %v3273, 0.0
        %v3343 = vadd.f32 %v3341, %v3342
        %v3344 = vsel %vm332, %v3275, 0.0
        %v3345 = vadd.f32 %v3343, %v3344
        %v3346 = vsel %vm332, %v3278, 0.0
        %v3347 = vadd.f32 %v3345, %v3346
        %v3348 = vsel %vm332, %v3280, 0.0
        %v3349 = vadd.f32 %v3347, %v3348
        %v3350 = vsel %vm332, %v3283, 0.0
        %v3351 = vadd.f32 %v3349, %v3350
        %v3352 = vsel %vm332, %v3285, 0.0
        %v3353 = vadd.f32 %v3351, %v3352
        %v3354 = vsel %vm332, %v3288, 0.0
        %v3355 = vadd.f32 %v3353, %v3354
        %v3356 = vsel %vm332, %v3290, 0.0
        %v3357 = vadd.f32 %v3355, %v3356
        %v3358 = vsel %vm332, %v3293, 0.0
        %v3359 = vadd.f32 %v3357, %v3358
        %v3360 = vsel %vm332, %v3295, 0.0
        %v3361 = vadd.f32 %v3359, %v3360
        %v3362 = vsel %vm332, %v3298, 0.0
        %v3363 = vadd.f32 %v3361, %v3362
        %v3364 = vsel %vm332, %v3300, 0.0
        %v3365 = vadd.f32 %v3363, %v3364
        %v3366 = vsel %vm332, %v3303, 0.0
        %v3367 = vadd.f32 %v3365, %v3366
        %v3368 = vsel %vm332, %v3305, 0.0
        %v3369 = vadd.f32 %v3367, %v3368
        %v3370 = vrot.slane %v3369, 4
        %v3371 = vadd.f32 %v3369, %v3370
        %v3372 = vrot.slane %v3371, 2
        %v3373 = vadd.f32 %v3371, %v3372
        %v3374 = vrot.slane %v3373, 1
        %v3375 = vadd.f32 %v3373, %v3374
        %v3376 = vmul.f32 %v3375, 0.00390625
        %v3377 = vld [vmem:[%s5] sm:$0xff]
        %v3378 = vld [vmem:[%s5 + $0x8] sm:$0xff]
        %v3379 = vld [vmem:[%s5 + $0x10] sm:$0xff]
        %v3380 = vld [vmem:[%s5 + $0x18] sm:$0xff]
        %v3382 = vsel %vm332, %v3376, 0
        %3384 = vmatpush.msra.mxu0 0.0
        %3385 = vmatpush.msra.mxu0 0.0
        %3386 = vmatpush.msra.mxu0 0.0
        %3387 = vmatpush.msra.mxu0 0.0
        %3388 = vmatpush.msra.mxu0 0.0
        %3389 = vmatpush.msra.mxu0 0.0
        %3390 = vmatpush.msra.mxu0 0.0
        %3391 = vmatpush.msra.mxu0 0.0
        %3392 = vmatpush.msra.mxu0 0.0
        %3393 = vmatpush.msra.mxu0 0.0
        %3394 = vmatpush.msra.mxu0 0.0
        %3395 = vmatpush.msra.mxu0 0.0
        %3396 = vmatpush.msra.mxu0 %v3380
        %3397 = vmatpush.msra.mxu0 %v3379
        %3398 = vmatpush.msra.mxu0 %v3378
        %3399 = vmatpush.msra.mxu0 %v3377
        %3400 = vmatmul.f32.gmra.mxu0 %v3382
        %v3401 = vpop.f32.mrf.mxu0
        %v3402 = vadd.f32 0.0, %v3401
        %3403 = vdwg.mxu0
        %v3404 = vmax.f32 %v3402, 0.0
        %v3405 = vld [vmem:[%s6] sm:$0x3]
        %vm3406 = vcmask 15360
        %v3408 = vsel %vm3406, %v3404, 0
        %vm3410 = vcmask 1041408
        %v3412 = vsel %vm3410, %v3405, 0
        %3414 = vmatpush.msra.mxu0 0.0
        %3415 = vmatpush.msra.mxu0 0.0
        %3416 = vmatpush.msra.mxu0 0.0
        %3417 = vmatpush.msra.mxu0 0.0
        %3418 = vmatpush.msra.mxu0 0.0
        %3419 = vmatpush.msra.mxu0 0.0
        %3420 = vmatpush.msra.mxu0 0.0
        %3421 = vmatpush.msra.mxu0 0.0
        %3422 = vmatpush.msra.mxu0 0.0
        %3423 = vmatpush.msra.mxu0 0.0
        %3424 = vmatpush.msra.mxu0 0.0
        %3425 = vmatpush.msra.mxu0 0.0
        %3426 = vmatpush.msra.mxu0 0.0
        %3427 = vmatpush.msra.mxu0 0.0
        %3428 = vmatpush.msra.mxu0 0.0
        %3429 = vmatpush.msra.mxu0 %v3412
        %3430 = vmatmul.f32.gmra.mxu0 %v3408
        %v3431 = vpop.f32.mrf.mxu0
        %v3432 = vadd.f32 0.0, %v3431
        %3433 = vdwg.mxu0
        %v3434 = vxor.u32 %v3432, 2147483648
        %v3435 = vmul.f32 %v3434, 1.442695
        %v3436 = vpow.pop %v3435
        %v3437 = vadd.f32 %v3436, 1.0
        %v3438 = vrcp.pop %v3437
        %v3439 = vmul.f32 %v3437, %v3438
        %v3440 = vsub.f32 1.0, %v3439
        %v3441 = vmul.f32 %v3438, %v3440
        %v3442 = vadd.f32 %v3438, %v3441
        %vm3443 = vweird.f32 %v3437
        %vm3444 = vweird.f32 %v3438
        %vm3445 = vmor %vm3443, %vm3444
        %v3446 = vsel %vm3445, %v3438, %v3442
        %v3447 = vand.u32 2147483647, %v3437
        %vm3448 = vcmp.eq.f32.partialorder %v3447, 8.507059e+37
        %v3449 = vand.u32 %v3437, 2147483648
        %v3450 = vor.u32 1.1754944e-38, %v3449
        %v3451 = vsel %vm3448, %v3450, %v3446
        %v3452 = vmul.f32 1.0, %v3451
        %v3453 = vperm.slane %v3452, 0
        %v3454 = vmul.f32 %v3228, %v3453
        %v3455 = vmul.f32 %v3230, %v3453
        %v3456 = vmul.f32 %v3233, %v3453
        %v3457 = vmul.f32 %v3235, %v3453
        %v3458 = vmul.f32 %v3238, %v3453
        %v3459 = vmul.f32 %v3240, %v3453
        %v3460 = vmul.f32 %v3243, %v3453
        %v3461 = vmul.f32 %v3245, %v3453
        %v3462 = vmul.f32 %v3248, %v3453
        %v3463 = vmul.f32 %v3250, %v3453
        %v3464 = vmul.f32 %v3253, %v3453
        %v3465 = vmul.f32 %v3255, %v3453
        %v3466 = vmul.f32 %v3258, %v3453
        %v3467 = vmul.f32 %v3260, %v3453
        %v3468 = vmul.f32 %v3263, %v3453
        %v3469 = vmul.f32 %v3265, %v3453
        %v3470 = vmul.f32 %v3268, %v3453
        %v3471 = vmul.f32 %v3270, %v3453
        %v3472 = vmul.f32 %v3273, %v3453
        %v3473 = vmul.f32 %v3275, %v3453
        %v3474 = vmul.f32 %v3278, %v3453
        %v3475 = vmul.f32 %v3280, %v3453
        %v3476 = vmul.f32 %v3283, %v3453
        %v3477 = vmul.f32 %v3285, %v3453
        %v3478 = vmul.f32 %v3288, %v3453
        %v3479 = vmul.f32 %v3290, %v3453
        %v3480 = vmul.f32 %v3293, %v3453
        %v3481 = vmul.f32 %v3295, %v3453
        %v3482 = vmul.f32 %v3298, %v3453
        %v3483 = vmul.f32 %v3300, %v3453
        %v3484 = vmul.f32 %v3303, %v3453
        %v3485 = vmul.f32 %v3305, %v3453
        %v3486 = vadd.f32 %v3454, %v300
        %v3487 = vadd.f32 %v3455, %v301
        %v3488 = vadd.f32 %v3456, %v302
        %v3489 = vadd.f32 %v3457, %v303
        %v3490 = vadd.f32 %v3458, %v304
        %v3491 = vadd.f32 %v3459, %v305
        %v3492 = vadd.f32 %v3460, %v306
        %v3493 = vadd.f32 %v3461, %v307
        %v3494 = vadd.f32 %v3462, %v308
        %v3495 = vadd.f32 %v3463, %v309
        %v3496 = vadd.f32 %v3464, %v310
        %v3497 = vadd.f32 %v3465, %v311
        %v3498 = vadd.f32 %v3466, %v312
        %v3499 = vadd.f32 %v3467, %v313
        %v3500 = vadd.f32 %v3468, %v314
        %v3501 = vadd.f32 %v3469, %v315
        %v3502 = vadd.f32 %v3470, %v316
        %v3503 = vadd.f32 %v3471, %v317
        %v3504 = vadd.f32 %v3472, %v318
        %v3505 = vadd.f32 %v3473, %v319
        %v3506 = vadd.f32 %v3474, %v320
        %v3507 = vadd.f32 %v3475, %v321
        %v3508 = vadd.f32 %v3476, %v322
        %v3509 = vadd.f32 %v3477, %v323
        %v3510 = vadd.f32 %v3478, %v324
        %v3511 = vadd.f32 %v3479, %v325
        %v3512 = vadd.f32 %v3480, %v326
        %v3513 = vadd.f32 %v3481, %v327
        %v3514 = vadd.f32 %v3482, %v328
        %v3515 = vadd.f32 %v3483, %v329
        %v3516 = vadd.f32 %v3484, %v330
        %v3517 = vadd.f32 %v3485, %v331
        %vm3518 = vcmp.ge.f32.partialorder %v3486, 0.0
        %vm3519 = vcmp.ge.f32.partialorder %v3487, 0.0
        %vm3520 = vcmp.ge.f32.partialorder %v3488, 0.0
        %vm3521 = vcmp.ge.f32.partialorder %v3489, 0.0
        %vm3522 = vcmp.ge.f32.partialorder %v3490, 0.0
        %vm3523 = vcmp.ge.f32.partialorder %v3491, 0.0
        %vm3524 = vcmp.ge.f32.partialorder %v3492, 0.0
        %vm3525 = vcmp.ge.f32.partialorder %v3493, 0.0
        %vm3526 = vcmp.ge.f32.partialorder %v3494, 0.0
        %vm3527 = vcmp.ge.f32.partialorder %v3495, 0.0
        %vm3528 = vcmp.ge.f32.partialorder %v3496, 0.0
        %vm3529 = vcmp.ge.f32.partialorder %v3497, 0.0
        %vm3530 = vcmp.ge.f32.partialorder %v3498, 0.0
        %vm3531 = vcmp.ge.f32.partialorder %v3499, 0.0
        %vm3532 = vcmp.ge.f32.partialorder %v3500, 0.0
        %vm3533 = vcmp.ge.f32.partialorder %v3501, 0.0
        %vm3534 = vcmp.ge.f32.partialorder %v3502, 0.0
        %vm3535 = vcmp.ge.f32.partialorder %v3503, 0.0
        %vm3536 = vcmp.ge.f32.partialorder %v3504, 0.0
        %vm3537 = vcmp.ge.f32.partialorder %v3505, 0.0
        %vm3538 = vcmp.ge.f32.partialorder %v3506, 0.0
        %vm3539 = vcmp.ge.f32.partialorder %v3507, 0.0
        %vm3540 = vcmp.ge.f32.partialorder %v3508, 0.0
        %vm3541 = vcmp.ge.f32.partialorder %v3509, 0.0
        %vm3542 = vcmp.ge.f32.partialorder %v3510, 0.0
        %vm3543 = vcmp.ge.f32.partialorder %v3511, 0.0
        %vm3544 = vcmp.ge.f32.partialorder %v3512, 0.0
        %vm3545 = vcmp.ge.f32.partialorder %v3513, 0.0
        %vm3546 = vcmp.ge.f32.partialorder %v3514, 0.0
        %vm3547 = vcmp.ge.f32.partialorder %v3515, 0.0
        %vm3548 = vcmp.ge.f32.partialorder %v3516, 0.0
        %vm3549 = vcmp.ge.f32.partialorder %v3517, 0.0
        %v3550 = vmul.f32 %v3486, 0.1
        %v3551 = vmul.f32 %v3487, 0.1
        %v3552 = vmul.f32 %v3488, 0.1
        %v3553 = vmul.f32 %v3489, 0.1
        %v3554 = vmul.f32 %v3490, 0.1
        %v3555 = vmul.f32 %v3491, 0.1
        %v3556 = vmul.f32 %v3492, 0.1
        %v3557 = vmul.f32 %v3493, 0.1
        %v3558 = vmul.f32 %v3494, 0.1
        %v3559 = vmul.f32 %v3495, 0.1
        %v3560 = vmul.f32 %v3496, 0.1
        %v3561 = vmul.f32 %v3497, 0.1
        %v3562 = vmul.f32 %v3498, 0.1
        %v3563 = vmul.f32 %v3499, 0.1
        %v3564 = vmul.f32 %v3500, 0.1
        %v3565 = vmul.f32 %v3501, 0.1
        %v3566 = vmul.f32 %v3502, 0.1
        %v3567 = vmul.f32 %v3503, 0.1
        %v3568 = vmul.f32 %v3504, 0.1
        %v3569 = vmul.f32 %v3505, 0.1
        %v3570 = vmul.f32 %v3506, 0.1
        %v3571 = vmul.f32 %v3507, 0.1
        %v3572 = vmul.f32 %v3508, 0.1
        %v3573 = vmul.f32 %v3509, 0.1
        %v3574 = vmul.f32 %v3510, 0.1
        %v3575 = vmul.f32 %v3511, 0.1
        %v3576 = vmul.f32 %v3512, 0.1
        %v3577 = vmul.f32 %v3513, 0.1
        %v3578 = vmul.f32 %v3514, 0.1
        %v3579 = vmul.f32 %v3515, 0.1
        %v3580 = vmul.f32 %v3516, 0.1
        %v3581 = vmul.f32 %v3517, 0.1
        %v3582 = vsel %vm3518, %v3486, %v3550
        %v3583 = vsel %vm3519, %v3487, %v3551
        %v3584 = vsel %vm3520, %v3488, %v3552
        %v3585 = vsel %vm3521, %v3489, %v3553
        %v3586 = vsel %vm3522, %v3490, %v3554
        %v3587 = vsel %vm3523, %v3491, %v3555
        %v3588 = vsel %vm3524, %v3492, %v3556
        %v3589 = vsel %vm3525, %v3493, %v3557
        %v3590 = vsel %vm3526, %v3494, %v3558
        %v3591 = vsel %vm3527, %v3495, %v3559
        %v3592 = vsel %vm3528, %v3496, %v3560
        %v3593 = vsel %vm3529, %v3497, %v3561
        %v3594 = vsel %vm3530, %v3498, %v3562
        %v3595 = vsel %vm3531, %v3499, %v3563
        %v3596 = vsel %vm3532, %v3500, %v3564
        %v3597 = vsel %vm3533, %v3501, %v3565
        %v3598 = vsel %vm3534, %v3502, %v3566
        %v3599 = vsel %vm3535, %v3503, %v3567
        %v3600 = vsel %vm3536, %v3504, %v3568
        %v3601 = vsel %vm3537, %v3505, %v3569
        %v3602 = vsel %vm3538, %v3506, %v3570
        %v3603 = vsel %vm3539, %v3507, %v3571
        %v3604 = vsel %vm3540, %v3508, %v3572
        %v3605 = vsel %vm3541, %v3509, %v3573
        %v3606 = vsel %vm3542, %v3510, %v3574
        %v3607 = vsel %vm3543, %v3511, %v3575
        %v3608 = vsel %vm3544, %v3512, %v3576
        %v3609 = vsel %vm3545, %v3513, %v3577
        %v3610 = vsel %vm3546, %v3514, %v3578
        %v3611 = vsel %vm3547, %v3515, %v3579
        %v3612 = vsel %vm3548, %v3516, %v3580
        %v3613 = vsel %vm3549, %v3517, %v3581
        %3614 = vst.msk [vmem:[%s298] sm:$0xff] %vm332, %v3582
        %3615 = vst.msk [vmem:[%s298 + $0x8] sm:$0xff] %vm332, %v3583
        %3616 = vst.msk [vmem:[%s298 + $0x10] sm:$0xff] %vm332, %v3584
        %3617 = vst.msk [vmem:[%s298 + $0x18] sm:$0xff] %vm332, %v3585
        %3618 = vst.msk [vmem:[%s298 + $0x20] sm:$0xff] %vm332, %v3586
        %3619 = vst.msk [vmem:[%s298 + $0x28] sm:$0xff] %vm332, %v3587
        %3620 = vst.msk [vmem:[%s298 + $0x30] sm:$0xff] %vm332, %v3588
        %3621 = vst.msk [vmem:[%s298 + $0x38] sm:$0xff] %vm332, %v3589
        %3622 = vst.msk [vmem:[%s298 + $0x40] sm:$0xff] %vm332, %v3590
        %3623 = vst.msk [vmem:[%s298 + $0x48] sm:$0xff] %vm332, %v3591
        %3624 = vst.msk [vmem:[%s298 + $0x50] sm:$0xff] %vm332, %v3592
        %3625 = vst.msk [vmem:[%s298 + $0x58] sm:$0xff] %vm332, %v3593
        %3626 = vst.msk [vmem:[%s298 + $0x60] sm:$0xff] %vm332, %v3594
        %3627 = vst.msk [vmem:[%s298 + $0x68] sm:$0xff] %vm332, %v3595
        %3628 = vst.msk [vmem:[%s298 + $0x70] sm:$0xff] %vm332, %v3596
        %3629 = vst.msk [vmem:[%s298 + $0x78] sm:$0xff] %vm332, %v3597
        %3630 = vst.msk [vmem:[%s298 + $0x80] sm:$0xff] %vm332, %v3598
        %3631 = vst.msk [vmem:[%s298 + $0x88] sm:$0xff] %vm332, %v3599
        %3632 = vst.msk [vmem:[%s298 + $0x90] sm:$0xff] %vm332, %v3600
        %3633 = vst.msk [vmem:[%s298 + $0x98] sm:$0xff] %vm332, %v3601
        %3634 = vst.msk [vmem:[%s298 + $0xa0] sm:$0xff] %vm332, %v3602
        %3635 = vst.msk [vmem:[%s298 + $0xa8] sm:$0xff] %vm332, %v3603
        %3636 = vst.msk [vmem:[%s298 + $0xb0] sm:$0xff] %vm332, %v3604
        %3637 = vst.msk [vmem:[%s298 + $0xb8] sm:$0xff] %vm332, %v3605
        %3638 = vst.msk [vmem:[%s298 + $0xc0] sm:$0xff] %vm332, %v3606
        %3639 = vst.msk [vmem:[%s298 + $0xc8] sm:$0xff] %vm332, %v3607
        %3640 = vst.msk [vmem:[%s298 + $0xd0] sm:$0xff] %vm332, %v3608
        %3641 = vst.msk [vmem:[%s298 + $0xd8] sm:$0xff] %vm332, %v3609
        %3642 = vst.msk [vmem:[%s298 + $0xe0] sm:$0xff] %vm332, %v3610
        %3643 = vst.msk [vmem:[%s298 + $0xe8] sm:$0xff] %vm332, %v3611
        %3644 = vst.msk [vmem:[%s298 + $0xf0] sm:$0xff] %vm332, %v3612
        %3645 = vst.msk [vmem:[%s298 + $0xf8] sm:$0xff] %vm332, %v3613
        %s3646 = sand.u32 %s184, 1
        %s3647 = scalar_lea.sflag [#allocation5], %s3646
        %s3648 = sand.u32 %s184, 1
        %s3649 = smul.addr %s3648, 256
        %s3650 = scalar_lea.vmem [#allocation6], %s3649
        // Predicated region
        $region53: #{residual_block_forward.1} parent=47 // pred_check
          %p3651 = pneg %p194
        $region54: #{residual_block_forward.1} parent=47 // pred_check_branch
          %3653 = sbr.rel (%p3651) target = $region56
        $region55: #{residual_block_forward.1} parent=47 // pred_region
          %3655 = vsyncadd %s3647, 0
          %s3656 = smul.addr %s24, 32
          %s3657 = smul.addr %s3656, 8
          %s3658 = scalar_lea.hbm %s7, %s3657
          %s3659 = sshll.u32 %s3650, 4
          %s3660 = int_to_ptr.vmem [resolvable:$true] %s3659
          %s3661 = sshll.u32 %s3658, 4
          %s3662 = int_to_ptr.hbm [resolvable:$true] %s3661
          %3667 = dma.vmem_to_hbm [thread:$0]  %s3660, 4096, %s3662, %s3647, 128, 128, 8
        $region56: #{residual_block_forward.1} parent=47 // pred_fallthru
          _
      $region48: #{residual_block_forward.1} parent=5 // pred_fallthru
        _
      %p3668 = scmp.le.s32.totalorder 2, %s19
      // Predicated region
      $region57: #{residual_block_forward.1} parent=5 // pred_check
        %p3669 = pneg %p3668
      $region58: #{residual_block_forward.1} parent=5 // pred_check_branch
        %3671 = sbr.rel (%p3669) target = $region60
      $region59: #{residual_block_forward.1} parent=5 // pred_region
        %s3672 = ssub.s32 %s19, 2
        // Predicated region
        $region61: #{residual_block_forward.1} parent=59 // pred_check
          %p3673 = pneg %p200
        $region62: #{residual_block_forward.1} parent=59 // pred_check_branch
          %3675 = sbr.rel (%p3673) target = $region64
        $region63: #{residual_block_forward.1} parent=59 // pred_region
          %s3676 = sand.u32 %s185, 1
          %s3677 = scalar_lea.sflag [#allocation5], %s3676
          %s3678 = sand.u32 %s185, 1
          %s3679 = smul.addr %s3678, 256
          %s3680 = scalar_lea.vmem [#allocation6], %s3679
          %3682 = dma.done %s3677, 4096
        $region64: #{residual_block_forward.1} parent=59 // pred_fallthru
          _
      $region60: #{residual_block_forward.1} parent=5 // pred_fallthru
        _
    $region6: #{residual_block_forward.1} parent=1 // loop_footer
      %s23 = sadd.s32 1, %s19
    $region7: #{residual_block_forward.1} parent=1 // loop_footer_branch
      %18 = sbr.rel target = $region3
    $region8: #{residual_block_forward.1} parent=1 // loop_exit
      _
    %3683 = vsyncpa [#allocation4], 1
    %s3684 = scalar_lea.sflag [#allocation4], 1
    %3685 = vsyncpa %s3684, 1
    %3686 = vsyncpa [#allocation5], 1
    %s3687 = scalar_lea.sflag [#allocation5], 1
    %3688 = vsyncpa %s3687, 1

</llo_original>
